<compile_context>
chip_gen: v5e
topology: v5e:2x2
jax: 0.10.0
libtpu: 0.0.40
codegen_flags: <defaults>
</compile_context>

<pallas_src>
import jax
import jax.numpy as jnp
import numpy as np
from jax.experimental import pallas as pl
from jax.experimental.pallas import tpu as pltpu


def _make_tree_lstm_kernel(tb, H):
    """tb = local batch-block size, H = hidden size (both static)."""

    def kernel(conn_ref, left_ref, wr_ref, so_ref, hc_ref):
        # conn_ref : SMEM (N, B)        int32   (scalar prefetch, full array)
        # left_ref : VMEM (N, tb, 3PR)  f32
        # wr_ref   : VMEM (H, 3PR)      f32
        # so_ref   : VMEM (3PR, 3H)     f32
        # hc_ref   : VMEM (N, tb, 2H)   f32     (output, doubles as the h/c history)
        node_num = left_ref.shape[0]
        bg0 = pl.program_id(0) * tb      # global batch offset of this block

        def gates(y):
            f = jax.nn.sigmoid(y[:, :H])
            o = jax.nn.sigmoid(y[:, H:2 * H])
            z = jnp.tanh(y[:, 2 * H:])
            return f, o, z

        # ---- node 0 (root): parent_h = None (right factor omitted), parent_c = 0 ----
        y0 = jnp.dot(left_ref[0], so_ref[...], preferred_element_type=jnp.float32)
        f0, o0, z0 = gates(y0)
        c0 = (1.0 - f0) * z0
        h0 = o0 * jnp.tanh(c0)
        hc_ref[0] = jnp.concatenate([h0, c0], axis=-1)

        # ---- serial top-down recurrence (unrolled for LLO scheduler visibility) ----
        def body(n, carry):
            # Scalar-indexed parent gather: O(tb * 2H) loads per step, reads only rows < n.
            rows = []
            for b in range(tb):                      # tb is small & static
                p = conn_ref[n, bg0 + b]             # parent node id (SMEM scalar)
                rows.append(hc_ref[p][b:b + 1, :])   # (1, 2H) = [parent_h | parent_c]
            parent_hc = rows[0] if tb == 1 else jnp.concatenate(rows, axis=0)  # (tb, 2H)
            parent_h = parent_hc[:, :H]
            parent_c = parent_hc[:, H:]

            right = jnp.dot(parent_h, wr_ref[...],
                            preferred_element_type=jnp.float32)          # (tb, 3PR)
            lr = left_ref[n] * right                                      # fused f|o|z
            y = jnp.dot(lr, so_ref[...],
                        preferred_element_type=jnp.float32)               # (tb, 3H)
            f, o, z = gates(y)
            c = parent_c * f + (1.0 - f) * z
            h = o * jnp.tanh(c)
            hc_ref[n] = jnp.concatenate([h, c], axis=-1)                  # one store / step
            return carry

        jax.lax.fori_loop(1, node_num, body, None, unroll=True)

    return kernel


def top_down_bilinear_lstm_encoder(tree_embedding, node_connection, node_mask, params):
    """params: dict gate -> (w_l (pool*rank, D_in), w_r (pool*rank, H), w_o (H, pool))."""
    B, N, D_in = tree_embedding.shape
    H, POOL = params['f'][2].shape
    PR = params['f'][0].shape[0]
    RANK = PR // POOL
    PR3, H3 = 3 * PR, 3 * H

    # node-major layout
    emb_t = jnp.transpose(tree_embedding, (1, 0, 2)).astype(jnp.float32)   # (N, B, D_in)
    conn_t = jnp.transpose(node_connection, (1, 0)).astype(jnp.int32)      # (N, B)

    wl_f, wr_f, wo_f = params['f']
    wl_o, wr_o, wo_o = params['o']
    wl_z, wr_z, wo_z = params['z']

    # Fuse the three gates' projections column-wise.
    wl_fused_t = jnp.concatenate([wl_f, wl_o, wl_z], axis=0).T.astype(jnp.float32)  # (D_in, 3PR)
    wr_fused_t = jnp.concatenate([wr_f, wr_o, wr_z], axis=0).T.astype(jnp.float32)  # (H, 3PR)

    # Fold the rank->pool sum into the output projection: so_g = S @ Wo_g^T  (PR, H), exact.
    S = jnp.repeat(jnp.eye(POOL, dtype=jnp.float32), RANK, axis=0)                  # (PR, POOL)

    def fold(wo):
        return S @ wo.astype(jnp.float32).T                                         # (PR, H)

    so_block = jnp.zeros((PR3, H3), dtype=jnp.float32)
    so_block = so_block.at[0:PR, 0:H].set(fold(wo_f))
    so_block = so_block.at[PR:2 * PR, H:2 * H].set(fold(wo_o))
    so_block = so_block.at[2 * PR:, 2 * H:].set(fold(wo_z))

    # Hoist the x-side projection out of the serial recurrence (one MXU-efficient matmul).
    left = jnp.einsum('nbd,dp->nbp', emb_t, wl_fused_t)                             # (N, B, 3PR)

    # Batch tiling: block in multiples of 8 when possible (v7x second TC / pipelining),
    # otherwise process the whole (small) batch in one grid step.
    tb = 8 if (B % 8 == 0) else B
    grid = (B // tb,)

    kernel = _make_tree_lstm_kernel(tb, H)

    hc = pl.pallas_call(
        kernel,
        out_shape=jax.ShapeDtypeStruct((N, B, 2 * H), jnp.float32),
        grid_spec=pltpu.PrefetchScalarGridSpec(
            num_scalar_prefetch=1,                      # conn -> SMEM, visible to index_maps
            grid=grid,
            in_specs=[
                pl.BlockSpec((N, tb, PR3), lambda b, conn: (0, b, 0)),   # left
                pl.BlockSpec((H, PR3), lambda b, conn: (0, 0)),          # wr (fused)
                pl.BlockSpec((PR3, H3), lambda b, conn: (0, 0)),         # so (block-diag)
            ],
            out_specs=pl.BlockSpec((N, tb, 2 * H), lambda b, conn: (0, b, 0)),
        ),
        compiler_params=pltpu.CompilerParams(
            dimension_semantics=("parallel",)),          # batch blocks are independent
    )(conn_t, left, wr_fused_t, so_block)

    hc_bn = jnp.transpose(hc, (1, 0, 2))                 # (B, N, 2H)
    tree_h = hc_bn[:, :, :H]
    tree_c = hc_bn[:, :, H:]
    # PyTorch returns (tree_h, (tree_hs, tree_cs, node_mask)); lists are returned stacked here.
    return tree_h, (tree_h, tree_c, node_mask)


def reference_forward(emb, conn, params):
    """Pure-JAX reference mirroring the PyTorch loop."""
    B, N, _ = emb.shape
    H, POOL = params['f'][2].shape
    PR = params['f'][0].shape[0]
    RANK = PR // POOL
    hp = jax.lax.Precision.HIGHEST

    def bil(x, h, p):
        wl, wr, wo = p
        lr = jnp.dot(x, wl.T, precision=hp)
        if h is not None:
            lr = lr * jnp.dot(h, wr.T, precision=hp)
        pooled = lr.reshape(B, POOL, RANK).sum(-1)
        return jnp.dot(pooled, wo.T, precision=hp)

    hs, cs = [], []
    bidx = jnp.arange(B)
    for i in range(N):
        x = emb[:, i, :]
        if i == 0:
            ph, pc = None, 0.0
        else:
            pid = conn[:, i]
            ph = jnp.stack(hs, axis=1)[bidx, pid]
            pc = jnp.stack(cs, axis=1)[bidx, pid]
        f = jax.nn.sigmoid(bil(x, ph, params['f']))
        o = jax.nn.sigmoid(bil(x, ph, params['o']))
        z = jnp.tanh(bil(x, ph, params['z']))
        c = pc * f + (1.0 - f) * z
        h = o * jnp.tanh(c)
        hs.append(h)
        cs.append(c)
    return jnp.stack(hs, axis=1), jnp.stack(cs, axis=1)


if __name__ == "__main__":
    jax.config.update('jax_default_matmul_precision', 'highest')

    B, N, D_IN, H, RANK, POOL = 2, 8, 32, 32, 4, 8

    key = jax.random.PRNGKey(0)
    k_emb, k_conn, k_f, k_o, k_z = jax.random.split(key, 5)

    tree_embedding = jax.random.normal(k_emb, (B, N, D_IN), dtype=jnp.float32)

    # top-down tree: parent index of node i lies in [0, i) for i >= 1 (node 0 is the root)
    conn_np = np.zeros((B, N), dtype=np.int32)
    ks = jax.random.split(k_conn, N)
    for i in range(1, N):
        conn_np[:, i] = np.asarray(jax.random.randint(ks[i], (B,), 0, i), dtype=np.int32)
    node_connection = jnp.asarray(conn_np)
    node_mask = jnp.ones((B, N), dtype=jnp.int32)

    def make_gate(k):
        k1, k2, k3 = jax.random.split(k, 3)
        w_l = 0.1 * jax.random.normal(k1, (POOL * RANK, D_IN), dtype=jnp.float32)
        w_r = 0.1 * jax.random.normal(k2, (POOL * RANK, H), dtype=jnp.float32)
        w_o = 0.1 * jax.random.normal(k3, (H, POOL), dtype=jnp.float32)
        return (w_l, w_r, w_o)

    params = {'f': make_gate(k_f), 'o': make_gate(k_o), 'z': make_gate(k_z)}

    tree_h, (tree_h_all, tree_c_all, mask_out) = top_down_bilinear_lstm_encoder(
        tree_embedding, node_connection, node_mask, params)
    jax.block_until_ready(tree_h)
    jax.block_until_ready(tree_c_all)

    ref_h, ref_c = reference_forward(tree_embedding, node_connection, params)
    assert np.allclose(np.asarray(tree_h), np.asarray(ref_h), rtol=1e-3, atol=2e-3), "h mismatch"
    assert np.allclose(np.asarray(tree_c_all), np.asarray(ref_c), rtol=1e-3, atol=2e-3), "c mismatch"

    print("KERNEL_OK")
</pallas_src>

<mosaic_0001>
module attributes {stable_mosaic.version = 11 : i64} {
  func.func @kernel(%arg0: i32, %arg1: memref<8x2xi32, #tpu.memory_space<smem>>, %arg2: memref<8x2x96xf32, #tpu.memory_space<vmem>>, %arg3: memref<32x96xf32, #tpu.memory_space<vmem>>, %arg4: memref<96x96xf32, #tpu.memory_space<vmem>>, %arg5: memref<8x2x64xf32, #tpu.memory_space<vmem>>) attributes {dimension_semantics = [#tpu.dimension_semantics<parallel>], iteration_bounds = array<i64: 1>, scalar_prefetch = 1 : i64, scratch_operands = 0 : i64, tpu.core_type = #tpu.core_type<tc>, window_params = [{transform_indices = @transform_0, window_bounds = array<i64: 8, 2, 96>}, {pipeline_mode = #tpu.pipeline_mode<synchronous>, transform_indices = @transform_1, window_bounds = array<i64: 32, 96>}, {pipeline_mode = #tpu.pipeline_mode<synchronous>, transform_indices = @transform_2, window_bounds = array<i64: 96, 96>}, {transform_indices = @transform_3, window_bounds = array<i64: 8, 2, 64>}]} {
    %c2_i32 = arith.constant 2 : i32
    %0 = arith.muli %arg0, %c2_i32 : i32
    %c0 = arith.constant 0 : index
    %c0_0 = arith.constant 0 : index
    %c0_1 = arith.constant 0 : index
    %1 = vector.load %arg2[%c0, %c0_0, %c0_1] : memref<8x2x96xf32, #tpu.memory_space<vmem>>, vector<1x2x96xf32>
    %2 = vector.shape_cast %1 : vector<1x2x96xf32> to vector<2x96xf32>
    %c0_2 = arith.constant 0 : index
    %c0_3 = arith.constant 0 : index
    %3 = vector.load %arg4[%c0_2, %c0_3] : memref<96x96xf32, #tpu.memory_space<vmem>>, vector<96x96xf32>
    %cst = arith.constant dense<0.000000e+00> : vector<2x96xf32>
    %4 = tpu.matmul %2, %3, %cst {dimension_numbers = #tpu.dot_dimension_numbers<[1], [0], [0], [1], [0, 0, 1, 1], [], []>, precision = #tpu.contract_precision<fp32>} : vector<2x96xf32>, vector<96x96xf32>, vector<2x96xf32> -> vector<2x96xf32>
    %5 = vector.extract_strided_slice %4 {offsets = [0, 0], sizes = [2, 32], strides = [1, 1]} : vector<2x96xf32> to vector<2x32xf32>
    %6 = arith.negf %5 : vector<2x32xf32>
    %7 = math.exp %6 : vector<2x32xf32>
    %cst_4 = arith.constant 1.000000e+00 : f32
    %8 = vector.broadcast %cst_4 : f32 to vector<2x32xf32>
    %9 = arith.addf %8, %7 : vector<2x32xf32>
    %10 = arith.divf %8, %9 : vector<2x32xf32>
    %11 = vector.extract_strided_slice %4 {offsets = [0, 32], sizes = [2, 32], strides = [1, 1]} : vector<2x96xf32> to vector<2x32xf32>
    %12 = arith.negf %11 : vector<2x32xf32>
    %13 = math.exp %12 : vector<2x32xf32>
    %cst_5 = arith.constant 1.000000e+00 : f32
    %14 = vector.broadcast %cst_5 : f32 to vector<2x32xf32>
    %15 = arith.addf %14, %13 : vector<2x32xf32>
    %16 = arith.divf %14, %15 : vector<2x32xf32>
    %17 = vector.extract_strided_slice %4 {offsets = [0, 64], sizes = [2, 32], strides = [1, 1]} : vector<2x96xf32> to vector<2x32xf32>
    %18 = math.tanh %17 : vector<2x32xf32>
    %cst_6 = arith.constant 1.000000e+00 : f32
    %19 = vector.broadcast %cst_6 : f32 to vector<2x32xf32>
    %20 = arith.subf %19, %10 : vector<2x32xf32>
    %21 = arith.mulf %20, %18 : vector<2x32xf32>
    %22 = math.tanh %21 : vector<2x32xf32>
    %23 = arith.mulf %16, %22 : vector<2x32xf32>
    %24 = tpu.concatenate %23, %21 in 1 : vector<2x32xf32>, vector<2x32xf32> -> vector<2x64xf32>
    %c0_7 = arith.constant 0 : index
    %c0_8 = arith.constant 0 : index
    %c0_9 = arith.constant 0 : index
    %25 = vector.load %arg5[%c0_7, %c0_8, %c0_9] : memref<8x2x64xf32, #tpu.memory_space<vmem>>, vector<1x2x64xf32>
    %26 = vector.shape_cast %25 : vector<1x2x64xf32> to vector<2x64xf32>
    %27 = vector.shape_cast %24 : vector<2x64xf32> to vector<1x2x64xf32>
    tpu.vector_store %arg5[%c0_7, %c0_8, %c0_9], %27 {strides = array<i32>} : memref<8x2x64xf32, #tpu.memory_space<vmem>>, vector<1x2x64xf32>,
    %c1_i32 = arith.constant 1 : i32
    %c0_i32 = arith.constant 0 : i32
    %28 = arith.addi %0, %c0_i32 : i32
    %29 = arith.index_cast %c1_i32 : i32 to index
    %30 = arith.index_cast %28 : i32 to index
    %31 = memref.load %arg1[%29, %30] : memref<8x2xi32, #tpu.memory_space<smem>>
    %32 = arith.index_cast %31 : i32 to index
    %c0_10 = arith.constant 0 : index
    %c0_11 = arith.constant 0 : index
    %33 = vector.load %arg5[%32, %c0_10, %c0_11] : memref<8x2x64xf32, #tpu.memory_space<vmem>>, vector<1x2x64xf32>
    %34 = vector.shape_cast %33 : vector<1x2x64xf32> to vector<2x64xf32>
    %35 = vector.extract_strided_slice %34 {offsets = [0, 0], sizes = [1, 64], strides = [1, 1]} : vector<2x64xf32> to vector<1x64xf32>
    %c1_i32_12 = arith.constant 1 : i32
    %36 = arith.addi %0, %c1_i32_12 : i32
    %37 = arith.index_cast %c1_i32 : i32 to index
    %38 = arith.index_cast %36 : i32 to index
    %39 = memref.load %arg1[%37, %38] : memref<8x2xi32, #tpu.memory_space<smem>>
    %40 = arith.index_cast %39 : i32 to index
    %c0_13 = arith.constant 0 : index
    %c0_14 = arith.constant 0 : index
    %41 = vector.load %arg5[%40, %c0_13, %c0_14] : memref<8x2x64xf32, #tpu.memory_space<vmem>>, vector<1x2x64xf32>
    %42 = vector.shape_cast %41 : vector<1x2x64xf32> to vector<2x64xf32>
    %43 = vector.extract_strided_slice %42 {offsets = [1, 0], sizes = [1, 64], strides = [1, 1]} : vector<2x64xf32> to vector<1x64xf32>
    %44 = tpu.concatenate %35, %43 in 0 : vector<1x64xf32>, vector<1x64xf32> -> vector<2x64xf32>
    %45 = vector.extract_strided_slice %44 {offsets = [0, 0], sizes = [2, 32], strides = [1, 1]} : vector<2x64xf32> to vector<2x32xf32>
    %46 = vector.extract_strided_slice %44 {offsets = [0, 32], sizes = [2, 32], strides = [1, 1]} : vector<2x64xf32> to vector<2x32xf32>
    %c0_15 = arith.constant 0 : index
    %c0_16 = arith.constant 0 : index
    %47 = vector.load %arg3[%c0_15, %c0_16] : memref<32x96xf32, #tpu.memory_space<vmem>>, vector<32x96xf32>
    %cst_17 = arith.constant dense<0.000000e+00> : vector<2x96xf32>
    %48 = tpu.matmul %45, %47, %cst_17 {dimension_numbers = #tpu.dot_dimension_numbers<[1], [0], [0], [1], [0, 0, 1, 1], [], []>, precision = #tpu.contract_precision<fp32>} : vector<2x32xf32>, vector<32x96xf32>, vector<2x96xf32> -> vector<2x96xf32>
    %49 = arith.index_cast %c1_i32 : i32 to index
    %c0_18 = arith.constant 0 : index
    %c0_19 = arith.constant 0 : index
    %50 = vector.load %arg2[%49, %c0_18, %c0_19] : memref<8x2x96xf32, #tpu.memory_space<vmem>>, vector<1x2x96xf32>
    %51 = vector.shape_cast %50 : vector<1x2x96xf32> to vector<2x96xf32>
    %52 = arith.mulf %51, %48 : vector<2x96xf32>
    %c0_20 = arith.constant 0 : index
    %c0_21 = arith.constant 0 : index
    %53 = vector.load %arg4[%c0_20, %c0_21] : memref<96x96xf32, #tpu.memory_space<vmem>>, vector<96x96xf32>
    %cst_22 = arith.constant dense<0.000000e+00> : vector<2x96xf32>
    %54 = tpu.matmul %52, %53, %cst_22 {dimension_numbers = #tpu.dot_dimension_numbers<[1], [0], [0], [1], [0, 0, 1, 1], [], []>, precision = #tpu.contract_precision<fp32>} : vector<2x96xf32>, vector<96x96xf32>, vector<2x96xf32> -> vector<2x96xf32>
    %55 = vector.extract_strided_slice %54 {offsets = [0, 0], sizes = [2, 32], strides = [1, 1]} : vector<2x96xf32> to vector<2x32xf32>
    %56 = arith.negf %55 : vector<2x32xf32>
    %57 = math.exp %56 : vector<2x32xf32>
    %cst_23 = arith.constant 1.000000e+00 : f32
    %58 = vector.broadcast %cst_23 : f32 to vector<2x32xf32>
    %59 = arith.addf %58, %57 : vector<2x32xf32>
    %60 = arith.divf %58, %59 : vector<2x32xf32>
    %61 = vector.extract_strided_slice %54 {offsets = [0, 32], sizes = [2, 32], strides = [1, 1]} : vector<2x96xf32> to vector<2x32xf32>
    %62 = arith.negf %61 : vector<2x32xf32>
    %63 = math.exp %62 : vector<2x32xf32>
    %cst_24 = arith.constant 1.000000e+00 : f32
    %64 = vector.broadcast %cst_24 : f32 to vector<2x32xf32>
    %65 = arith.addf %64, %63 : vector<2x32xf32>
    %66 = arith.divf %64, %65 : vector<2x32xf32>
    %67 = vector.extract_strided_slice %54 {offsets = [0, 64], sizes = [2, 32], strides = [1, 1]} : vector<2x96xf32> to vector<2x32xf32>
    %68 = math.tanh %67 : vector<2x32xf32>
    %69 = arith.mulf %46, %60 : vector<2x32xf32>
    %cst_25 = arith.constant 1.000000e+00 : f32
    %70 = vector.broadcast %cst_25 : f32 to vector<2x32xf32>
    %71 = arith.subf %70, %60 : vector<2x32xf32>
    %72 = arith.mulf %71, %68 : vector<2x32xf32>
    %73 = arith.addf %69, %72 : vector<2x32xf32>
    %74 = math.tanh %73 : vector<2x32xf32>
    %75 = arith.mulf %66, %74 : vector<2x32xf32>
    %76 = tpu.concatenate %75, %73 in 1 : vector<2x32xf32>, vector<2x32xf32> -> vector<2x64xf32>
    %77 = arith.index_cast %c1_i32 : i32 to index
    %c0_26 = arith.constant 0 : index
    %c0_27 = arith.constant 0 : index
    %78 = vector.load %arg5[%77, %c0_26, %c0_27] : memref<8x2x64xf32, #tpu.memory_space<vmem>>, vector<1x2x64xf32>
    %79 = vector.shape_cast %78 : vector<1x2x64xf32> to vector<2x64xf32>
    %80 = vector.shape_cast %76 : vector<2x64xf32> to vector<1x2x64xf32>
    tpu.vector_store %arg5[%77, %c0_26, %c0_27], %80 {strides = array<i32>} : memref<8x2x64xf32, #tpu.memory_space<vmem>>, vector<1x2x64xf32>,
    %c2_i32_28 = arith.constant 2 : i32
    %c0_i32_29 = arith.constant 0 : i32
    %81 = arith.addi %0, %c0_i32_29 : i32
    %82 = arith.index_cast %c2_i32_28 : i32 to index
    %83 = arith.index_cast %81 : i32 to index
    %84 = memref.load %arg1[%82, %83] : memref<8x2xi32, #tpu.memory_space<smem>>
    %85 = arith.index_cast %84 : i32 to index
    %c0_30 = arith.constant 0 : index
    %c0_31 = arith.constant 0 : index
    %86 = vector.load %arg5[%85, %c0_30, %c0_31] : memref<8x2x64xf32, #tpu.memory_space<vmem>>, vector<1x2x64xf32>
    %87 = vector.shape_cast %86 : vector<1x2x64xf32> to vector<2x64xf32>
    %88 = vector.extract_strided_slice %87 {offsets = [0, 0], sizes = [1, 64], strides = [1, 1]} : vector<2x64xf32> to vector<1x64xf32>
    %c1_i32_32 = arith.constant 1 : i32
    %89 = arith.addi %0, %c1_i32_32 : i32
    %90 = arith.index_cast %c2_i32_28 : i32 to index
    %91 = arith.index_cast %89 : i32 to index
    %92 = memref.load %arg1[%90, %91] : memref<8x2xi32, #tpu.memory_space<smem>>
    %93 = arith.index_cast %92 : i32 to index
    %c0_33 = arith.constant 0 : index
    %c0_34 = arith.constant 0 : index
    %94 = vector.load %arg5[%93, %c0_33, %c0_34] : memref<8x2x64xf32, #tpu.memory_space<vmem>>, vector<1x2x64xf32>
    %95 = vector.shape_cast %94 : vector<1x2x64xf32> to vector<2x64xf32>
    %96 = vector.extract_strided_slice %95 {offsets = [1, 0], sizes = [1, 64], strides = [1, 1]} : vector<2x64xf32> to vector<1x64xf32>
    %97 = tpu.concatenate %88, %96 in 0 : vector<1x64xf32>, vector<1x64xf32> -> vector<2x64xf32>
    %98 = vector.extract_strided_slice %97 {offsets = [0, 0], sizes = [2, 32], strides = [1, 1]} : vector<2x64xf32> to vector<2x32xf32>
    %99 = vector.extract_strided_slice %97 {offsets = [0, 32], sizes = [2, 32], strides = [1, 1]} : vector<2x64xf32> to vector<2x32xf32>
    %c0_35 = arith.constant 0 : index
    %c0_36 = arith.constant 0 : index
    %100 = vector.load %arg3[%c0_35, %c0_36] : memref<32x96xf32, #tpu.memory_space<vmem>>, vector<32x96xf32>
    %cst_37 = arith.constant dense<0.000000e+00> : vector<2x96xf32>
    %101 = tpu.matmul %98, %100, %cst_37 {dimension_numbers = #tpu.dot_dimension_numbers<[1], [0], [0], [1], [0, 0, 1, 1], [], []>, precision = #tpu.contract_precision<fp32>} : vector<2x32xf32>, vector<32x96xf32>, vector<2x96xf32> -> vector<2x96xf32>
    %102 = arith.index_cast %c2_i32_28 : i32 to index
    %c0_38 = arith.constant 0 : index
    %c0_39 = arith.constant 0 : index
    %103 = vector.load %arg2[%102, %c0_38, %c0_39] : memref<8x2x96xf32, #tpu.memory_space<vmem>>, vector<1x2x96xf32>
    %104 = vector.shape_cast %103 : vector<1x2x96xf32> to vector<2x96xf32>
    %105 = arith.mulf %104, %101 : vector<2x96xf32>
    %c0_40 = arith.constant 0 : index
    %c0_41 = arith.constant 0 : index
    %106 = vector.load %arg4[%c0_40, %c0_41] : memref<96x96xf32, #tpu.memory_space<vmem>>, vector<96x96xf32>
    %cst_42 = arith.constant dense<0.000000e+00> : vector<2x96xf32>
    %107 = tpu.matmul %105, %106, %cst_42 {dimension_numbers = #tpu.dot_dimension_numbers<[1], [0], [0], [1], [0, 0, 1, 1], [], []>, precision = #tpu.contract_precision<fp32>} : vector<2x96xf32>, vector<96x96xf32>, vector<2x96xf32> -> vector<2x96xf32>
    %108 = vector.extract_strided_slice %107 {offsets = [0, 0], sizes = [2, 32], strides = [1, 1]} : vector<2x96xf32> to vector<2x32xf32>
    %109 = arith.negf %108 : vector<2x32xf32>
    %110 = math.exp %109 : vector<2x32xf32>
    %cst_43 = arith.constant 1.000000e+00 : f32
    %111 = vector.broadcast %cst_43 : f32 to vector<2x32xf32>
    %112 = arith.addf %111, %110 : vector<2x32xf32>
    %113 = arith.divf %111, %112 : vector<2x32xf32>
    %114 = vector.extract_strided_slice %107 {offsets = [0, 32], sizes = [2, 32], strides = [1, 1]} : vector<2x96xf32> to vector<2x32xf32>
    %115 = arith.negf %114 : vector<2x32xf32>
    %116 = math.exp %115 : vector<2x32xf32>
    %cst_44 = arith.constant 1.000000e+00 : f32
    %117 = vector.broadcast %cst_44 : f32 to vector<2x32xf32>
    %118 = arith.addf %117, %116 : vector<2x32xf32>
    %119 = arith.divf %117, %118 : vector<2x32xf32>
    %120 = vector.extract_strided_slice %107 {offsets = [0, 64], sizes = [2, 32], strides = [1, 1]} : vector<2x96xf32> to vector<2x32xf32>
    %121 = math.tanh %120 : vector<2x32xf32>
    %122 = arith.mulf %99, %113 : vector<2x32xf32>
    %cst_45 = arith.constant 1.000000e+00 : f32
    %123 = vector.broadcast %cst_45 : f32 to vector<2x32xf32>
    %124 = arith.subf %123, %113 : vector<2x32xf32>
    %125 = arith.mulf %124, %121 : vector<2x32xf32>
    %126 = arith.addf %122, %125 : vector<2x32xf32>
    %127 = math.tanh %126 : vector<2x32xf32>
    %128 = arith.mulf %119, %127 : vector<2x32xf32>
    %129 = tpu.concatenate %128, %126 in 1 : vector<2x32xf32>, vector<2x32xf32> -> vector<2x64xf32>
    %130 = arith.index_cast %c2_i32_28 : i32 to index
    %c0_46 = arith.constant 0 : index
    %c0_47 = arith.constant 0 : index
    %131 = vector.load %arg5[%130, %c0_46, %c0_47] : memref<8x2x64xf32, #tpu.memory_space<vmem>>, vector<1x2x64xf32>
    %132 = vector.shape_cast %131 : vector<1x2x64xf32> to vector<2x64xf32>
    %133 = vector.shape_cast %129 : vector<2x64xf32> to vector<1x2x64xf32>
    tpu.vector_store %arg5[%130, %c0_46, %c0_47], %133 {strides = array<i32>} : memref<8x2x64xf32, #tpu.memory_space<vmem>>, vector<1x2x64xf32>,
    %c3_i32 = arith.constant 3 : i32
    %c0_i32_48 = arith.constant 0 : i32
    %134 = arith.addi %0, %c0_i32_48 : i32
    %135 = arith.index_cast %c3_i32 : i32 to index
    %136 = arith.index_cast %134 : i32 to index
    %137 = memref.load %arg1[%135, %136] : memref<8x2xi32, #tpu.memory_space<smem>>
    %138 = arith.index_cast %137 : i32 to index
    %c0_49 = arith.constant 0 : index
    %c0_50 = arith.constant 0 : index
    %139 = vector.load %arg5[%138, %c0_49, %c0_50] : memref<8x2x64xf32, #tpu.memory_space<vmem>>, vector<1x2x64xf32>
    %140 = vector.shape_cast %139 : vector<1x2x64xf32> to vector<2x64xf32>
    %141 = vector.extract_strided_slice %140 {offsets = [0, 0], sizes = [1, 64], strides = [1, 1]} : vector<2x64xf32> to vector<1x64xf32>
    %c1_i32_51 = arith.constant 1 : i32
    %142 = arith.addi %0, %c1_i32_51 : i32
    %143 = arith.index_cast %c3_i32 : i32 to index
    %144 = arith.index_cast %142 : i32 to index
    %145 = memref.load %arg1[%143, %144] : memref<8x2xi32, #tpu.memory_space<smem>>
    %146 = arith.index_cast %145 : i32 to index
    %c0_52 = arith.constant 0 : index
    %c0_53 = arith.constant 0 : index
    %147 = vector.load %arg5[%146, %c0_52, %c0_53] : memref<8x2x64xf32, #tpu.memory_space<vmem>>, vector<1x2x64xf32>
    %148 = vector.shape_cast %147 : vector<1x2x64xf32> to vector<2x64xf32>
    %149 = vector.extract_strided_slice %148 {offsets = [1, 0], sizes = [1, 64], strides = [1, 1]} : vector<2x64xf32> to vector<1x64xf32>
    %150 = tpu.concatenate %141, %149 in 0 : vector<1x64xf32>, vector<1x64xf32> -> vector<2x64xf32>
    %151 = vector.extract_strided_slice %150 {offsets = [0, 0], sizes = [2, 32], strides = [1, 1]} : vector<2x64xf32> to vector<2x32xf32>
    %152 = vector.extract_strided_slice %150 {offsets = [0, 32], sizes = [2, 32], strides = [1, 1]} : vector<2x64xf32> to vector<2x32xf32>
    %c0_54 = arith.constant 0 : index
    %c0_55 = arith.constant 0 : index
    %153 = vector.load %arg3[%c0_54, %c0_55] : memref<32x96xf32, #tpu.memory_space<vmem>>, vector<32x96xf32>
    %cst_56 = arith.constant dense<0.000000e+00> : vector<2x96xf32>
    %154 = tpu.matmul %151, %153, %cst_56 {dimension_numbers = #tpu.dot_dimension_numbers<[1], [0], [0], [1], [0, 0, 1, 1], [], []>, precision = #tpu.contract_precision<fp32>} : vector<2x32xf32>, vector<32x96xf32>, vector<2x96xf32> -> vector<2x96xf32>
    %155 = arith.index_cast %c3_i32 : i32 to index
    %c0_57 = arith.constant 0 : index
    %c0_58 = arith.constant 0 : index
    %156 = vector.load %arg2[%155, %c0_57, %c0_58] : memref<8x2x96xf32, #tpu.memory_space<vmem>>, vector<1x2x96xf32>
    %157 = vector.shape_cast %156 : vector<1x2x96xf32> to vector<2x96xf32>
    %158 = arith.mulf %157, %154 : vector<2x96xf32>
    %c0_59 = arith.constant 0 : index
    %c0_60 = arith.constant 0 : index
    %159 = vector.load %arg4[%c0_59, %c0_60] : memref<96x96xf32, #tpu.memory_space<vmem>>, vector<96x96xf32>
    %cst_61 = arith.constant dense<0.000000e+00> : vector<2x96xf32>
    %160 = tpu.matmul %158, %159, %cst_61 {dimension_numbers = #tpu.dot_dimension_numbers<[1], [0], [0], [1], [0, 0, 1, 1], [], []>, precision = #tpu.contract_precision<fp32>} : vector<2x96xf32>, vector<96x96xf32>, vector<2x96xf32> -> vector<2x96xf32>
    %161 = vector.extract_strided_slice %160 {offsets = [0, 0], sizes = [2, 32], strides = [1, 1]} : vector<2x96xf32> to vector<2x32xf32>
    %162 = arith.negf %161 : vector<2x32xf32>
    %163 = math.exp %162 : vector<2x32xf32>
    %cst_62 = arith.constant 1.000000e+00 : f32
    %164 = vector.broadcast %cst_62 : f32 to vector<2x32xf32>
    %165 = arith.addf %164, %163 : vector<2x32xf32>
    %166 = arith.divf %164, %165 : vector<2x32xf32>
    %167 = vector.extract_strided_slice %160 {offsets = [0, 32], sizes = [2, 32], strides = [1, 1]} : vector<2x96xf32> to vector<2x32xf32>
    %168 = arith.negf %167 : vector<2x32xf32>
    %169 = math.exp %168 : vector<2x32xf32>
    %cst_63 = arith.constant 1.000000e+00 : f32
    %170 = vector.broadcast %cst_63 : f32 to vector<2x32xf32>
    %171 = arith.addf %170, %169 : vector<2x32xf32>
    %172 = arith.divf %170, %171 : vector<2x32xf32>
    %173 = vector.extract_strided_slice %160 {offsets = [0, 64], sizes = [2, 32], strides = [1, 1]} : vector<2x96xf32> to vector<2x32xf32>
    %174 = math.tanh %173 : vector<2x32xf32>
    %175 = arith.mulf %152, %166 : vector<2x32xf32>
    %cst_64 = arith.constant 1.000000e+00 : f32
    %176 = vector.broadcast %cst_64 : f32 to vector<2x32xf32>
    %177 = arith.subf %176, %166 : vector<2x32xf32>
    %178 = arith.mulf %177, %174 : vector<2x32xf32>
    %179 = arith.addf %175, %178 : vector<2x32xf32>
    %180 = math.tanh %179 : vector<2x32xf32>
    %181 = arith.mulf %172, %180 : vector<2x32xf32>
    %182 = tpu.concatenate %181, %179 in 1 : vector<2x32xf32>, vector<2x32xf32> -> vector<2x64xf32>
    %183 = arith.index_cast %c3_i32 : i32 to index
    %c0_65 = arith.constant 0 : index
    %c0_66 = arith.constant 0 : index
    %184 = vector.load %arg5[%183, %c0_65, %c0_66] : memref<8x2x64xf32, #tpu.memory_space<vmem>>, vector<1x2x64xf32>
    %185 = vector.shape_cast %184 : vector<1x2x64xf32> to vector<2x64xf32>
    %186 = vector.shape_cast %182 : vector<2x64xf32> to vector<1x2x64xf32>
    tpu.vector_store %arg5[%183, %c0_65, %c0_66], %186 {strides = array<i32>} : memref<8x2x64xf32, #tpu.memory_space<vmem>>, vector<1x2x64xf32>,
    %c4_i32 = arith.constant 4 : i32
    %c0_i32_67 = arith.constant 0 : i32
    %187 = arith.addi %0, %c0_i32_67 : i32
    %188 = arith.index_cast %c4_i32 : i32 to index
    %189 = arith.index_cast %187 : i32 to index
    %190 = memref.load %arg1[%188, %189] : memref<8x2xi32, #tpu.memory_space<smem>>
    %191 = arith.index_cast %190 : i32 to index
    %c0_68 = arith.constant 0 : index
    %c0_69 = arith.constant 0 : index
    %192 = vector.load %arg5[%191, %c0_68, %c0_69] : memref<8x2x64xf32, #tpu.memory_space<vmem>>, vector<1x2x64xf32>
    %193 = vector.shape_cast %192 : vector<1x2x64xf32> to vector<2x64xf32>
    %194 = vector.extract_strided_slice %193 {offsets = [0, 0], sizes = [1, 64], strides = [1, 1]} : vector<2x64xf32> to vector<1x64xf32>
    %c1_i32_70 = arith.constant 1 : i32
    %195 = arith.addi %0, %c1_i32_70 : i32
    %196 = arith.index_cast %c4_i32 : i32 to index
    %197 = arith.index_cast %195 : i32 to index
    %198 = memref.load %arg1[%196, %197] : memref<8x2xi32, #tpu.memory_space<smem>>
    %199 = arith.index_cast %198 : i32 to index
    %c0_71 = arith.constant 0 : index
    %c0_72 = arith.constant 0 : index
    %200 = vector.load %arg5[%199, %c0_71, %c0_72] : memref<8x2x64xf32, #tpu.memory_space<vmem>>, vector<1x2x64xf32>
    %201 = vector.shape_cast %200 : vector<1x2x64xf32> to vector<2x64xf32>
    %202 = vector.extract_strided_slice %201 {offsets = [1, 0], sizes = [1, 64], strides = [1, 1]} : vector<2x64xf32> to vector<1x64xf32>
    %203 = tpu.concatenate %194, %202 in 0 : vector<1x64xf32>, vector<1x64xf32> -> vector<2x64xf32>
    %204 = vector.extract_strided_slice %203 {offsets = [0, 0], sizes = [2, 32], strides = [1, 1]} : vector<2x64xf32> to vector<2x32xf32>
    %205 = vector.extract_strided_slice %203 {offsets = [0, 32], sizes = [2, 32], strides = [1, 1]} : vector<2x64xf32> to vector<2x32xf32>
    %c0_73 = arith.constant 0 : index
    %c0_74 = arith.constant 0 : index
    %206 = vector.load %arg3[%c0_73, %c0_74] : memref<32x96xf32, #tpu.memory_space<vmem>>, vector<32x96xf32>
    %cst_75 = arith.constant dense<0.000000e+00> : vector<2x96xf32>
    %207 = tpu.matmul %204, %206, %cst_75 {dimension_numbers = #tpu.dot_dimension_numbers<[1], [0], [0], [1], [0, 0, 1, 1], [], []>, precision = #tpu.contract_precision<fp32>} : vector<2x32xf32>, vector<32x96xf32>, vector<2x96xf32> -> vector<2x96xf32>
    %208 = arith.index_cast %c4_i32 : i32 to index
    %c0_76 = arith.constant 0 : index
    %c0_77 = arith.constant 0 : index
    %209 = vector.load %arg2[%208, %c0_76, %c0_77] : memref<8x2x96xf32, #tpu.memory_space<vmem>>, vector<1x2x96xf32>
    %210 = vector.shape_cast %209 : vector<1x2x96xf32> to vector<2x96xf32>
    %211 = arith.mulf %210, %207 : vector<2x96xf32>
    %c0_78 = arith.constant 0 : index
    %c0_79 = arith.constant 0 : index
    %212 = vector.load %arg4[%c0_78, %c0_79] : memref<96x96xf32, #tpu.memory_space<vmem>>, vector<96x96xf32>
    %cst_80 = arith.constant dense<0.000000e+00> : vector<2x96xf32>
    %213 = tpu.matmul %211, %212, %cst_80 {dimension_numbers = #tpu.dot_dimension_numbers<[1], [0], [0], [1], [0, 0, 1, 1], [], []>, precision = #tpu.contract_precision<fp32>} : vector<2x96xf32>, vector<96x96xf32>, vector<2x96xf32> -> vector<2x96xf32>
    %214 = vector.extract_strided_slice %213 {offsets = [0, 0], sizes = [2, 32], strides = [1, 1]} : vector<2x96xf32> to vector<2x32xf32>
    %215 = arith.negf %214 : vector<2x32xf32>
    %216 = math.exp %215 : vector<2x32xf32>
    %cst_81 = arith.constant 1.000000e+00 : f32
    %217 = vector.broadcast %cst_81 : f32 to vector<2x32xf32>
    %218 = arith.addf %217, %216 : vector<2x32xf32>
    %219 = arith.divf %217, %218 : vector<2x32xf32>
    %220 = vector.extract_strided_slice %213 {offsets = [0, 32], sizes = [2, 32], strides = [1, 1]} : vector<2x96xf32> to vector<2x32xf32>
    %221 = arith.negf %220 : vector<2x32xf32>
    %222 = math.exp %221 : vector<2x32xf32>
    %cst_82 = arith.constant 1.000000e+00 : f32
    %223 = vector.broadcast %cst_82 : f32 to vector<2x32xf32>
    %224 = arith.addf %223, %222 : vector<2x32xf32>
    %225 = arith.divf %223, %224 : vector<2x32xf32>
    %226 = vector.extract_strided_slice %213 {offsets = [0, 64], sizes = [2, 32], strides = [1, 1]} : vector<2x96xf32> to vector<2x32xf32>
    %227 = math.tanh %226 : vector<2x32xf32>
    %228 = arith.mulf %205, %219 : vector<2x32xf32>
    %cst_83 = arith.constant 1.000000e+00 : f32
    %229 = vector.broadcast %cst_83 : f32 to vector<2x32xf32>
    %230 = arith.subf %229, %219 : vector<2x32xf32>
    %231 = arith.mulf %230, %227 : vector<2x32xf32>
    %232 = arith.addf %228, %231 : vector<2x32xf32>
    %233 = math.tanh %232 : vector<2x32xf32>
    %234 = arith.mulf %225, %233 : vector<2x32xf32>
    %235 = tpu.concatenate %234, %232 in 1 : vector<2x32xf32>, vector<2x32xf32> -> vector<2x64xf32>
    %236 = arith.index_cast %c4_i32 : i32 to index
    %c0_84 = arith.constant 0 : index
    %c0_85 = arith.constant 0 : index
    %237 = vector.load %arg5[%236, %c0_84, %c0_85] : memref<8x2x64xf32, #tpu.memory_space<vmem>>, vector<1x2x64xf32>
    %238 = vector.shape_cast %237 : vector<1x2x64xf32> to vector<2x64xf32>
    %239 = vector.shape_cast %235 : vector<2x64xf32> to vector<1x2x64xf32>
    tpu.vector_store %arg5[%236, %c0_84, %c0_85], %239 {strides = array<i32>} : memref<8x2x64xf32, #tpu.memory_space<vmem>>, vector<1x2x64xf32>,
    %c5_i32 = arith.constant 5 : i32
    %c0_i32_86 = arith.constant 0 : i32
    %240 = arith.addi %0, %c0_i32_86 : i32
    %241 = arith.index_cast %c5_i32 : i32 to index
    %242 = arith.index_cast %240 : i32 to index
    %243 = memref.load %arg1[%241, %242] : memref<8x2xi32, #tpu.memory_space<smem>>
    %244 = arith.index_cast %243 : i32 to index
    %c0_87 = arith.constant 0 : index
    %c0_88 = arith.constant 0 : index
    %245 = vector.load %arg5[%244, %c0_87, %c0_88] : memref<8x2x64xf32, #tpu.memory_space<vmem>>, vector<1x2x64xf32>
    %246 = vector.shape_cast %245 : vector<1x2x64xf32> to vector<2x64xf32>
    %247 = vector.extract_strided_slice %246 {offsets = [0, 0], sizes = [1, 64], strides = [1, 1]} : vector<2x64xf32> to vector<1x64xf32>
    %c1_i32_89 = arith.constant 1 : i32
    %248 = arith.addi %0, %c1_i32_89 : i32
    %249 = arith.index_cast %c5_i32 : i32 to index
    %250 = arith.index_cast %248 : i32 to index
    %251 = memref.load %arg1[%249, %250] : memref<8x2xi32, #tpu.memory_space<smem>>
    %252 = arith.index_cast %251 : i32 to index
    %c0_90 = arith.constant 0 : index
    %c0_91 = arith.constant 0 : index
    %253 = vector.load %arg5[%252, %c0_90, %c0_91] : memref<8x2x64xf32, #tpu.memory_space<vmem>>, vector<1x2x64xf32>
    %254 = vector.shape_cast %253 : vector<1x2x64xf32> to vector<2x64xf32>
    %255 = vector.extract_strided_slice %254 {offsets = [1, 0], sizes = [1, 64], strides = [1, 1]} : vector<2x64xf32> to vector<1x64xf32>
    %256 = tpu.concatenate %247, %255 in 0 : vector<1x64xf32>, vector<1x64xf32> -> vector<2x64xf32>
    %257 = vector.extract_strided_slice %256 {offsets = [0, 0], sizes = [2, 32], strides = [1, 1]} : vector<2x64xf32> to vector<2x32xf32>
    %258 = vector.extract_strided_slice %256 {offsets = [0, 32], sizes = [2, 32], strides = [1, 1]} : vector<2x64xf32> to vector<2x32xf32>
    %c0_92 = arith.constant 0 : index
    %c0_93 = arith.constant 0 : index
    %259 = vector.load %arg3[%c0_92, %c0_93] : memref<32x96xf32, #tpu.memory_space<vmem>>, vector<32x96xf32>
    %cst_94 = arith.constant dense<0.000000e+00> : vector<2x96xf32>
    %260 = tpu.matmul %257, %259, %cst_94 {dimension_numbers = #tpu.dot_dimension_numbers<[1], [0], [0], [1], [0, 0, 1, 1], [], []>, precision = #tpu.contract_precision<fp32>} : vector<2x32xf32>, vector<32x96xf32>, vector<2x96xf32> -> vector<2x96xf32>
    %261 = arith.index_cast %c5_i32 : i32 to index
    %c0_95 = arith.constant 0 : index
    %c0_96 = arith.constant 0 : index
    %262 = vector.load %arg2[%261, %c0_95, %c0_96] : memref<8x2x96xf32, #tpu.memory_space<vmem>>, vector<1x2x96xf32>
    %263 = vector.shape_cast %262 : vector<1x2x96xf32> to vector<2x96xf32>
    %264 = arith.mulf %263, %260 : vector<2x96xf32>
    %c0_97 = arith.constant 0 : index
    %c0_98 = arith.constant 0 : index
    %265 = vector.load %arg4[%c0_97, %c0_98] : memref<96x96xf32, #tpu.memory_space<vmem>>, vector<96x96xf32>
    %cst_99 = arith.constant dense<0.000000e+00> : vector<2x96xf32>
    %266 = tpu.matmul %264, %265, %cst_99 {dimension_numbers = #tpu.dot_dimension_numbers<[1], [0], [0], [1], [0, 0, 1, 1], [], []>, precision = #tpu.contract_precision<fp32>} : vector<2x96xf32>, vector<96x96xf32>, vector<2x96xf32> -> vector<2x96xf32>
    %267 = vector.extract_strided_slice %266 {offsets = [0, 0], sizes = [2, 32], strides = [1, 1]} : vector<2x96xf32> to vector<2x32xf32>
    %268 = arith.negf %267 : vector<2x32xf32>
    %269 = math.exp %268 : vector<2x32xf32>
    %cst_100 = arith.constant 1.000000e+00 : f32
    %270 = vector.broadcast %cst_100 : f32 to vector<2x32xf32>
    %271 = arith.addf %270, %269 : vector<2x32xf32>
    %272 = arith.divf %270, %271 : vector<2x32xf32>
    %273 = vector.extract_strided_slice %266 {offsets = [0, 32], sizes = [2, 32], strides = [1, 1]} : vector<2x96xf32> to vector<2x32xf32>
    %274 = arith.negf %273 : vector<2x32xf32>
    %275 = math.exp %274 : vector<2x32xf32>
    %cst_101 = arith.constant 1.000000e+00 : f32
    %276 = vector.broadcast %cst_101 : f32 to vector<2x32xf32>
    %277 = arith.addf %276, %275 : vector<2x32xf32>
    %278 = arith.divf %276, %277 : vector<2x32xf32>
    %279 = vector.extract_strided_slice %266 {offsets = [0, 64], sizes = [2, 32], strides = [1, 1]} : vector<2x96xf32> to vector<2x32xf32>
    %280 = math.tanh %279 : vector<2x32xf32>
    %281 = arith.mulf %258, %272 : vector<2x32xf32>
    %cst_102 = arith.constant 1.000000e+00 : f32
    %282 = vector.broadcast %cst_102 : f32 to vector<2x32xf32>
    %283 = arith.subf %282, %272 : vector<2x32xf32>
    %284 = arith.mulf %283, %280 : vector<2x32xf32>
    %285 = arith.addf %281, %284 : vector<2x32xf32>
    %286 = math.tanh %285 : vector<2x32xf32>
    %287 = arith.mulf %278, %286 : vector<2x32xf32>
    %288 = tpu.concatenate %287, %285 in 1 : vector<2x32xf32>, vector<2x32xf32> -> vector<2x64xf32>
    %289 = arith.index_cast %c5_i32 : i32 to index
    %c0_103 = arith.constant 0 : index
    %c0_104 = arith.constant 0 : index
    %290 = vector.load %arg5[%289, %c0_103, %c0_104] : memref<8x2x64xf32, #tpu.memory_space<vmem>>, vector<1x2x64xf32>
    %291 = vector.shape_cast %290 : vector<1x2x64xf32> to vector<2x64xf32>
    %292 = vector.shape_cast %288 : vector<2x64xf32> to vector<1x2x64xf32>
    tpu.vector_store %arg5[%289, %c0_103, %c0_104], %292 {strides = array<i32>} : memref<8x2x64xf32, #tpu.memory_space<vmem>>, vector<1x2x64xf32>,
    %c6_i32 = arith.constant 6 : i32
    %c0_i32_105 = arith.constant 0 : i32
    %293 = arith.addi %0, %c0_i32_105 : i32
    %294 = arith.index_cast %c6_i32 : i32 to index
    %295 = arith.index_cast %293 : i32 to index
    %296 = memref.load %arg1[%294, %295] : memref<8x2xi32, #tpu.memory_space<smem>>
    %297 = arith.index_cast %296 : i32 to index
    %c0_106 = arith.constant 0 : index
    %c0_107 = arith.constant 0 : index
    %298 = vector.load %arg5[%297, %c0_106, %c0_107] : memref<8x2x64xf32, #tpu.memory_space<vmem>>, vector<1x2x64xf32>
    %299 = vector.shape_cast %298 : vector<1x2x64xf32> to vector<2x64xf32>
    %300 = vector.extract_strided_slice %299 {offsets = [0, 0], sizes = [1, 64], strides = [1, 1]} : vector<2x64xf32> to vector<1x64xf32>
    %c1_i32_108 = arith.constant 1 : i32
    %301 = arith.addi %0, %c1_i32_108 : i32
    %302 = arith.index_cast %c6_i32 : i32 to index
    %303 = arith.index_cast %301 : i32 to index
    %304 = memref.load %arg1[%302, %303] : memref<8x2xi32, #tpu.memory_space<smem>>
    %305 = arith.index_cast %304 : i32 to index
    %c0_109 = arith.constant 0 : index
    %c0_110 = arith.constant 0 : index
    %306 = vector.load %arg5[%305, %c0_109, %c0_110] : memref<8x2x64xf32, #tpu.memory_space<vmem>>, vector<1x2x64xf32>
    %307 = vector.shape_cast %306 : vector<1x2x64xf32> to vector<2x64xf32>
    %308 = vector.extract_strided_slice %307 {offsets = [1, 0], sizes = [1, 64], strides = [1, 1]} : vector<2x64xf32> to vector<1x64xf32>
    %309 = tpu.concatenate %300, %308 in 0 : vector<1x64xf32>, vector<1x64xf32> -> vector<2x64xf32>
    %310 = vector.extract_strided_slice %309 {offsets = [0, 0], sizes = [2, 32], strides = [1, 1]} : vector<2x64xf32> to vector<2x32xf32>
    %311 = vector.extract_strided_slice %309 {offsets = [0, 32], sizes = [2, 32], strides = [1, 1]} : vector<2x64xf32> to vector<2x32xf32>
    %c0_111 = arith.constant 0 : index
    %c0_112 = arith.constant 0 : index
    %312 = vector.load %arg3[%c0_111, %c0_112] : memref<32x96xf32, #tpu.memory_space<vmem>>, vector<32x96xf32>
    %cst_113 = arith.constant dense<0.000000e+00> : vector<2x96xf32>
    %313 = tpu.matmul %310, %312, %cst_113 {dimension_numbers = #tpu.dot_dimension_numbers<[1], [0], [0], [1], [0, 0, 1, 1], [], []>, precision = #tpu.contract_precision<fp32>} : vector<2x32xf32>, vector<32x96xf32>, vector<2x96xf32> -> vector<2x96xf32>
    %314 = arith.index_cast %c6_i32 : i32 to index
    %c0_114 = arith.constant 0 : index
    %c0_115 = arith.constant 0 : index
    %315 = vector.load %arg2[%314, %c0_114, %c0_115] : memref<8x2x96xf32, #tpu.memory_space<vmem>>, vector<1x2x96xf32>
    %316 = vector.shape_cast %315 : vector<1x2x96xf32> to vector<2x96xf32>
    %317 = arith.mulf %316, %313 : vector<2x96xf32>
    %c0_116 = arith.constant 0 : index
    %c0_117 = arith.constant 0 : index
    %318 = vector.load %arg4[%c0_116, %c0_117] : memref<96x96xf32, #tpu.memory_space<vmem>>, vector<96x96xf32>
    %cst_118 = arith.constant dense<0.000000e+00> : vector<2x96xf32>
    %319 = tpu.matmul %317, %318, %cst_118 {dimension_numbers = #tpu.dot_dimension_numbers<[1], [0], [0], [1], [0, 0, 1, 1], [], []>, precision = #tpu.contract_precision<fp32>} : vector<2x96xf32>, vector<96x96xf32>, vector<2x96xf32> -> vector<2x96xf32>
    %320 = vector.extract_strided_slice %319 {offsets = [0, 0], sizes = [2, 32], strides = [1, 1]} : vector<2x96xf32> to vector<2x32xf32>
    %321 = arith.negf %320 : vector<2x32xf32>
    %322 = math.exp %321 : vector<2x32xf32>
    %cst_119 = arith.constant 1.000000e+00 : f32
    %323 = vector.broadcast %cst_119 : f32 to vector<2x32xf32>
    %324 = arith.addf %323, %322 : vector<2x32xf32>
    %325 = arith.divf %323, %324 : vector<2x32xf32>
    %326 = vector.extract_strided_slice %319 {offsets = [0, 32], sizes = [2, 32], strides = [1, 1]} : vector<2x96xf32> to vector<2x32xf32>
    %327 = arith.negf %326 : vector<2x32xf32>
    %328 = math.exp %327 : vector<2x32xf32>
    %cst_120 = arith.constant 1.000000e+00 : f32
    %329 = vector.broadcast %cst_120 : f32 to vector<2x32xf32>
    %330 = arith.addf %329, %328 : vector<2x32xf32>
    %331 = arith.divf %329, %330 : vector<2x32xf32>
    %332 = vector.extract_strided_slice %319 {offsets = [0, 64], sizes = [2, 32], strides = [1, 1]} : vector<2x96xf32> to vector<2x32xf32>
    %333 = math.tanh %332 : vector<2x32xf32>
    %334 = arith.mulf %311, %325 : vector<2x32xf32>
    %cst_121 = arith.constant 1.000000e+00 : f32
    %335 = vector.broadcast %cst_121 : f32 to vector<2x32xf32>
    %336 = arith.subf %335, %325 : vector<2x32xf32>
    %337 = arith.mulf %336, %333 : vector<2x32xf32>
    %338 = arith.addf %334, %337 : vector<2x32xf32>
    %339 = math.tanh %338 : vector<2x32xf32>
    %340 = arith.mulf %331, %339 : vector<2x32xf32>
    %341 = tpu.concatenate %340, %338 in 1 : vector<2x32xf32>, vector<2x32xf32> -> vector<2x64xf32>
    %342 = arith.index_cast %c6_i32 : i32 to index
    %c0_122 = arith.constant 0 : index
    %c0_123 = arith.constant 0 : index
    %343 = vector.load %arg5[%342, %c0_122, %c0_123] : memref<8x2x64xf32, #tpu.memory_space<vmem>>, vector<1x2x64xf32>
    %344 = vector.shape_cast %343 : vector<1x2x64xf32> to vector<2x64xf32>
    %345 = vector.shape_cast %341 : vector<2x64xf32> to vector<1x2x64xf32>
    tpu.vector_store %arg5[%342, %c0_122, %c0_123], %345 {strides = array<i32>} : memref<8x2x64xf32, #tpu.memory_space<vmem>>, vector<1x2x64xf32>,
    %c7_i32 = arith.constant 7 : i32
    %c0_i32_124 = arith.constant 0 : i32
    %346 = arith.addi %0, %c0_i32_124 : i32
    %347 = arith.index_cast %c7_i32 : i32 to index
    %348 = arith.index_cast %346 : i32 to index
    %349 = memref.load %arg1[%347, %348] : memref<8x2xi32, #tpu.memory_space<smem>>
    %350 = arith.index_cast %349 : i32 to index
    %c0_125 = arith.constant 0 : index
    %c0_126 = arith.constant 0 : index
    %351 = vector.load %arg5[%350, %c0_125, %c0_126] : memref<8x2x64xf32, #tpu.memory_space<vmem>>, vector<1x2x64xf32>
    %352 = vector.shape_cast %351 : vector<1x2x64xf32> to vector<2x64xf32>
    %353 = vector.extract_strided_slice %352 {offsets = [0, 0], sizes = [1, 64], strides = [1, 1]} : vector<2x64xf32> to vector<1x64xf32>
    %c1_i32_127 = arith.constant 1 : i32
    %354 = arith.addi %0, %c1_i32_127 : i32
    %355 = arith.index_cast %c7_i32 : i32 to index
    %356 = arith.index_cast %354 : i32 to index
    %357 = memref.load %arg1[%355, %356] : memref<8x2xi32, #tpu.memory_space<smem>>
    %358 = arith.index_cast %357 : i32 to index
    %c0_128 = arith.constant 0 : index
    %c0_129 = arith.constant 0 : index
    %359 = vector.load %arg5[%358, %c0_128, %c0_129] : memref<8x2x64xf32, #tpu.memory_space<vmem>>, vector<1x2x64xf32>
    %360 = vector.shape_cast %359 : vector<1x2x64xf32> to vector<2x64xf32>
    %361 = vector.extract_strided_slice %360 {offsets = [1, 0], sizes = [1, 64], strides = [1, 1]} : vector<2x64xf32> to vector<1x64xf32>
    %362 = tpu.concatenate %353, %361 in 0 : vector<1x64xf32>, vector<1x64xf32> -> vector<2x64xf32>
    %363 = vector.extract_strided_slice %362 {offsets = [0, 0], sizes = [2, 32], strides = [1, 1]} : vector<2x64xf32> to vector<2x32xf32>
    %364 = vector.extract_strided_slice %362 {offsets = [0, 32], sizes = [2, 32], strides = [1, 1]} : vector<2x64xf32> to vector<2x32xf32>
    %c0_130 = arith.constant 0 : index
    %c0_131 = arith.constant 0 : index
    %365 = vector.load %arg3[%c0_130, %c0_131] : memref<32x96xf32, #tpu.memory_space<vmem>>, vector<32x96xf32>
    %cst_132 = arith.constant dense<0.000000e+00> : vector<2x96xf32>
    %366 = tpu.matmul %363, %365, %cst_132 {dimension_numbers = #tpu.dot_dimension_numbers<[1], [0], [0], [1], [0, 0, 1, 1], [], []>, precision = #tpu.contract_precision<fp32>} : vector<2x32xf32>, vector<32x96xf32>, vector<2x96xf32> -> vector<2x96xf32>
    %367 = arith.index_cast %c7_i32 : i32 to index
    %c0_133 = arith.constant 0 : index
    %c0_134 = arith.constant 0 : index
    %368 = vector.load %arg2[%367, %c0_133, %c0_134] : memref<8x2x96xf32, #tpu.memory_space<vmem>>, vector<1x2x96xf32>
    %369 = vector.shape_cast %368 : vector<1x2x96xf32> to vector<2x96xf32>
    %370 = arith.mulf %369, %366 : vector<2x96xf32>
    %c0_135 = arith.constant 0 : index
    %c0_136 = arith.constant 0 : index
    %371 = vector.load %arg4[%c0_135, %c0_136] : memref<96x96xf32, #tpu.memory_space<vmem>>, vector<96x96xf32>
    %cst_137 = arith.constant dense<0.000000e+00> : vector<2x96xf32>
    %372 = tpu.matmul %370, %371, %cst_137 {dimension_numbers = #tpu.dot_dimension_numbers<[1], [0], [0], [1], [0, 0, 1, 1], [], []>, precision = #tpu.contract_precision<fp32>} : vector<2x96xf32>, vector<96x96xf32>, vector<2x96xf32> -> vector<2x96xf32>
    %373 = vector.extract_strided_slice %372 {offsets = [0, 0], sizes = [2, 32], strides = [1, 1]} : vector<2x96xf32> to vector<2x32xf32>
    %374 = arith.negf %373 : vector<2x32xf32>
    %375 = math.exp %374 : vector<2x32xf32>
    %cst_138 = arith.constant 1.000000e+00 : f32
    %376 = vector.broadcast %cst_138 : f32 to vector<2x32xf32>
    %377 = arith.addf %376, %375 : vector<2x32xf32>
    %378 = arith.divf %376, %377 : vector<2x32xf32>
    %379 = vector.extract_strided_slice %372 {offsets = [0, 32], sizes = [2, 32], strides = [1, 1]} : vector<2x96xf32> to vector<2x32xf32>
    %380 = arith.negf %379 : vector<2x32xf32>
    %381 = math.exp %380 : vector<2x32xf32>
    %cst_139 = arith.constant 1.000000e+00 : f32
    %382 = vector.broadcast %cst_139 : f32 to vector<2x32xf32>
    %383 = arith.addf %382, %381 : vector<2x32xf32>
    %384 = arith.divf %382, %383 : vector<2x32xf32>
    %385 = vector.extract_strided_slice %372 {offsets = [0, 64], sizes = [2, 32], strides = [1, 1]} : vector<2x96xf32> to vector<2x32xf32>
    %386 = math.tanh %385 : vector<2x32xf32>
    %387 = arith.mulf %364, %378 : vector<2x32xf32>
    %cst_140 = arith.constant 1.000000e+00 : f32
    %388 = vector.broadcast %cst_140 : f32 to vector<2x32xf32>
    %389 = arith.subf %388, %378 : vector<2x32xf32>
    %390 = arith.mulf %389, %386 : vector<2x32xf32>
    %391 = arith.addf %387, %390 : vector<2x32xf32>
    %392 = math.tanh %391 : vector<2x32xf32>
    %393 = arith.mulf %384, %392 : vector<2x32xf32>
    %394 = tpu.concatenate %393, %391 in 1 : vector<2x32xf32>, vector<2x32xf32> -> vector<2x64xf32>
    %395 = arith.index_cast %c7_i32 : i32 to index
    %c0_141 = arith.constant 0 : index
    %c0_142 = arith.constant 0 : index
    %396 = vector.load %arg5[%395, %c0_141, %c0_142] : memref<8x2x64xf32, #tpu.memory_space<vmem>>, vector<1x2x64xf32>
    %397 = vector.shape_cast %396 : vector<1x2x64xf32> to vector<2x64xf32>
    %398 = vector.shape_cast %394 : vector<2x64xf32> to vector<1x2x64xf32>
    tpu.vector_store %arg5[%395, %c0_141, %c0_142], %398 {strides = array<i32>} : memref<8x2x64xf32, #tpu.memory_space<vmem>>, vector<1x2x64xf32>,
    %c7_i32_143 = arith.constant 7 : i32
    return
  }
  func.func @transform_0(%arg0: i32, %arg1: memref<8x2xi32, #tpu.memory_space<smem>>) -> (i32, i32, i32) {
    %c0_i32 = arith.constant 0 : i32
    %c0_i32_0 = arith.constant 0 : i32
    %c0_i32_1 = arith.constant 0 : i32
    return %c0_i32, %arg0, %c0_i32_0 : i32, i32, i32
  }
  func.func @transform_1(%arg0: i32, %arg1: memref<8x2xi32, #tpu.memory_space<smem>>) -> (i32, i32) {
    %c0_i32 = arith.constant 0 : i32
    %c0_i32_0 = arith.constant 0 : i32
    %c0_i32_1 = arith.constant 0 : i32
    return %c0_i32, %c0_i32_0 : i32, i32
  }
  func.func @transform_2(%arg0: i32, %arg1: memref<8x2xi32, #tpu.memory_space<smem>>) -> (i32, i32) {
    %c0_i32 = arith.constant 0 : i32
    %c0_i32_0 = arith.constant 0 : i32
    %c0_i32_1 = arith.constant 0 : i32
    return %c0_i32, %c0_i32_0 : i32, i32
  }
  func.func @transform_3(%arg0: i32, %arg1: memref<8x2xi32, #tpu.memory_space<smem>>) -> (i32, i32, i32) {
    %c0_i32 = arith.constant 0 : i32
    %c0_i32_0 = arith.constant 0 : i32
    %c0_i32_1 = arith.constant 0 : i32
    return %c0_i32, %arg0, %c0_i32_0 : i32, i32, i32
  }
}

</mosaic_0001>

<llo_original>
// kernel: tpu_custom_call.1
$region0: #{tpu_custom_call.1}
  #allocation0 [shape = 'u32[]', space=smem, size = 0x4, offset = 0x4, fixed_abs, tag = 'smem constant byte address 0x4 - core index']
  #allocation1 [shape = 'u32[72,128]{1,0:T(1,128)}', space=vmem, size = 0x9000, scoped, tag = 'internal scratch']
  #allocation2 [shape = 's32[1]{0}', space=sflag, size = 0x4, scoped, tag = 'scoped memory for tpu_custom_call.1']
  #allocation3 [shape = 'u8[4096]{0}', space=smem, size = 0x1000, scoped, tag = 'prefetched SMEM operand 0']
  %s0 = inlined_call_operand.vmem [shape: s32[8,2], index: 0, kind: input, shape index: {}]
  %s1 = inlined_call_operand.hbm [shape: f32[8,2,96], index: 1, kind: input, shape index: {}]
  %s2 = inlined_call_operand.hbm [shape: f32[32,96], index: 2, kind: input, shape index: {}]
  %s3 = inlined_call_operand.hbm [shape: f32[96,96], index: 3, kind: input, shape index: {}]
  %s4 = inlined_call_operand.hbm [shape: f32[8,2,64], index: 4, kind: output, shape index: {}]
  %s5 = sld [smem:[#allocation0]]
  $region34: #{tpu_custom_call.1} parent=0
    _
  %s7 = ssub.s32 1, %s5
  %s8 = scalar_select 0, %s7, %s5
  %s10 = sshll.u32 %s0, 4
  %s11 = int_to_ptr.vmem [resolvable:$true] %s10
  %13 = dma.vmem_to_smem %s11, 128, [#allocation3], [#allocation2]
  %15 = dma.done [#allocation2], 128
  %16 = sfence
  $region1: #{tpu_custom_call.1} parent=0
    #allocation4 [shape = 'u8[8192]{0}', space=vmem, size = 0x2000, scoped, tag = 'input window, operand 1, single buffered']
    #allocation5 [shape = 's32[1]{0}', space=sflag, size = 0x4, scoped, tag = 'scoped memory for tpu_custom_call.1']
    #allocation6 [shape = 's32[1]{0}', space=sflag, size = 0x4, scoped, tag = 'scoped memory for tpu_custom_call.1']
    #allocation7 [shape = 'u8[16384]{0}', space=vmem, size = 0x4000, scoped, tag = 'input window, operand 2, single buffered']
    #allocation8 [shape = 's32[1]{0}', space=sflag, size = 0x4, scoped, tag = 'scoped memory for tpu_custom_call.1']
    #allocation9 [shape = 'u8[49152]{0}', space=vmem, size = 0xc000, scoped, tag = 'input window, operand 3, single buffered']
    #allocation10 [shape = 'u8[8192]{0}', space=vmem, size = 0x2000, scoped, tag = 'output window, operand 0, single buffered']
    %17 = vsyncpa [#allocation5], 0
    %18 = vsyncpa [#allocation8], 0
    %19 = vsyncpa [#allocation6], 0
    // Predicated region
    $region2: #{tpu_custom_call.1} parent=1 // pred_check
      _
    $region3: #{tpu_custom_call.1} parent=1 // pred_check_branch
      %21 = sbr.rel (0) target = $region5
    $region4: #{tpu_custom_call.1} parent=1 // pred_region
      %23 = vsyncadd [#allocation5], 0
      %s24 = sshll.u32 %s1, 4
      %s25 = int_to_ptr.hbm [resolvable:$true] %s24
      %s26 = sshll.u32 [#allocation4], 4
      %s27 = int_to_ptr.vmem [resolvable:$true] %s26
      %32 = dma.hbm_to_vmem [thread:$0]  %s25, 256, %s27, [#allocation5], 32, 32, 2
    $region5: #{tpu_custom_call.1} parent=1 // pred_fallthru
      _
    // Predicated region
    $region6: #{tpu_custom_call.1} parent=1 // pred_check
      _
    $region7: #{tpu_custom_call.1} parent=1 // pred_check_branch
      %34 = sbr.rel (0) target = $region9
    $region8: #{tpu_custom_call.1} parent=1 // pred_region
      %36 = vsyncadd [#allocation8], 0
      %s37 = sshll.u32 %s2, 4
      %s38 = int_to_ptr.hbm [resolvable:$true] %s37
      %s39 = sshll.u32 [#allocation7], 4
      %s40 = int_to_ptr.vmem [resolvable:$true] %s39
      %45 = dma.hbm_to_vmem [thread:$0]  %s38, 512, %s40, [#allocation8], 128, 128, 8
    $region9: #{tpu_custom_call.1} parent=1 // pred_fallthru
      _
    // Predicated region
    $region10: #{tpu_custom_call.1} parent=1 // pred_check
      _
    $region11: #{tpu_custom_call.1} parent=1 // pred_check_branch
      %47 = sbr.rel (0) target = $region13
    $region12: #{tpu_custom_call.1} parent=1 // pred_region
      %49 = vsyncadd [#allocation8], 0
      %s50 = sshll.u32 %s3, 4
      %s51 = int_to_ptr.hbm [resolvable:$true] %s50
      %s52 = sshll.u32 [#allocation9], 4
      %s53 = int_to_ptr.vmem [resolvable:$true] %s52
      %58 = dma.hbm_to_vmem [thread:$0]  %s51, 1536, %s53, [#allocation8], 128, 128, 8
    $region13: #{tpu_custom_call.1} parent=1 // pred_fallthru
      _
    // Predicated region
    $region14: #{tpu_custom_call.1} parent=1 // pred_check
      _
    $region15: #{tpu_custom_call.1} parent=1 // pred_check_branch
      %60 = sbr.rel (0) target = $region17
    $region16: #{tpu_custom_call.1} parent=1 // pred_region
      %62 = dma.done [#allocation5], 256
    $region17: #{tpu_custom_call.1} parent=1 // pred_fallthru
      _
    // Predicated region
    $region18: #{tpu_custom_call.1} parent=1 // pred_check
      _
    $region19: #{tpu_custom_call.1} parent=1 // pred_check_branch
      %64 = sbr.rel (0) target = $region21
    $region20: #{tpu_custom_call.1} parent=1 // pred_region
      %66 = dma.done [#allocation8], 512
    $region21: #{tpu_custom_call.1} parent=1 // pred_fallthru
      _
    // Predicated region
    $region22: #{tpu_custom_call.1} parent=1 // pred_check
      _
    $region23: #{tpu_custom_call.1} parent=1 // pred_check_branch
      %68 = sbr.rel (0) target = $region25
    $region24: #{tpu_custom_call.1} parent=1 // pred_region
      %70 = dma.done [#allocation8], 1536
    $region25: #{tpu_custom_call.1} parent=1 // pred_fallthru
      _
    %s71 = smul.u32 0, 2
    %v72 = vld [vmem:[#allocation4] sm:$0x3]
    %v73 = vld [vmem:[#allocation9] sm:$0xff]
    %v74 = vld [vmem:[#allocation9 + $0x8] sm:$0xff]
    %v75 = vld [vmem:[#allocation9 + $0x10] sm:$0xff]
    %v76 = vld [vmem:[#allocation9 + $0x18] sm:$0xff]
    %v77 = vld [vmem:[#allocation9 + $0x20] sm:$0xff]
    %v78 = vld [vmem:[#allocation9 + $0x28] sm:$0xff]
    %v79 = vld [vmem:[#allocation9 + $0x30] sm:$0xff]
    %v80 = vld [vmem:[#allocation9 + $0x38] sm:$0xff]
    %v81 = vld [vmem:[#allocation9 + $0x40] sm:$0xff]
    %v82 = vld [vmem:[#allocation9 + $0x48] sm:$0xff]
    %v83 = vld [vmem:[#allocation9 + $0x50] sm:$0xff]
    %v84 = vld [vmem:[#allocation9 + $0x58] sm:$0xff]
    %vm85 = vcmask 785408
    %v87 = vsel %vm85, %v72, 0
    %89 = vmatpush.msra.mxu0 0.0
    %90 = vmatpush.msra.mxu0 0.0
    %91 = vmatpush.msra.mxu0 0.0
    %92 = vmatpush.msra.mxu0 0.0
    %v93 = vand.u32 %v84, 4294901760
    %94 = vmatpush.msra.mxu0 %v93
    %v95 = vand.u32 %v83, 4294901760
    %96 = vmatpush.msra.mxu0 %v95
    %v97 = vand.u32 %v82, 4294901760
    %98 = vmatpush.msra.mxu0 %v97
    %v99 = vand.u32 %v81, 4294901760
    %100 = vmatpush.msra.mxu0 %v99
    %v101 = vand.u32 %v80, 4294901760
    %102 = vmatpush.msra.mxu0 %v101
    %v103 = vand.u32 %v79, 4294901760
    %104 = vmatpush.msra.mxu0 %v103
    %v105 = vand.u32 %v78, 4294901760
    %106 = vmatpush.msra.mxu0 %v105
    %v107 = vand.u32 %v77, 4294901760
    %108 = vmatpush.msra.mxu0 %v107
    %v109 = vand.u32 %v76, 4294901760
    %110 = vmatpush.msra.mxu0 %v109
    %v111 = vand.u32 %v75, 4294901760
    %112 = vmatpush.msra.mxu0 %v111
    %v113 = vand.u32 %v74, 4294901760
    %114 = vmatpush.msra.mxu0 %v113
    %v115 = vand.u32 %v73, 4294901760
    %116 = vmatpush.msra.mxu0 %v115
    %v117 = vand.u32 %v87, 4294901760
    %v118 = vsub.f32 %v87, %v117
    %v119 = vand.u32 %v118, 4294901760
    %v120 = vsub.f32 %v118, %v119
    %v121 = vand.u32 %v120, 4294901760
    %122 = vmatmul.f32.gmra.mxu0 %v121
    %v123 = vpop.f32.mrf.mxu0
    %v124 = vadd.f32 0.0, %v123
    %125 = vdwg.mxu0
    %126 = vmatpush.msra.mxu0 0.0
    %127 = vmatpush.msra.mxu0 0.0
    %128 = vmatpush.msra.mxu0 0.0
    %129 = vmatpush.msra.mxu0 0.0
    %v130 = vand.u32 %v84, 4294901760
    %v131 = vsub.f32 %v84, %v130
    %v132 = vand.u32 %v131, 4294901760
    %v133 = vsub.f32 %v131, %v132
    %v134 = vand.u32 %v133, 4294901760
    %135 = vmatpush.msra.mxu0 %v134
    %v136 = vand.u32 %v83, 4294901760
    %v137 = vsub.f32 %v83, %v136
    %v138 = vand.u32 %v137, 4294901760
    %v139 = vsub.f32 %v137, %v138
    %v140 = vand.u32 %v139, 4294901760
    %141 = vmatpush.msra.mxu0 %v140
    %v142 = vand.u32 %v82, 4294901760
    %v143 = vsub.f32 %v82, %v142
    %v144 = vand.u32 %v143, 4294901760
    %v145 = vsub.f32 %v143, %v144
    %v146 = vand.u32 %v145, 4294901760
    %147 = vmatpush.msra.mxu0 %v146
    %v148 = vand.u32 %v81, 4294901760
    %v149 = vsub.f32 %v81, %v148
    %v150 = vand.u32 %v149, 4294901760
    %v151 = vsub.f32 %v149, %v150
    %v152 = vand.u32 %v151, 4294901760
    %153 = vmatpush.msra.mxu0 %v152
    %v154 = vand.u32 %v80, 4294901760
    %v155 = vsub.f32 %v80, %v154
    %v156 = vand.u32 %v155, 4294901760
    %v157 = vsub.f32 %v155, %v156
    %v158 = vand.u32 %v157, 4294901760
    %159 = vmatpush.msra.mxu0 %v158
    %v160 = vand.u32 %v79, 4294901760
    %v161 = vsub.f32 %v79, %v160
    %v162 = vand.u32 %v161, 4294901760
    %v163 = vsub.f32 %v161, %v162
    %v164 = vand.u32 %v163, 4294901760
    %165 = vmatpush.msra.mxu0 %v164
    %v166 = vand.u32 %v78, 4294901760
    %v167 = vsub.f32 %v78, %v166
    %v168 = vand.u32 %v167, 4294901760
    %v169 = vsub.f32 %v167, %v168
    %v170 = vand.u32 %v169, 4294901760
    %171 = vmatpush.msra.mxu0 %v170
    %v172 = vand.u32 %v77, 4294901760
    %v173 = vsub.f32 %v77, %v172
    %v174 = vand.u32 %v173, 4294901760
    %v175 = vsub.f32 %v173, %v174
    %v176 = vand.u32 %v175, 4294901760
    %177 = vmatpush.msra.mxu0 %v176
    %v178 = vand.u32 %v76, 4294901760
    %v179 = vsub.f32 %v76, %v178
    %v180 = vand.u32 %v179, 4294901760
    %v181 = vsub.f32 %v179, %v180
    %v182 = vand.u32 %v181, 4294901760
    %183 = vmatpush.msra.mxu0 %v182
    %v184 = vand.u32 %v75, 4294901760
    %v185 = vsub.f32 %v75, %v184
    %v186 = vand.u32 %v185, 4294901760
    %v187 = vsub.f32 %v185, %v186
    %v188 = vand.u32 %v187, 4294901760
    %189 = vmatpush.msra.mxu0 %v188
    %v190 = vand.u32 %v74, 4294901760
    %v191 = vsub.f32 %v74, %v190
    %v192 = vand.u32 %v191, 4294901760
    %v193 = vsub.f32 %v191, %v192
    %v194 = vand.u32 %v193, 4294901760
    %195 = vmatpush.msra.mxu0 %v194
    %v196 = vand.u32 %v73, 4294901760
    %v197 = vsub.f32 %v73, %v196
    %v198 = vand.u32 %v197, 4294901760
    %v199 = vsub.f32 %v197, %v198
    %v200 = vand.u32 %v199, 4294901760
    %201 = vmatpush.msra.mxu0 %v200
    %v202 = vand.u32 %v87, 4294901760
    %203 = vmatmul.f32.gmra.mxu0 %v202
    %v204 = vpop.f32.mrf.mxu0
    %v205 = vadd.f32 %v124, %v204
    %206 = vdwg.mxu0
    %207 = vmatpush.msra.mxu0 0.0
    %208 = vmatpush.msra.mxu0 0.0
    %209 = vmatpush.msra.mxu0 0.0
    %210 = vmatpush.msra.mxu0 0.0
    %v211 = vand.u32 %v84, 4294901760
    %v212 = vsub.f32 %v84, %v211
    %213 = vmatpush.msra.mxu0 %v212
    %v214 = vand.u32 %v83, 4294901760
    %v215 = vsub.f32 %v83, %v214
    %216 = vmatpush.msra.mxu0 %v215
    %v217 = vand.u32 %v82, 4294901760
    %v218 = vsub.f32 %v82, %v217
    %219 = vmatpush.msra.mxu0 %v218
    %v220 = vand.u32 %v81, 4294901760
    %v221 = vsub.f32 %v81, %v220
    %222 = vmatpush.msra.mxu0 %v221
    %v223 = vand.u32 %v80, 4294901760
    %v224 = vsub.f32 %v80, %v223
    %225 = vmatpush.msra.mxu0 %v224
    %v226 = vand.u32 %v79, 4294901760
    %v227 = vsub.f32 %v79, %v226
    %228 = vmatpush.msra.mxu0 %v227
    %v229 = vand.u32 %v78, 4294901760
    %v230 = vsub.f32 %v78, %v229
    %231 = vmatpush.msra.mxu0 %v230
    %v232 = vand.u32 %v77, 4294901760
    %v233 = vsub.f32 %v77, %v232
    %234 = vmatpush.msra.mxu0 %v233
    %v235 = vand.u32 %v76, 4294901760
    %v236 = vsub.f32 %v76, %v235
    %237 = vmatpush.msra.mxu0 %v236
    %v238 = vand.u32 %v75, 4294901760
    %v239 = vsub.f32 %v75, %v238
    %240 = vmatpush.msra.mxu0 %v239
    %v241 = vand.u32 %v74, 4294901760
    %v242 = vsub.f32 %v74, %v241
    %243 = vmatpush.msra.mxu0 %v242
    %v244 = vand.u32 %v73, 4294901760
    %v245 = vsub.f32 %v73, %v244
    %246 = vmatpush.msra.mxu0 %v245
    %v247 = vand.u32 %v87, 4294901760
    %v248 = vsub.f32 %v87, %v247
    %249 = vmatmul.f32.gmra.mxu0 %v248
    %v250 = vpop.f32.mrf.mxu0
    %v251 = vadd.f32 %v205, %v250
    %252 = vdwg.mxu0
    %253 = vmatpush.msra.mxu0 0.0
    %254 = vmatpush.msra.mxu0 0.0
    %255 = vmatpush.msra.mxu0 0.0
    %256 = vmatpush.msra.mxu0 0.0
    %v257 = vand.u32 %v84, 4294901760
    %258 = vmatpush.msra.mxu0 %v257
    %v259 = vand.u32 %v83, 4294901760
    %260 = vmatpush.msra.mxu0 %v259
    %v261 = vand.u32 %v82, 4294901760
    %262 = vmatpush.msra.mxu0 %v261
    %v263 = vand.u32 %v81, 4294901760
    %264 = vmatpush.msra.mxu0 %v263
    %v265 = vand.u32 %v80, 4294901760
    %266 = vmatpush.msra.mxu0 %v265
    %v267 = vand.u32 %v79, 4294901760
    %268 = vmatpush.msra.mxu0 %v267
    %v269 = vand.u32 %v78, 4294901760
    %270 = vmatpush.msra.mxu0 %v269
    %v271 = vand.u32 %v77, 4294901760
    %272 = vmatpush.msra.mxu0 %v271
    %v273 = vand.u32 %v76, 4294901760
    %274 = vmatpush.msra.mxu0 %v273
    %v275 = vand.u32 %v75, 4294901760
    %276 = vmatpush.msra.mxu0 %v275
    %v277 = vand.u32 %v74, 4294901760
    %278 = vmatpush.msra.mxu0 %v277
    %v279 = vand.u32 %v73, 4294901760
    %280 = vmatpush.msra.mxu0 %v279
    %v281 = vand.u32 %v87, 4294901760
    %v282 = vsub.f32 %v87, %v281
    %v283 = vand.u32 %v282, 4294901760
    %284 = vmatmul.f32.gmra.mxu0 %v283
    %v285 = vpop.f32.mrf.mxu0
    %v286 = vadd.f32 %v251, %v285
    %287 = vdwg.mxu0
    %288 = vmatpush.msra.mxu0 0.0
    %289 = vmatpush.msra.mxu0 0.0
    %290 = vmatpush.msra.mxu0 0.0
    %291 = vmatpush.msra.mxu0 0.0
    %v292 = vand.u32 %v84, 4294901760
    %v293 = vsub.f32 %v84, %v292
    %v294 = vand.u32 %v293, 4294901760
    %295 = vmatpush.msra.mxu0 %v294
    %v296 = vand.u32 %v83, 4294901760
    %v297 = vsub.f32 %v83, %v296
    %v298 = vand.u32 %v297, 4294901760
    %299 = vmatpush.msra.mxu0 %v298
    %v300 = vand.u32 %v82, 4294901760
    %v301 = vsub.f32 %v82, %v300
    %v302 = vand.u32 %v301, 4294901760
    %303 = vmatpush.msra.mxu0 %v302
    %v304 = vand.u32 %v81, 4294901760
    %v305 = vsub.f32 %v81, %v304
    %v306 = vand.u32 %v305, 4294901760
    %307 = vmatpush.msra.mxu0 %v306
    %v308 = vand.u32 %v80, 4294901760
    %v309 = vsub.f32 %v80, %v308
    %v310 = vand.u32 %v309, 4294901760
    %311 = vmatpush.msra.mxu0 %v310
    %v312 = vand.u32 %v79, 4294901760
    %v313 = vsub.f32 %v79, %v312
    %v314 = vand.u32 %v313, 4294901760
    %315 = vmatpush.msra.mxu0 %v314
    %v316 = vand.u32 %v78, 4294901760
    %v317 = vsub.f32 %v78, %v316
    %v318 = vand.u32 %v317, 4294901760
    %319 = vmatpush.msra.mxu0 %v318
    %v320 = vand.u32 %v77, 4294901760
    %v321 = vsub.f32 %v77, %v320
    %v322 = vand.u32 %v321, 4294901760
    %323 = vmatpush.msra.mxu0 %v322
    %v324 = vand.u32 %v76, 4294901760
    %v325 = vsub.f32 %v76, %v324
    %v326 = vand.u32 %v325, 4294901760
    %327 = vmatpush.msra.mxu0 %v326
    %v328 = vand.u32 %v75, 4294901760
    %v329 = vsub.f32 %v75, %v328
    %v330 = vand.u32 %v329, 4294901760
    %331 = vmatpush.msra.mxu0 %v330
    %v332 = vand.u32 %v74, 4294901760
    %v333 = vsub.f32 %v74, %v332
    %v334 = vand.u32 %v333, 4294901760
    %335 = vmatpush.msra.mxu0 %v334
    %v336 = vand.u32 %v73, 4294901760
    %v337 = vsub.f32 %v73, %v336
    %v338 = vand.u32 %v337, 4294901760
    %339 = vmatpush.msra.mxu0 %v338
    %v340 = vand.u32 %v87, 4294901760
    %341 = vmatmul.f32.gmra.mxu0 %v340
    %v342 = vpop.f32.mrf.mxu0
    %v343 = vadd.f32 %v286, %v342
    %344 = vdwg.mxu0
    %345 = vmatpush.msra.mxu0 0.0
    %346 = vmatpush.msra.mxu0 0.0
    %347 = vmatpush.msra.mxu0 0.0
    %348 = vmatpush.msra.mxu0 0.0
    %v349 = vand.u32 %v84, 4294901760
    %350 = vmatpush.msra.mxu0 %v349
    %v351 = vand.u32 %v83, 4294901760
    %352 = vmatpush.msra.mxu0 %v351
    %v353 = vand.u32 %v82, 4294901760
    %354 = vmatpush.msra.mxu0 %v353
    %v355 = vand.u32 %v81, 4294901760
    %356 = vmatpush.msra.mxu0 %v355
    %v357 = vand.u32 %v80, 4294901760
    %358 = vmatpush.msra.mxu0 %v357
    %v359 = vand.u32 %v79, 4294901760
    %360 = vmatpush.msra.mxu0 %v359
    %v361 = vand.u32 %v78, 4294901760
    %362 = vmatpush.msra.mxu0 %v361
    %v363 = vand.u32 %v77, 4294901760
    %364 = vmatpush.msra.mxu0 %v363
    %v365 = vand.u32 %v76, 4294901760
    %366 = vmatpush.msra.mxu0 %v365
    %v367 = vand.u32 %v75, 4294901760
    %368 = vmatpush.msra.mxu0 %v367
    %v369 = vand.u32 %v74, 4294901760
    %370 = vmatpush.msra.mxu0 %v369
    %v371 = vand.u32 %v73, 4294901760
    %372 = vmatpush.msra.mxu0 %v371
    %v373 = vand.u32 %v87, 4294901760
    %374 = vmatmul.f32.gmra.mxu0 %v373
    %v375 = vpop.f32.mrf.mxu0
    %v376 = vadd.f32 %v343, %v375
    %377 = vdwg.mxu0
    %v378 = vxor.u32 %v376, 2147483648
    %v379 = vmul.f32 %v378, 1.442695
    %v380 = vpow.pop %v379
    %v381 = vadd.f32 %v380, 1.0
    %v382 = vrcp.pop %v381
    %v383 = vmul.f32 %v381, %v382
    %v384 = vsub.f32 1.0, %v383
    %v385 = vmul.f32 %v382, %v384
    %v386 = vadd.f32 %v382, %v385
    %vm387 = vweird.f32 %v381
    %vm388 = vweird.f32 %v382
    %vm389 = vmor %vm387, %vm388
    %v390 = vsel %vm389, %v382, %v386
    %v391 = vand.u32 2147483647, %v381
    %vm392 = vcmp.eq.f32.partialorder %v391, 8.507059e+37
    %v393 = vand.u32 %v381, 2147483648
    %v394 = vor.u32 1.1754944e-38, %v393
    %v395 = vsel %vm392, %v394, %v390
    %v396 = vmul.f32 1.0, %v395
    %v397 = vtanh.pop %v376
    %v398 = vsub.f32 1.0, %v396
    %400 = vrot.lane.b32.xlu0 %v397, 64
    %v401 = vpop.permute.xlu0 %400
    %v403 = vmul.f32 %v398, %v401
    %v404 = vtanh.pop %v403
    %406 = vrot.lane.b32.xlu0 %v404, 32
    %v407 = vpop.permute.xlu0 %406
    %v409 = vmul.f32 %v396, %v407
    %411 = vrot.lane.b32.xlu0 %v409, 96
    %v412 = vpop.permute.xlu0 %411
    %415 = vrot.lane.b32.xlu0 %v403, 32
    %v416 = vpop.permute.xlu0 %415
    %vm418 = vcmask 261120
    %v419 = vsel %vm418, %v412, %v416
    %vm420 = vcmask 517120
    %421 = vst.msk [vmem:[#allocation10] sm:$0x3] %vm420, %v419
    %s422 = sshra.s32 %s71, 7
    %s423 = sand.u32 %s71, 127
    %s424 = sadd.s32 %s422, 1
    %s425 = smul.u32 %s424, 128
    %s426 = sshra.s32 %s71, 7
    %s427 = sand.u32 %s71, 127
    %s428 = sadd.s32 %s425, %s427
    %s429 = sld [smem:[#allocation3 + %s428]]
    %s430 = smul.u32 %s429, 2
    %s431 = scalar_lea.vmem [#allocation10], %s430
    %v432 = vld [vmem:[%s431] sm:$0x3]
    %s433 = sadd.s32 %s71, 1
    %s434 = sshra.s32 %s433, 7
    %s435 = sand.u32 %s433, 127
    %s436 = sadd.s32 %s434, 1
    %s437 = smul.u32 %s436, 128
    %s438 = sshra.s32 %s433, 7
    %s439 = sand.u32 %s433, 127
    %s440 = sadd.s32 %s437, %s439
    %s441 = sld [smem:[#allocation3 + %s440]]
    %s442 = smul.u32 %s441, 2
    %s443 = scalar_lea.vmem [#allocation10], %s442
    %v444 = vld [vmem:[%s443] sm:$0x3]
    %vm445 = vcmask 1040384
    %v446 = vsel %vm445, %v432, %v444
    %v447 = vld [vmem:[#allocation7] sm:$0xff]
    %v448 = vld [vmem:[#allocation7 + $0x8] sm:$0xff]
    %v449 = vld [vmem:[#allocation7 + $0x10] sm:$0xff]
    %v450 = vld [vmem:[#allocation7 + $0x18] sm:$0xff]
    %v452 = vsel %vm418, %v446, 0
    %454 = vmatpush.msra.mxu0 0.0
    %455 = vmatpush.msra.mxu0 0.0
    %456 = vmatpush.msra.mxu0 0.0
    %457 = vmatpush.msra.mxu0 0.0
    %458 = vmatpush.msra.mxu0 0.0
    %459 = vmatpush.msra.mxu0 0.0
    %460 = vmatpush.msra.mxu0 0.0
    %461 = vmatpush.msra.mxu0 0.0
    %462 = vmatpush.msra.mxu0 0.0
    %463 = vmatpush.msra.mxu0 0.0
    %464 = vmatpush.msra.mxu0 0.0
    %465 = vmatpush.msra.mxu0 0.0
    %v466 = vand.u32 %v450, 4294901760
    %467 = vmatpush.msra.mxu0 %v466
    %v468 = vand.u32 %v449, 4294901760
    %469 = vmatpush.msra.mxu0 %v468
    %v470 = vand.u32 %v448, 4294901760
    %471 = vmatpush.msra.mxu0 %v470
    %v472 = vand.u32 %v447, 4294901760
    %473 = vmatpush.msra.mxu0 %v472
    %v474 = vand.u32 %v452, 4294901760
    %v475 = vsub.f32 %v452, %v474
    %v476 = vand.u32 %v475, 4294901760
    %v477 = vsub.f32 %v475, %v476
    %v478 = vand.u32 %v477, 4294901760
    %479 = vmatmul.f32.gmra.mxu0 %v478
    %v480 = vpop.f32.mrf.mxu0
    %v481 = vadd.f32 0.0, %v480
    %482 = vdwg.mxu0
    %483 = vmatpush.msra.mxu0 0.0
    %484 = vmatpush.msra.mxu0 0.0
    %485 = vmatpush.msra.mxu0 0.0
    %486 = vmatpush.msra.mxu0 0.0
    %487 = vmatpush.msra.mxu0 0.0
    %488 = vmatpush.msra.mxu0 0.0
    %489 = vmatpush.msra.mxu0 0.0
    %490 = vmatpush.msra.mxu0 0.0
    %491 = vmatpush.msra.mxu0 0.0
    %492 = vmatpush.msra.mxu0 0.0
    %493 = vmatpush.msra.mxu0 0.0
    %494 = vmatpush.msra.mxu0 0.0
    %v495 = vand.u32 %v450, 4294901760
    %v496 = vsub.f32 %v450, %v495
    %v497 = vand.u32 %v496, 4294901760
    %v498 = vsub.f32 %v496, %v497
    %v499 = vand.u32 %v498, 4294901760
    %500 = vmatpush.msra.mxu0 %v499
    %v501 = vand.u32 %v449, 4294901760
    %v502 = vsub.f32 %v449, %v501
    %v503 = vand.u32 %v502, 4294901760
    %v504 = vsub.f32 %v502, %v503
    %v505 = vand.u32 %v504, 4294901760
    %506 = vmatpush.msra.mxu0 %v505
    %v507 = vand.u32 %v448, 4294901760
    %v508 = vsub.f32 %v448, %v507
    %v509 = vand.u32 %v508, 4294901760
    %v510 = vsub.f32 %v508, %v509
    %v511 = vand.u32 %v510, 4294901760
    %512 = vmatpush.msra.mxu0 %v511
    %v513 = vand.u32 %v447, 4294901760
    %v514 = vsub.f32 %v447, %v513
    %v515 = vand.u32 %v514, 4294901760
    %v516 = vsub.f32 %v514, %v515
    %v517 = vand.u32 %v516, 4294901760
    %518 = vmatpush.msra.mxu0 %v517
    %v519 = vand.u32 %v452, 4294901760
    %520 = vmatmul.f32.gmra.mxu0 %v519
    %v521 = vpop.f32.mrf.mxu0
    %v522 = vadd.f32 %v481, %v521
    %523 = vdwg.mxu0
    %524 = vmatpush.msra.mxu0 0.0
    %525 = vmatpush.msra.mxu0 0.0
    %526 = vmatpush.msra.mxu0 0.0
    %527 = vmatpush.msra.mxu0 0.0
    %528 = vmatpush.msra.mxu0 0.0
    %529 = vmatpush.msra.mxu0 0.0
    %530 = vmatpush.msra.mxu0 0.0
    %531 = vmatpush.msra.mxu0 0.0
    %532 = vmatpush.msra.mxu0 0.0
    %533 = vmatpush.msra.mxu0 0.0
    %534 = vmatpush.msra.mxu0 0.0
    %535 = vmatpush.msra.mxu0 0.0
    %v536 = vand.u32 %v450, 4294901760
    %v537 = vsub.f32 %v450, %v536
    %538 = vmatpush.msra.mxu0 %v537
    %v539 = vand.u32 %v449, 4294901760
    %v540 = vsub.f32 %v449, %v539
    %541 = vmatpush.msra.mxu0 %v540
    %v542 = vand.u32 %v448, 4294901760
    %v543 = vsub.f32 %v448, %v542
    %544 = vmatpush.msra.mxu0 %v543
    %v545 = vand.u32 %v447, 4294901760
    %v546 = vsub.f32 %v447, %v545
    %547 = vmatpush.msra.mxu0 %v546
    %v548 = vand.u32 %v452, 4294901760
    %v549 = vsub.f32 %v452, %v548
    %550 = vmatmul.f32.gmra.mxu0 %v549
    %v551 = vpop.f32.mrf.mxu0
    %v552 = vadd.f32 %v522, %v551
    %553 = vdwg.mxu0
    %554 = vmatpush.msra.mxu0 0.0
    %555 = vmatpush.msra.mxu0 0.0
    %556 = vmatpush.msra.mxu0 0.0
    %557 = vmatpush.msra.mxu0 0.0
    %558 = vmatpush.msra.mxu0 0.0
    %559 = vmatpush.msra.mxu0 0.0
    %560 = vmatpush.msra.mxu0 0.0
    %561 = vmatpush.msra.mxu0 0.0
    %562 = vmatpush.msra.mxu0 0.0
    %563 = vmatpush.msra.mxu0 0.0
    %564 = vmatpush.msra.mxu0 0.0
    %565 = vmatpush.msra.mxu0 0.0
    %v566 = vand.u32 %v450, 4294901760
    %567 = vmatpush.msra.mxu0 %v566
    %v568 = vand.u32 %v449, 4294901760
    %569 = vmatpush.msra.mxu0 %v568
    %v570 = vand.u32 %v448, 4294901760
    %571 = vmatpush.msra.mxu0 %v570
    %v572 = vand.u32 %v447, 4294901760
    %573 = vmatpush.msra.mxu0 %v572
    %v574 = vand.u32 %v452, 4294901760
    %v575 = vsub.f32 %v452, %v574
    %v576 = vand.u32 %v575, 4294901760
    %577 = vmatmul.f32.gmra.mxu0 %v576
    %v578 = vpop.f32.mrf.mxu0
    %v579 = vadd.f32 %v552, %v578
    %580 = vdwg.mxu0
    %581 = vmatpush.msra.mxu0 0.0
    %582 = vmatpush.msra.mxu0 0.0
    %583 = vmatpush.msra.mxu0 0.0
    %584 = vmatpush.msra.mxu0 0.0
    %585 = vmatpush.msra.mxu0 0.0
    %586 = vmatpush.msra.mxu0 0.0
    %587 = vmatpush.msra.mxu0 0.0
    %588 = vmatpush.msra.mxu0 0.0
    %589 = vmatpush.msra.mxu0 0.0
    %590 = vmatpush.msra.mxu0 0.0
    %591 = vmatpush.msra.mxu0 0.0
    %592 = vmatpush.msra.mxu0 0.0
    %v593 = vand.u32 %v450, 4294901760
    %v594 = vsub.f32 %v450, %v593
    %v595 = vand.u32 %v594, 4294901760
    %596 = vmatpush.msra.mxu0 %v595
    %v597 = vand.u32 %v449, 4294901760
    %v598 = vsub.f32 %v449, %v597
    %v599 = vand.u32 %v598, 4294901760
    %600 = vmatpush.msra.mxu0 %v599
    %v601 = vand.u32 %v448, 4294901760
    %v602 = vsub.f32 %v448, %v601
    %v603 = vand.u32 %v602, 4294901760
    %604 = vmatpush.msra.mxu0 %v603
    %v605 = vand.u32 %v447, 4294901760
    %v606 = vsub.f32 %v447, %v605
    %v607 = vand.u32 %v606, 4294901760
    %608 = vmatpush.msra.mxu0 %v607
    %v609 = vand.u32 %v452, 4294901760
    %610 = vmatmul.f32.gmra.mxu0 %v609
    %v611 = vpop.f32.mrf.mxu0
    %v612 = vadd.f32 %v579, %v611
    %613 = vdwg.mxu0
    %614 = vmatpush.msra.mxu0 0.0
    %615 = vmatpush.msra.mxu0 0.0
    %616 = vmatpush.msra.mxu0 0.0
    %617 = vmatpush.msra.mxu0 0.0
    %618 = vmatpush.msra.mxu0 0.0
    %619 = vmatpush.msra.mxu0 0.0
    %620 = vmatpush.msra.mxu0 0.0
    %621 = vmatpush.msra.mxu0 0.0
    %622 = vmatpush.msra.mxu0 0.0
    %623 = vmatpush.msra.mxu0 0.0
    %624 = vmatpush.msra.mxu0 0.0
    %625 = vmatpush.msra.mxu0 0.0
    %v626 = vand.u32 %v450, 4294901760
    %627 = vmatpush.msra.mxu0 %v626
    %v628 = vand.u32 %v449, 4294901760
    %629 = vmatpush.msra.mxu0 %v628
    %v630 = vand.u32 %v448, 4294901760
    %631 = vmatpush.msra.mxu0 %v630
    %v632 = vand.u32 %v447, 4294901760
    %633 = vmatpush.msra.mxu0 %v632
    %v634 = vand.u32 %v452, 4294901760
    %635 = vmatmul.f32.gmra.mxu0 %v634
    %v636 = vpop.f32.mrf.mxu0
    %v637 = vadd.f32 %v612, %v636
    %638 = vdwg.mxu0
    %s639 = scalar_lea.vmem [#allocation4], 2
    %v640 = vld [vmem:[%s639] sm:$0x3]
    %v641 = vmul.f32 %v640, %v637
    %v642 = vld [vmem:[#allocation9] sm:$0xff]
    %v643 = vld [vmem:[#allocation9 + $0x8] sm:$0xff]
    %v644 = vld [vmem:[#allocation9 + $0x10] sm:$0xff]
    %v645 = vld [vmem:[#allocation9 + $0x18] sm:$0xff]
    %v646 = vld [vmem:[#allocation9 + $0x20] sm:$0xff]
    %v647 = vld [vmem:[#allocation9 + $0x28] sm:$0xff]
    %v648 = vld [vmem:[#allocation9 + $0x30] sm:$0xff]
    %v649 = vld [vmem:[#allocation9 + $0x38] sm:$0xff]
    %v650 = vld [vmem:[#allocation9 + $0x40] sm:$0xff]
    %v651 = vld [vmem:[#allocation9 + $0x48] sm:$0xff]
    %v652 = vld [vmem:[#allocation9 + $0x50] sm:$0xff]
    %v653 = vld [vmem:[#allocation9 + $0x58] sm:$0xff]
    %v655 = vsel %vm85, %v641, 0
    %657 = vmatpush.msra.mxu0 0.0
    %658 = vmatpush.msra.mxu0 0.0
    %659 = vmatpush.msra.mxu0 0.0
    %660 = vmatpush.msra.mxu0 0.0
    %v661 = vand.u32 %v653, 4294901760
    %662 = vmatpush.msra.mxu0 %v661
    %v663 = vand.u32 %v652, 4294901760
    %664 = vmatpush.msra.mxu0 %v663
    %v665 = vand.u32 %v651, 4294901760
    %666 = vmatpush.msra.mxu0 %v665
    %v667 = vand.u32 %v650, 4294901760
    %668 = vmatpush.msra.mxu0 %v667
    %v669 = vand.u32 %v649, 4294901760
    %670 = vmatpush.msra.mxu0 %v669
    %v671 = vand.u32 %v648, 4294901760
    %672 = vmatpush.msra.mxu0 %v671
    %v673 = vand.u32 %v647, 4294901760
    %674 = vmatpush.msra.mxu0 %v673
    %v675 = vand.u32 %v646, 4294901760
    %676 = vmatpush.msra.mxu0 %v675
    %v677 = vand.u32 %v645, 4294901760
    %678 = vmatpush.msra.mxu0 %v677
    %v679 = vand.u32 %v644, 4294901760
    %680 = vmatpush.msra.mxu0 %v679
    %v681 = vand.u32 %v643, 4294901760
    %682 = vmatpush.msra.mxu0 %v681
    %v683 = vand.u32 %v642, 4294901760
    %684 = vmatpush.msra.mxu0 %v683
    %v685 = vand.u32 %v655, 4294901760
    %v686 = vsub.f32 %v655, %v685
    %v687 = vand.u32 %v686, 4294901760
    %v688 = vsub.f32 %v686, %v687
    %v689 = vand.u32 %v688, 4294901760
    %690 = vmatmul.f32.gmra.mxu0 %v689
    %v691 = vpop.f32.mrf.mxu0
    %v692 = vadd.f32 0.0, %v691
    %693 = vdwg.mxu0
    %694 = vmatpush.msra.mxu0 0.0
    %695 = vmatpush.msra.mxu0 0.0
    %696 = vmatpush.msra.mxu0 0.0
    %697 = vmatpush.msra.mxu0 0.0
    %v698 = vand.u32 %v653, 4294901760
    %v699 = vsub.f32 %v653, %v698
    %v700 = vand.u32 %v699, 4294901760
    %v701 = vsub.f32 %v699, %v700
    %v702 = vand.u32 %v701, 4294901760
    %703 = vmatpush.msra.mxu0 %v702
    %v704 = vand.u32 %v652, 4294901760
    %v705 = vsub.f32 %v652, %v704
    %v706 = vand.u32 %v705, 4294901760
    %v707 = vsub.f32 %v705, %v706
    %v708 = vand.u32 %v707, 4294901760
    %709 = vmatpush.msra.mxu0 %v708
    %v710 = vand.u32 %v651, 4294901760
    %v711 = vsub.f32 %v651, %v710
    %v712 = vand.u32 %v711, 4294901760
    %v713 = vsub.f32 %v711, %v712
    %v714 = vand.u32 %v713, 4294901760
    %715 = vmatpush.msra.mxu0 %v714
    %v716 = vand.u32 %v650, 4294901760
    %v717 = vsub.f32 %v650, %v716
    %v718 = vand.u32 %v717, 4294901760
    %v719 = vsub.f32 %v717, %v718
    %v720 = vand.u32 %v719, 4294901760
    %721 = vmatpush.msra.mxu0 %v720
    %v722 = vand.u32 %v649, 4294901760
    %v723 = vsub.f32 %v649, %v722
    %v724 = vand.u32 %v723, 4294901760
    %v725 = vsub.f32 %v723, %v724
    %v726 = vand.u32 %v725, 4294901760
    %727 = vmatpush.msra.mxu0 %v726
    %v728 = vand.u32 %v648, 4294901760
    %v729 = vsub.f32 %v648, %v728
    %v730 = vand.u32 %v729, 4294901760
    %v731 = vsub.f32 %v729, %v730
    %v732 = vand.u32 %v731, 4294901760
    %733 = vmatpush.msra.mxu0 %v732
    %v734 = vand.u32 %v647, 4294901760
    %v735 = vsub.f32 %v647, %v734
    %v736 = vand.u32 %v735, 4294901760
    %v737 = vsub.f32 %v735, %v736
    %v738 = vand.u32 %v737, 4294901760
    %739 = vmatpush.msra.mxu0 %v738
    %v740 = vand.u32 %v646, 4294901760
    %v741 = vsub.f32 %v646, %v740
    %v742 = vand.u32 %v741, 4294901760
    %v743 = vsub.f32 %v741, %v742
    %v744 = vand.u32 %v743, 4294901760
    %745 = vmatpush.msra.mxu0 %v744
    %v746 = vand.u32 %v645, 4294901760
    %v747 = vsub.f32 %v645, %v746
    %v748 = vand.u32 %v747, 4294901760
    %v749 = vsub.f32 %v747, %v748
    %v750 = vand.u32 %v749, 4294901760
    %751 = vmatpush.msra.mxu0 %v750
    %v752 = vand.u32 %v644, 4294901760
    %v753 = vsub.f32 %v644, %v752
    %v754 = vand.u32 %v753, 4294901760
    %v755 = vsub.f32 %v753, %v754
    %v756 = vand.u32 %v755, 4294901760
    %757 = vmatpush.msra.mxu0 %v756
    %v758 = vand.u32 %v643, 4294901760
    %v759 = vsub.f32 %v643, %v758
    %v760 = vand.u32 %v759, 4294901760
    %v761 = vsub.f32 %v759, %v760
    %v762 = vand.u32 %v761, 4294901760
    %763 = vmatpush.msra.mxu0 %v762
    %v764 = vand.u32 %v642, 4294901760
    %v765 = vsub.f32 %v642, %v764
    %v766 = vand.u32 %v765, 4294901760
    %v767 = vsub.f32 %v765, %v766
    %v768 = vand.u32 %v767, 4294901760
    %769 = vmatpush.msra.mxu0 %v768
    %v770 = vand.u32 %v655, 4294901760
    %771 = vmatmul.f32.gmra.mxu0 %v770
    %v772 = vpop.f32.mrf.mxu0
    %v773 = vadd.f32 %v692, %v772
    %774 = vdwg.mxu0
    %775 = vmatpush.msra.mxu0 0.0
    %776 = vmatpush.msra.mxu0 0.0
    %777 = vmatpush.msra.mxu0 0.0
    %778 = vmatpush.msra.mxu0 0.0
    %v779 = vand.u32 %v653, 4294901760
    %v780 = vsub.f32 %v653, %v779
    %781 = vmatpush.msra.mxu0 %v780
    %v782 = vand.u32 %v652, 4294901760
    %v783 = vsub.f32 %v652, %v782
    %784 = vmatpush.msra.mxu0 %v783
    %v785 = vand.u32 %v651, 4294901760
    %v786 = vsub.f32 %v651, %v785
    %787 = vmatpush.msra.mxu0 %v786
    %v788 = vand.u32 %v650, 4294901760
    %v789 = vsub.f32 %v650, %v788
    %790 = vmatpush.msra.mxu0 %v789
    %v791 = vand.u32 %v649, 4294901760
    %v792 = vsub.f32 %v649, %v791
    %793 = vmatpush.msra.mxu0 %v792
    %v794 = vand.u32 %v648, 4294901760
    %v795 = vsub.f32 %v648, %v794
    %796 = vmatpush.msra.mxu0 %v795
    %v797 = vand.u32 %v647, 4294901760
    %v798 = vsub.f32 %v647, %v797
    %799 = vmatpush.msra.mxu0 %v798
    %v800 = vand.u32 %v646, 4294901760
    %v801 = vsub.f32 %v646, %v800
    %802 = vmatpush.msra.mxu0 %v801
    %v803 = vand.u32 %v645, 4294901760
    %v804 = vsub.f32 %v645, %v803
    %805 = vmatpush.msra.mxu0 %v804
    %v806 = vand.u32 %v644, 4294901760
    %v807 = vsub.f32 %v644, %v806
    %808 = vmatpush.msra.mxu0 %v807
    %v809 = vand.u32 %v643, 4294901760
    %v810 = vsub.f32 %v643, %v809
    %811 = vmatpush.msra.mxu0 %v810
    %v812 = vand.u32 %v642, 4294901760
    %v813 = vsub.f32 %v642, %v812
    %814 = vmatpush.msra.mxu0 %v813
    %v815 = vand.u32 %v655, 4294901760
    %v816 = vsub.f32 %v655, %v815
    %817 = vmatmul.f32.gmra.mxu0 %v816
    %v818 = vpop.f32.mrf.mxu0
    %v819 = vadd.f32 %v773, %v818
    %820 = vdwg.mxu0
    %821 = vmatpush.msra.mxu0 0.0
    %822 = vmatpush.msra.mxu0 0.0
    %823 = vmatpush.msra.mxu0 0.0
    %824 = vmatpush.msra.mxu0 0.0
    %v825 = vand.u32 %v653, 4294901760
    %826 = vmatpush.msra.mxu0 %v825
    %v827 = vand.u32 %v652, 4294901760
    %828 = vmatpush.msra.mxu0 %v827
    %v829 = vand.u32 %v651, 4294901760
    %830 = vmatpush.msra.mxu0 %v829
    %v831 = vand.u32 %v650, 4294901760
    %832 = vmatpush.msra.mxu0 %v831
    %v833 = vand.u32 %v649, 4294901760
    %834 = vmatpush.msra.mxu0 %v833
    %v835 = vand.u32 %v648, 4294901760
    %836 = vmatpush.msra.mxu0 %v835
    %v837 = vand.u32 %v647, 4294901760
    %838 = vmatpush.msra.mxu0 %v837
    %v839 = vand.u32 %v646, 4294901760
    %840 = vmatpush.msra.mxu0 %v839
    %v841 = vand.u32 %v645, 4294901760
    %842 = vmatpush.msra.mxu0 %v841
    %v843 = vand.u32 %v644, 4294901760
    %844 = vmatpush.msra.mxu0 %v843
    %v845 = vand.u32 %v643, 4294901760
    %846 = vmatpush.msra.mxu0 %v845
    %v847 = vand.u32 %v642, 4294901760
    %848 = vmatpush.msra.mxu0 %v847
    %v849 = vand.u32 %v655, 4294901760
    %v850 = vsub.f32 %v655, %v849
    %v851 = vand.u32 %v850, 4294901760
    %852 = vmatmul.f32.gmra.mxu0 %v851
    %v853 = vpop.f32.mrf.mxu0
    %v854 = vadd.f32 %v819, %v853
    %855 = vdwg.mxu0
    %856 = vmatpush.msra.mxu0 0.0
    %857 = vmatpush.msra.mxu0 0.0
    %858 = vmatpush.msra.mxu0 0.0
    %859 = vmatpush.msra.mxu0 0.0
    %v860 = vand.u32 %v653, 4294901760
    %v861 = vsub.f32 %v653, %v860
    %v862 = vand.u32 %v861, 4294901760
    %863 = vmatpush.msra.mxu0 %v862
    %v864 = vand.u32 %v652, 4294901760
    %v865 = vsub.f32 %v652, %v864
    %v866 = vand.u32 %v865, 4294901760
    %867 = vmatpush.msra.mxu0 %v866
    %v868 = vand.u32 %v651, 4294901760
    %v869 = vsub.f32 %v651, %v868
    %v870 = vand.u32 %v869, 4294901760
    %871 = vmatpush.msra.mxu0 %v870
    %v872 = vand.u32 %v650, 4294901760
    %v873 = vsub.f32 %v650, %v872
    %v874 = vand.u32 %v873, 4294901760
    %875 = vmatpush.msra.mxu0 %v874
    %v876 = vand.u32 %v649, 4294901760
    %v877 = vsub.f32 %v649, %v876
    %v878 = vand.u32 %v877, 4294901760
    %879 = vmatpush.msra.mxu0 %v878
    %v880 = vand.u32 %v648, 4294901760
    %v881 = vsub.f32 %v648, %v880
    %v882 = vand.u32 %v881, 4294901760
    %883 = vmatpush.msra.mxu0 %v882
    %v884 = vand.u32 %v647, 4294901760
    %v885 = vsub.f32 %v647, %v884
    %v886 = vand.u32 %v885, 4294901760
    %887 = vmatpush.msra.mxu0 %v886
    %v888 = vand.u32 %v646, 4294901760
    %v889 = vsub.f32 %v646, %v888
    %v890 = vand.u32 %v889, 4294901760
    %891 = vmatpush.msra.mxu0 %v890
    %v892 = vand.u32 %v645, 4294901760
    %v893 = vsub.f32 %v645, %v892
    %v894 = vand.u32 %v893, 4294901760
    %895 = vmatpush.msra.mxu0 %v894
    %v896 = vand.u32 %v644, 4294901760
    %v897 = vsub.f32 %v644, %v896
    %v898 = vand.u32 %v897, 4294901760
    %899 = vmatpush.msra.mxu0 %v898
    %v900 = vand.u32 %v643, 4294901760
    %v901 = vsub.f32 %v643, %v900
    %v902 = vand.u32 %v901, 4294901760
    %903 = vmatpush.msra.mxu0 %v902
    %v904 = vand.u32 %v642, 4294901760
    %v905 = vsub.f32 %v642, %v904
    %v906 = vand.u32 %v905, 4294901760
    %907 = vmatpush.msra.mxu0 %v906
    %v908 = vand.u32 %v655, 4294901760
    %909 = vmatmul.f32.gmra.mxu0 %v908
    %v910 = vpop.f32.mrf.mxu0
    %v911 = vadd.f32 %v854, %v910
    %912 = vdwg.mxu0
    %913 = vmatpush.msra.mxu0 0.0
    %914 = vmatpush.msra.mxu0 0.0
    %915 = vmatpush.msra.mxu0 0.0
    %916 = vmatpush.msra.mxu0 0.0
    %v917 = vand.u32 %v653, 4294901760
    %918 = vmatpush.msra.mxu0 %v917
    %v919 = vand.u32 %v652, 4294901760
    %920 = vmatpush.msra.mxu0 %v919
    %v921 = vand.u32 %v651, 4294901760
    %922 = vmatpush.msra.mxu0 %v921
    %v923 = vand.u32 %v650, 4294901760
    %924 = vmatpush.msra.mxu0 %v923
    %v925 = vand.u32 %v649, 4294901760
    %926 = vmatpush.msra.mxu0 %v925
    %v927 = vand.u32 %v648, 4294901760
    %928 = vmatpush.msra.mxu0 %v927
    %v929 = vand.u32 %v647, 4294901760
    %930 = vmatpush.msra.mxu0 %v929
    %v931 = vand.u32 %v646, 4294901760
    %932 = vmatpush.msra.mxu0 %v931
    %v933 = vand.u32 %v645, 4294901760
    %934 = vmatpush.msra.mxu0 %v933
    %v935 = vand.u32 %v644, 4294901760
    %936 = vmatpush.msra.mxu0 %v935
    %v937 = vand.u32 %v643, 4294901760
    %938 = vmatpush.msra.mxu0 %v937
    %v939 = vand.u32 %v642, 4294901760
    %940 = vmatpush.msra.mxu0 %v939
    %v941 = vand.u32 %v655, 4294901760
    %942 = vmatmul.f32.gmra.mxu0 %v941
    %v943 = vpop.f32.mrf.mxu0
    %v944 = vadd.f32 %v911, %v943
    %945 = vdwg.mxu0
    %v946 = vxor.u32 %v944, 2147483648
    %v947 = vmul.f32 %v946, 1.442695
    %v948 = vpow.pop %v947
    %v949 = vadd.f32 %v948, 1.0
    %v950 = vrcp.pop %v949
    %v951 = vmul.f32 %v949, %v950
    %v952 = vsub.f32 1.0, %v951
    %v953 = vmul.f32 %v950, %v952
    %v954 = vadd.f32 %v950, %v953
    %vm955 = vweird.f32 %v949
    %vm956 = vweird.f32 %v950
    %vm957 = vmor %vm955, %vm956
    %v958 = vsel %vm957, %v950, %v954
    %v959 = vand.u32 2147483647, %v949
    %vm960 = vcmp.eq.f32.partialorder %v959, 8.507059e+37
    %v961 = vand.u32 %v949, 2147483648
    %v962 = vor.u32 1.1754944e-38, %v961
    %v963 = vsel %vm960, %v962, %v958
    %v964 = vmul.f32 1.0, %v963
    %v965 = vtanh.pop %v944
    %967 = vrot.lane.b32.xlu0 %v964, 32
    %v968 = vpop.permute.xlu0 %967
    %v970 = vmul.f32 %v446, %v968
    %v971 = vsub.f32 1.0, %v964
    %973 = vrot.lane.b32.xlu0 %v965, 64
    %v974 = vpop.permute.xlu0 %973
    %v976 = vmul.f32 %v971, %v974
    %978 = vrot.lane.b32.xlu0 %v976, 32
    %v979 = vpop.permute.xlu0 %978
    %v981 = vadd.f32 %v970, %v979
    %v982 = vtanh.pop %v981
    %v983 = vmul.f32 %v964, %v982
    %985 = vrot.lane.b32.xlu0 %v983, 96
    %v986 = vpop.permute.xlu0 %985
    %v988 = vsel %vm418, %v986, %v981
    %s989 = scalar_lea.vmem [#allocation10], 2
    %990 = vst.msk [vmem:[%s989] sm:$0x3] %vm420, %v988
    %s991 = sadd.s32 %s422, 2
    %s992 = smul.u32 %s991, 128
    %s993 = sadd.s32 %s992, %s427
    %s994 = sld [smem:[#allocation3 + %s993]]
    %s995 = smul.u32 %s994, 2
    %s996 = scalar_lea.vmem [#allocation10], %s995
    %v997 = vld [vmem:[%s996] sm:$0x3]
    %s998 = sadd.s32 %s434, 2
    %s999 = smul.u32 %s998, 128
    %s1000 = sadd.s32 %s999, %s439
    %s1001 = sld [smem:[#allocation3 + %s1000]]
    %s1002 = smul.u32 %s1001, 2
    %s1003 = scalar_lea.vmem [#allocation10], %s1002
    %v1004 = vld [vmem:[%s1003] sm:$0x3]
    %v1005 = vsel %vm445, %v997, %v1004
    %v1006 = vld [vmem:[#allocation7] sm:$0xff]
    %v1007 = vld [vmem:[#allocation7 + $0x8] sm:$0xff]
    %v1008 = vld [vmem:[#allocation7 + $0x10] sm:$0xff]
    %v1009 = vld [vmem:[#allocation7 + $0x18] sm:$0xff]
    %v1011 = vsel %vm418, %v1005, 0
    %1013 = vmatpush.msra.mxu0 0.0
    %1014 = vmatpush.msra.mxu0 0.0
    %1015 = vmatpush.msra.mxu0 0.0
    %1016 = vmatpush.msra.mxu0 0.0
    %1017 = vmatpush.msra.mxu0 0.0
    %1018 = vmatpush.msra.mxu0 0.0
    %1019 = vmatpush.msra.mxu0 0.0
    %1020 = vmatpush.msra.mxu0 0.0
    %1021 = vmatpush.msra.mxu0 0.0
    %1022 = vmatpush.msra.mxu0 0.0
    %1023 = vmatpush.msra.mxu0 0.0
    %1024 = vmatpush.msra.mxu0 0.0
    %v1025 = vand.u32 %v1009, 4294901760
    %1026 = vmatpush.msra.mxu0 %v1025
    %v1027 = vand.u32 %v1008, 4294901760
    %1028 = vmatpush.msra.mxu0 %v1027
    %v1029 = vand.u32 %v1007, 4294901760
    %1030 = vmatpush.msra.mxu0 %v1029
    %v1031 = vand.u32 %v1006, 4294901760
    %1032 = vmatpush.msra.mxu0 %v1031
    %v1033 = vand.u32 %v1011, 4294901760
    %v1034 = vsub.f32 %v1011, %v1033
    %v1035 = vand.u32 %v1034, 4294901760
    %v1036 = vsub.f32 %v1034, %v1035
    %v1037 = vand.u32 %v1036, 4294901760
    %1038 = vmatmul.f32.gmra.mxu0 %v1037
    %v1039 = vpop.f32.mrf.mxu0
    %v1040 = vadd.f32 0.0, %v1039
    %1041 = vdwg.mxu0
    %1042 = vmatpush.msra.mxu0 0.0
    %1043 = vmatpush.msra.mxu0 0.0
    %1044 = vmatpush.msra.mxu0 0.0
    %1045 = vmatpush.msra.mxu0 0.0
    %1046 = vmatpush.msra.mxu0 0.0
    %1047 = vmatpush.msra.mxu0 0.0
    %1048 = vmatpush.msra.mxu0 0.0
    %1049 = vmatpush.msra.mxu0 0.0
    %1050 = vmatpush.msra.mxu0 0.0
    %1051 = vmatpush.msra.mxu0 0.0
    %1052 = vmatpush.msra.mxu0 0.0
    %1053 = vmatpush.msra.mxu0 0.0
    %v1054 = vand.u32 %v1009, 4294901760
    %v1055 = vsub.f32 %v1009, %v1054
    %v1056 = vand.u32 %v1055, 4294901760
    %v1057 = vsub.f32 %v1055, %v1056
    %v1058 = vand.u32 %v1057, 4294901760
    %1059 = vmatpush.msra.mxu0 %v1058
    %v1060 = vand.u32 %v1008, 4294901760
    %v1061 = vsub.f32 %v1008, %v1060
    %v1062 = vand.u32 %v1061, 4294901760
    %v1063 = vsub.f32 %v1061, %v1062
    %v1064 = vand.u32 %v1063, 4294901760
    %1065 = vmatpush.msra.mxu0 %v1064
    %v1066 = vand.u32 %v1007, 4294901760
    %v1067 = vsub.f32 %v1007, %v1066
    %v1068 = vand.u32 %v1067, 4294901760
    %v1069 = vsub.f32 %v1067, %v1068
    %v1070 = vand.u32 %v1069, 4294901760
    %1071 = vmatpush.msra.mxu0 %v1070
    %v1072 = vand.u32 %v1006, 4294901760
    %v1073 = vsub.f32 %v1006, %v1072
    %v1074 = vand.u32 %v1073, 4294901760
    %v1075 = vsub.f32 %v1073, %v1074
    %v1076 = vand.u32 %v1075, 4294901760
    %1077 = vmatpush.msra.mxu0 %v1076
    %v1078 = vand.u32 %v1011, 4294901760
    %1079 = vmatmul.f32.gmra.mxu0 %v1078
    %v1080 = vpop.f32.mrf.mxu0
    %v1081 = vadd.f32 %v1040, %v1080
    %1082 = vdwg.mxu0
    %1083 = vmatpush.msra.mxu0 0.0
    %1084 = vmatpush.msra.mxu0 0.0
    %1085 = vmatpush.msra.mxu0 0.0
    %1086 = vmatpush.msra.mxu0 0.0
    %1087 = vmatpush.msra.mxu0 0.0
    %1088 = vmatpush.msra.mxu0 0.0
    %1089 = vmatpush.msra.mxu0 0.0
    %1090 = vmatpush.msra.mxu0 0.0
    %1091 = vmatpush.msra.mxu0 0.0
    %1092 = vmatpush.msra.mxu0 0.0
    %1093 = vmatpush.msra.mxu0 0.0
    %1094 = vmatpush.msra.mxu0 0.0
    %v1095 = vand.u32 %v1009, 4294901760
    %v1096 = vsub.f32 %v1009, %v1095
    %1097 = vmatpush.msra.mxu0 %v1096
    %v1098 = vand.u32 %v1008, 4294901760
    %v1099 = vsub.f32 %v1008, %v1098
    %1100 = vmatpush.msra.mxu0 %v1099
    %v1101 = vand.u32 %v1007, 4294901760
    %v1102 = vsub.f32 %v1007, %v1101
    %1103 = vmatpush.msra.mxu0 %v1102
    %v1104 = vand.u32 %v1006, 4294901760
    %v1105 = vsub.f32 %v1006, %v1104
    %1106 = vmatpush.msra.mxu0 %v1105
    %v1107 = vand.u32 %v1011, 4294901760
    %v1108 = vsub.f32 %v1011, %v1107
    %1109 = vmatmul.f32.gmra.mxu0 %v1108
    %v1110 = vpop.f32.mrf.mxu0
    %v1111 = vadd.f32 %v1081, %v1110
    %1112 = vdwg.mxu0
    %1113 = vmatpush.msra.mxu0 0.0
    %1114 = vmatpush.msra.mxu0 0.0
    %1115 = vmatpush.msra.mxu0 0.0
    %1116 = vmatpush.msra.mxu0 0.0
    %1117 = vmatpush.msra.mxu0 0.0
    %1118 = vmatpush.msra.mxu0 0.0
    %1119 = vmatpush.msra.mxu0 0.0
    %1120 = vmatpush.msra.mxu0 0.0
    %1121 = vmatpush.msra.mxu0 0.0
    %1122 = vmatpush.msra.mxu0 0.0
    %1123 = vmatpush.msra.mxu0 0.0
    %1124 = vmatpush.msra.mxu0 0.0
    %v1125 = vand.u32 %v1009, 4294901760
    %1126 = vmatpush.msra.mxu0 %v1125
    %v1127 = vand.u32 %v1008, 4294901760
    %1128 = vmatpush.msra.mxu0 %v1127
    %v1129 = vand.u32 %v1007, 4294901760
    %1130 = vmatpush.msra.mxu0 %v1129
    %v1131 = vand.u32 %v1006, 4294901760
    %1132 = vmatpush.msra.mxu0 %v1131
    %v1133 = vand.u32 %v1011, 4294901760
    %v1134 = vsub.f32 %v1011, %v1133
    %v1135 = vand.u32 %v1134, 4294901760
    %1136 = vmatmul.f32.gmra.mxu0 %v1135
    %v1137 = vpop.f32.mrf.mxu0
    %v1138 = vadd.f32 %v1111, %v1137
    %1139 = vdwg.mxu0
    %1140 = vmatpush.msra.mxu0 0.0
    %1141 = vmatpush.msra.mxu0 0.0
    %1142 = vmatpush.msra.mxu0 0.0
    %1143 = vmatpush.msra.mxu0 0.0
    %1144 = vmatpush.msra.mxu0 0.0
    %1145 = vmatpush.msra.mxu0 0.0
    %1146 = vmatpush.msra.mxu0 0.0
    %1147 = vmatpush.msra.mxu0 0.0
    %1148 = vmatpush.msra.mxu0 0.0
    %1149 = vmatpush.msra.mxu0 0.0
    %1150 = vmatpush.msra.mxu0 0.0
    %1151 = vmatpush.msra.mxu0 0.0
    %v1152 = vand.u32 %v1009, 4294901760
    %v1153 = vsub.f32 %v1009, %v1152
    %v1154 = vand.u32 %v1153, 4294901760
    %1155 = vmatpush.msra.mxu0 %v1154
    %v1156 = vand.u32 %v1008, 4294901760
    %v1157 = vsub.f32 %v1008, %v1156
    %v1158 = vand.u32 %v1157, 4294901760
    %1159 = vmatpush.msra.mxu0 %v1158
    %v1160 = vand.u32 %v1007, 4294901760
    %v1161 = vsub.f32 %v1007, %v1160
    %v1162 = vand.u32 %v1161, 4294901760
    %1163 = vmatpush.msra.mxu0 %v1162
    %v1164 = vand.u32 %v1006, 4294901760
    %v1165 = vsub.f32 %v1006, %v1164
    %v1166 = vand.u32 %v1165, 4294901760
    %1167 = vmatpush.msra.mxu0 %v1166
    %v1168 = vand.u32 %v1011, 4294901760
    %1169 = vmatmul.f32.gmra.mxu0 %v1168
    %v1170 = vpop.f32.mrf.mxu0
    %v1171 = vadd.f32 %v1138, %v1170
    %1172 = vdwg.mxu0
    %1173 = vmatpush.msra.mxu0 0.0
    %1174 = vmatpush.msra.mxu0 0.0
    %1175 = vmatpush.msra.mxu0 0.0
    %1176 = vmatpush.msra.mxu0 0.0
    %1177 = vmatpush.msra.mxu0 0.0
    %1178 = vmatpush.msra.mxu0 0.0
    %1179 = vmatpush.msra.mxu0 0.0
    %1180 = vmatpush.msra.mxu0 0.0
    %1181 = vmatpush.msra.mxu0 0.0
    %1182 = vmatpush.msra.mxu0 0.0
    %1183 = vmatpush.msra.mxu0 0.0
    %1184 = vmatpush.msra.mxu0 0.0
    %v1185 = vand.u32 %v1009, 4294901760
    %1186 = vmatpush.msra.mxu0 %v1185
    %v1187 = vand.u32 %v1008, 4294901760
    %1188 = vmatpush.msra.mxu0 %v1187
    %v1189 = vand.u32 %v1007, 4294901760
    %1190 = vmatpush.msra.mxu0 %v1189
    %v1191 = vand.u32 %v1006, 4294901760
    %1192 = vmatpush.msra.mxu0 %v1191
    %v1193 = vand.u32 %v1011, 4294901760
    %1194 = vmatmul.f32.gmra.mxu0 %v1193
    %v1195 = vpop.f32.mrf.mxu0
    %v1196 = vadd.f32 %v1171, %v1195
    %1197 = vdwg.mxu0
    %s1198 = scalar_lea.vmem [#allocation4], 4
    %v1199 = vld [vmem:[%s1198] sm:$0x3]
    %v1200 = vmul.f32 %v1199, %v1196
    %v1201 = vld [vmem:[#allocation9] sm:$0xff]
    %v1202 = vld [vmem:[#allocation9 + $0x8] sm:$0xff]
    %v1203 = vld [vmem:[#allocation9 + $0x10] sm:$0xff]
    %v1204 = vld [vmem:[#allocation9 + $0x18] sm:$0xff]
    %v1205 = vld [vmem:[#allocation9 + $0x20] sm:$0xff]
    %v1206 = vld [vmem:[#allocation9 + $0x28] sm:$0xff]
    %v1207 = vld [vmem:[#allocation9 + $0x30] sm:$0xff]
    %v1208 = vld [vmem:[#allocation9 + $0x38] sm:$0xff]
    %v1209 = vld [vmem:[#allocation9 + $0x40] sm:$0xff]
    %v1210 = vld [vmem:[#allocation9 + $0x48] sm:$0xff]
    %v1211 = vld [vmem:[#allocation9 + $0x50] sm:$0xff]
    %v1212 = vld [vmem:[#allocation9 + $0x58] sm:$0xff]
    %v1214 = vsel %vm85, %v1200, 0
    %1216 = vmatpush.msra.mxu0 0.0
    %1217 = vmatpush.msra.mxu0 0.0
    %1218 = vmatpush.msra.mxu0 0.0
    %1219 = vmatpush.msra.mxu0 0.0
    %v1220 = vand.u32 %v1212, 4294901760
    %1221 = vmatpush.msra.mxu0 %v1220
    %v1222 = vand.u32 %v1211, 4294901760
    %1223 = vmatpush.msra.mxu0 %v1222
    %v1224 = vand.u32 %v1210, 4294901760
    %1225 = vmatpush.msra.mxu0 %v1224
    %v1226 = vand.u32 %v1209, 4294901760
    %1227 = vmatpush.msra.mxu0 %v1226
    %v1228 = vand.u32 %v1208, 4294901760
    %1229 = vmatpush.msra.mxu0 %v1228
    %v1230 = vand.u32 %v1207, 4294901760
    %1231 = vmatpush.msra.mxu0 %v1230
    %v1232 = vand.u32 %v1206, 4294901760
    %1233 = vmatpush.msra.mxu0 %v1232
    %v1234 = vand.u32 %v1205, 4294901760
    %1235 = vmatpush.msra.mxu0 %v1234
    %v1236 = vand.u32 %v1204, 4294901760
    %1237 = vmatpush.msra.mxu0 %v1236
    %v1238 = vand.u32 %v1203, 4294901760
    %1239 = vmatpush.msra.mxu0 %v1238
    %v1240 = vand.u32 %v1202, 4294901760
    %1241 = vmatpush.msra.mxu0 %v1240
    %v1242 = vand.u32 %v1201, 4294901760
    %1243 = vmatpush.msra.mxu0 %v1242
    %v1244 = vand.u32 %v1214, 4294901760
    %v1245 = vsub.f32 %v1214, %v1244
    %v1246 = vand.u32 %v1245, 4294901760
    %v1247 = vsub.f32 %v1245, %v1246
    %v1248 = vand.u32 %v1247, 4294901760
    %1249 = vmatmul.f32.gmra.mxu0 %v1248
    %v1250 = vpop.f32.mrf.mxu0
    %v1251 = vadd.f32 0.0, %v1250
    %1252 = vdwg.mxu0
    %1253 = vmatpush.msra.mxu0 0.0
    %1254 = vmatpush.msra.mxu0 0.0
    %1255 = vmatpush.msra.mxu0 0.0
    %1256 = vmatpush.msra.mxu0 0.0
    %v1257 = vand.u32 %v1212, 4294901760
    %v1258 = vsub.f32 %v1212, %v1257
    %v1259 = vand.u32 %v1258, 4294901760
    %v1260 = vsub.f32 %v1258, %v1259
    %v1261 = vand.u32 %v1260, 4294901760
    %1262 = vmatpush.msra.mxu0 %v1261
    %v1263 = vand.u32 %v1211, 4294901760
    %v1264 = vsub.f32 %v1211, %v1263
    %v1265 = vand.u32 %v1264, 4294901760
    %v1266 = vsub.f32 %v1264, %v1265
    %v1267 = vand.u32 %v1266, 4294901760
    %1268 = vmatpush.msra.mxu0 %v1267
    %v1269 = vand.u32 %v1210, 4294901760
    %v1270 = vsub.f32 %v1210, %v1269
    %v1271 = vand.u32 %v1270, 4294901760
    %v1272 = vsub.f32 %v1270, %v1271
    %v1273 = vand.u32 %v1272, 4294901760
    %1274 = vmatpush.msra.mxu0 %v1273
    %v1275 = vand.u32 %v1209, 4294901760
    %v1276 = vsub.f32 %v1209, %v1275
    %v1277 = vand.u32 %v1276, 4294901760
    %v1278 = vsub.f32 %v1276, %v1277
    %v1279 = vand.u32 %v1278, 4294901760
    %1280 = vmatpush.msra.mxu0 %v1279
    %v1281 = vand.u32 %v1208, 4294901760
    %v1282 = vsub.f32 %v1208, %v1281
    %v1283 = vand.u32 %v1282, 4294901760
    %v1284 = vsub.f32 %v1282, %v1283
    %v1285 = vand.u32 %v1284, 4294901760
    %1286 = vmatpush.msra.mxu0 %v1285
    %v1287 = vand.u32 %v1207, 4294901760
    %v1288 = vsub.f32 %v1207, %v1287
    %v1289 = vand.u32 %v1288, 4294901760
    %v1290 = vsub.f32 %v1288, %v1289
    %v1291 = vand.u32 %v1290, 4294901760
    %1292 = vmatpush.msra.mxu0 %v1291
    %v1293 = vand.u32 %v1206, 4294901760
    %v1294 = vsub.f32 %v1206, %v1293
    %v1295 = vand.u32 %v1294, 4294901760
    %v1296 = vsub.f32 %v1294, %v1295
    %v1297 = vand.u32 %v1296, 4294901760
    %1298 = vmatpush.msra.mxu0 %v1297
    %v1299 = vand.u32 %v1205, 4294901760
    %v1300 = vsub.f32 %v1205, %v1299
    %v1301 = vand.u32 %v1300, 4294901760
    %v1302 = vsub.f32 %v1300, %v1301
    %v1303 = vand.u32 %v1302, 4294901760
    %1304 = vmatpush.msra.mxu0 %v1303
    %v1305 = vand.u32 %v1204, 4294901760
    %v1306 = vsub.f32 %v1204, %v1305
    %v1307 = vand.u32 %v1306, 4294901760
    %v1308 = vsub.f32 %v1306, %v1307
    %v1309 = vand.u32 %v1308, 4294901760
    %1310 = vmatpush.msra.mxu0 %v1309
    %v1311 = vand.u32 %v1203, 4294901760
    %v1312 = vsub.f32 %v1203, %v1311
    %v1313 = vand.u32 %v1312, 4294901760
    %v1314 = vsub.f32 %v1312, %v1313
    %v1315 = vand.u32 %v1314, 4294901760
    %1316 = vmatpush.msra.mxu0 %v1315
    %v1317 = vand.u32 %v1202, 4294901760
    %v1318 = vsub.f32 %v1202, %v1317
    %v1319 = vand.u32 %v1318, 4294901760
    %v1320 = vsub.f32 %v1318, %v1319
    %v1321 = vand.u32 %v1320, 4294901760
    %1322 = vmatpush.msra.mxu0 %v1321
    %v1323 = vand.u32 %v1201, 4294901760
    %v1324 = vsub.f32 %v1201, %v1323
    %v1325 = vand.u32 %v1324, 4294901760
    %v1326 = vsub.f32 %v1324, %v1325
    %v1327 = vand.u32 %v1326, 4294901760
    %1328 = vmatpush.msra.mxu0 %v1327
    %v1329 = vand.u32 %v1214, 4294901760
    %1330 = vmatmul.f32.gmra.mxu0 %v1329
    %v1331 = vpop.f32.mrf.mxu0
    %v1332 = vadd.f32 %v1251, %v1331
    %1333 = vdwg.mxu0
    %1334 = vmatpush.msra.mxu0 0.0
    %1335 = vmatpush.msra.mxu0 0.0
    %1336 = vmatpush.msra.mxu0 0.0
    %1337 = vmatpush.msra.mxu0 0.0
    %v1338 = vand.u32 %v1212, 4294901760
    %v1339 = vsub.f32 %v1212, %v1338
    %1340 = vmatpush.msra.mxu0 %v1339
    %v1341 = vand.u32 %v1211, 4294901760
    %v1342 = vsub.f32 %v1211, %v1341
    %1343 = vmatpush.msra.mxu0 %v1342
    %v1344 = vand.u32 %v1210, 4294901760
    %v1345 = vsub.f32 %v1210, %v1344
    %1346 = vmatpush.msra.mxu0 %v1345
    %v1347 = vand.u32 %v1209, 4294901760
    %v1348 = vsub.f32 %v1209, %v1347
    %1349 = vmatpush.msra.mxu0 %v1348
    %v1350 = vand.u32 %v1208, 4294901760
    %v1351 = vsub.f32 %v1208, %v1350
    %1352 = vmatpush.msra.mxu0 %v1351
    %v1353 = vand.u32 %v1207, 4294901760
    %v1354 = vsub.f32 %v1207, %v1353
    %1355 = vmatpush.msra.mxu0 %v1354
    %v1356 = vand.u32 %v1206, 4294901760
    %v1357 = vsub.f32 %v1206, %v1356
    %1358 = vmatpush.msra.mxu0 %v1357
    %v1359 = vand.u32 %v1205, 4294901760
    %v1360 = vsub.f32 %v1205, %v1359
    %1361 = vmatpush.msra.mxu0 %v1360
    %v1362 = vand.u32 %v1204, 4294901760
    %v1363 = vsub.f32 %v1204, %v1362
    %1364 = vmatpush.msra.mxu0 %v1363
    %v1365 = vand.u32 %v1203, 4294901760
    %v1366 = vsub.f32 %v1203, %v1365
    %1367 = vmatpush.msra.mxu0 %v1366
    %v1368 = vand.u32 %v1202, 4294901760
    %v1369 = vsub.f32 %v1202, %v1368
    %1370 = vmatpush.msra.mxu0 %v1369
    %v1371 = vand.u32 %v1201, 4294901760
    %v1372 = vsub.f32 %v1201, %v1371
    %1373 = vmatpush.msra.mxu0 %v1372
    %v1374 = vand.u32 %v1214, 4294901760
    %v1375 = vsub.f32 %v1214, %v1374
    %1376 = vmatmul.f32.gmra.mxu0 %v1375
    %v1377 = vpop.f32.mrf.mxu0
    %v1378 = vadd.f32 %v1332, %v1377
    %1379 = vdwg.mxu0
    %1380 = vmatpush.msra.mxu0 0.0
    %1381 = vmatpush.msra.mxu0 0.0
    %1382 = vmatpush.msra.mxu0 0.0
    %1383 = vmatpush.msra.mxu0 0.0
    %v1384 = vand.u32 %v1212, 4294901760
    %1385 = vmatpush.msra.mxu0 %v1384
    %v1386 = vand.u32 %v1211, 4294901760
    %1387 = vmatpush.msra.mxu0 %v1386
    %v1388 = vand.u32 %v1210, 4294901760
    %1389 = vmatpush.msra.mxu0 %v1388
    %v1390 = vand.u32 %v1209, 4294901760
    %1391 = vmatpush.msra.mxu0 %v1390
    %v1392 = vand.u32 %v1208, 4294901760
    %1393 = vmatpush.msra.mxu0 %v1392
    %v1394 = vand.u32 %v1207, 4294901760
    %1395 = vmatpush.msra.mxu0 %v1394
    %v1396 = vand.u32 %v1206, 4294901760
    %1397 = vmatpush.msra.mxu0 %v1396
    %v1398 = vand.u32 %v1205, 4294901760
    %1399 = vmatpush.msra.mxu0 %v1398
    %v1400 = vand.u32 %v1204, 4294901760
    %1401 = vmatpush.msra.mxu0 %v1400
    %v1402 = vand.u32 %v1203, 4294901760
    %1403 = vmatpush.msra.mxu0 %v1402
    %v1404 = vand.u32 %v1202, 4294901760
    %1405 = vmatpush.msra.mxu0 %v1404
    %v1406 = vand.u32 %v1201, 4294901760
    %1407 = vmatpush.msra.mxu0 %v1406
    %v1408 = vand.u32 %v1214, 4294901760
    %v1409 = vsub.f32 %v1214, %v1408
    %v1410 = vand.u32 %v1409, 4294901760
    %1411 = vmatmul.f32.gmra.mxu0 %v1410
    %v1412 = vpop.f32.mrf.mxu0
    %v1413 = vadd.f32 %v1378, %v1412
    %1414 = vdwg.mxu0
    %1415 = vmatpush.msra.mxu0 0.0
    %1416 = vmatpush.msra.mxu0 0.0
    %1417 = vmatpush.msra.mxu0 0.0
    %1418 = vmatpush.msra.mxu0 0.0
    %v1419 = vand.u32 %v1212, 4294901760
    %v1420 = vsub.f32 %v1212, %v1419
    %v1421 = vand.u32 %v1420, 4294901760
    %1422 = vmatpush.msra.mxu0 %v1421
    %v1423 = vand.u32 %v1211, 4294901760
    %v1424 = vsub.f32 %v1211, %v1423
    %v1425 = vand.u32 %v1424, 4294901760
    %1426 = vmatpush.msra.mxu0 %v1425
    %v1427 = vand.u32 %v1210, 4294901760
    %v1428 = vsub.f32 %v1210, %v1427
    %v1429 = vand.u32 %v1428, 4294901760
    %1430 = vmatpush.msra.mxu0 %v1429
    %v1431 = vand.u32 %v1209, 4294901760
    %v1432 = vsub.f32 %v1209, %v1431
    %v1433 = vand.u32 %v1432, 4294901760
    %1434 = vmatpush.msra.mxu0 %v1433
    %v1435 = vand.u32 %v1208, 4294901760
    %v1436 = vsub.f32 %v1208, %v1435
    %v1437 = vand.u32 %v1436, 4294901760
    %1438 = vmatpush.msra.mxu0 %v1437
    %v1439 = vand.u32 %v1207, 4294901760
    %v1440 = vsub.f32 %v1207, %v1439
    %v1441 = vand.u32 %v1440, 4294901760
    %1442 = vmatpush.msra.mxu0 %v1441
    %v1443 = vand.u32 %v1206, 4294901760
    %v1444 = vsub.f32 %v1206, %v1443
    %v1445 = vand.u32 %v1444, 4294901760
    %1446 = vmatpush.msra.mxu0 %v1445
    %v1447 = vand.u32 %v1205, 4294901760
    %v1448 = vsub.f32 %v1205, %v1447
    %v1449 = vand.u32 %v1448, 4294901760
    %1450 = vmatpush.msra.mxu0 %v1449
    %v1451 = vand.u32 %v1204, 4294901760
    %v1452 = vsub.f32 %v1204, %v1451
    %v1453 = vand.u32 %v1452, 4294901760
    %1454 = vmatpush.msra.mxu0 %v1453
    %v1455 = vand.u32 %v1203, 4294901760
    %v1456 = vsub.f32 %v1203, %v1455
    %v1457 = vand.u32 %v1456, 4294901760
    %1458 = vmatpush.msra.mxu0 %v1457
    %v1459 = vand.u32 %v1202, 4294901760
    %v1460 = vsub.f32 %v1202, %v1459
    %v1461 = vand.u32 %v1460, 4294901760
    %1462 = vmatpush.msra.mxu0 %v1461
    %v1463 = vand.u32 %v1201, 4294901760
    %v1464 = vsub.f32 %v1201, %v1463
    %v1465 = vand.u32 %v1464, 4294901760
    %1466 = vmatpush.msra.mxu0 %v1465
    %v1467 = vand.u32 %v1214, 4294901760
    %1468 = vmatmul.f32.gmra.mxu0 %v1467
    %v1469 = vpop.f32.mrf.mxu0
    %v1470 = vadd.f32 %v1413, %v1469
    %1471 = vdwg.mxu0
    %1472 = vmatpush.msra.mxu0 0.0
    %1473 = vmatpush.msra.mxu0 0.0
    %1474 = vmatpush.msra.mxu0 0.0
    %1475 = vmatpush.msra.mxu0 0.0
    %v1476 = vand.u32 %v1212, 4294901760
    %1477 = vmatpush.msra.mxu0 %v1476
    %v1478 = vand.u32 %v1211, 4294901760
    %1479 = vmatpush.msra.mxu0 %v1478
    %v1480 = vand.u32 %v1210, 4294901760
    %1481 = vmatpush.msra.mxu0 %v1480
    %v1482 = vand.u32 %v1209, 4294901760
    %1483 = vmatpush.msra.mxu0 %v1482
    %v1484 = vand.u32 %v1208, 4294901760
    %1485 = vmatpush.msra.mxu0 %v1484
    %v1486 = vand.u32 %v1207, 4294901760
    %1487 = vmatpush.msra.mxu0 %v1486
    %v1488 = vand.u32 %v1206, 4294901760
    %1489 = vmatpush.msra.mxu0 %v1488
    %v1490 = vand.u32 %v1205, 4294901760
    %1491 = vmatpush.msra.mxu0 %v1490
    %v1492 = vand.u32 %v1204, 4294901760
    %1493 = vmatpush.msra.mxu0 %v1492
    %v1494 = vand.u32 %v1203, 4294901760
    %1495 = vmatpush.msra.mxu0 %v1494
    %v1496 = vand.u32 %v1202, 4294901760
    %1497 = vmatpush.msra.mxu0 %v1496
    %v1498 = vand.u32 %v1201, 4294901760
    %1499 = vmatpush.msra.mxu0 %v1498
    %v1500 = vand.u32 %v1214, 4294901760
    %1501 = vmatmul.f32.gmra.mxu0 %v1500
    %v1502 = vpop.f32.mrf.mxu0
    %v1503 = vadd.f32 %v1470, %v1502
    %1504 = vdwg.mxu0
    %v1505 = vxor.u32 %v1503, 2147483648
    %v1506 = vmul.f32 %v1505, 1.442695
    %v1507 = vpow.pop %v1506
    %v1508 = vadd.f32 %v1507, 1.0
    %v1509 = vrcp.pop %v1508
    %v1510 = vmul.f32 %v1508, %v1509
    %v1511 = vsub.f32 1.0, %v1510
    %v1512 = vmul.f32 %v1509, %v1511
    %v1513 = vadd.f32 %v1509, %v1512
    %vm1514 = vweird.f32 %v1508
    %vm1515 = vweird.f32 %v1509
    %vm1516 = vmor %vm1514, %vm1515
    %v1517 = vsel %vm1516, %v1509, %v1513
    %v1518 = vand.u32 2147483647, %v1508
    %vm1519 = vcmp.eq.f32.partialorder %v1518, 8.507059e+37
    %v1520 = vand.u32 %v1508, 2147483648
    %v1521 = vor.u32 1.1754944e-38, %v1520
    %v1522 = vsel %vm1519, %v1521, %v1517
    %v1523 = vmul.f32 1.0, %v1522
    %v1524 = vtanh.pop %v1503
    %1526 = vrot.lane.b32.xlu0 %v1523, 32
    %v1527 = vpop.permute.xlu0 %1526
    %v1529 = vmul.f32 %v1005, %v1527
    %v1530 = vsub.f32 1.0, %v1523
    %1532 = vrot.lane.b32.xlu0 %v1524, 64
    %v1533 = vpop.permute.xlu0 %1532
    %v1535 = vmul.f32 %v1530, %v1533
    %1537 = vrot.lane.b32.xlu0 %v1535, 32
    %v1538 = vpop.permute.xlu0 %1537
    %v1540 = vadd.f32 %v1529, %v1538
    %v1541 = vtanh.pop %v1540
    %v1542 = vmul.f32 %v1523, %v1541
    %1544 = vrot.lane.b32.xlu0 %v1542, 96
    %v1545 = vpop.permute.xlu0 %1544
    %v1547 = vsel %vm418, %v1545, %v1540
    %s1548 = scalar_lea.vmem [#allocation10], 4
    %1549 = vst.msk [vmem:[%s1548] sm:$0x3] %vm420, %v1547
    %s1550 = sadd.s32 %s422, 3
    %s1551 = smul.u32 %s1550, 128
    %s1552 = sadd.s32 %s1551, %s427
    %s1553 = sld [smem:[#allocation3 + %s1552]]
    %s1554 = smul.u32 %s1553, 2
    %s1555 = scalar_lea.vmem [#allocation10], %s1554
    %v1556 = vld [vmem:[%s1555] sm:$0x3]
    %s1557 = sadd.s32 %s434, 3
    %s1558 = smul.u32 %s1557, 128
    %s1559 = sadd.s32 %s1558, %s439
    %s1560 = sld [smem:[#allocation3 + %s1559]]
    %s1561 = smul.u32 %s1560, 2
    %s1562 = scalar_lea.vmem [#allocation10], %s1561
    %v1563 = vld [vmem:[%s1562] sm:$0x3]
    %v1564 = vsel %vm445, %v1556, %v1563
    %v1565 = vld [vmem:[#allocation7] sm:$0xff]
    %v1566 = vld [vmem:[#allocation7 + $0x8] sm:$0xff]
    %v1567 = vld [vmem:[#allocation7 + $0x10] sm:$0xff]
    %v1568 = vld [vmem:[#allocation7 + $0x18] sm:$0xff]
    %v1570 = vsel %vm418, %v1564, 0
    %1572 = vmatpush.msra.mxu0 0.0
    %1573 = vmatpush.msra.mxu0 0.0
    %1574 = vmatpush.msra.mxu0 0.0
    %1575 = vmatpush.msra.mxu0 0.0
    %1576 = vmatpush.msra.mxu0 0.0
    %1577 = vmatpush.msra.mxu0 0.0
    %1578 = vmatpush.msra.mxu0 0.0
    %1579 = vmatpush.msra.mxu0 0.0
    %1580 = vmatpush.msra.mxu0 0.0
    %1581 = vmatpush.msra.mxu0 0.0
    %1582 = vmatpush.msra.mxu0 0.0
    %1583 = vmatpush.msra.mxu0 0.0
    %v1584 = vand.u32 %v1568, 4294901760
    %1585 = vmatpush.msra.mxu0 %v1584
    %v1586 = vand.u32 %v1567, 4294901760
    %1587 = vmatpush.msra.mxu0 %v1586
    %v1588 = vand.u32 %v1566, 4294901760
    %1589 = vmatpush.msra.mxu0 %v1588
    %v1590 = vand.u32 %v1565, 4294901760
    %1591 = vmatpush.msra.mxu0 %v1590
    %v1592 = vand.u32 %v1570, 4294901760
    %v1593 = vsub.f32 %v1570, %v1592
    %v1594 = vand.u32 %v1593, 4294901760
    %v1595 = vsub.f32 %v1593, %v1594
    %v1596 = vand.u32 %v1595, 4294901760
    %1597 = vmatmul.f32.gmra.mxu0 %v1596
    %v1598 = vpop.f32.mrf.mxu0
    %v1599 = vadd.f32 0.0, %v1598
    %1600 = vdwg.mxu0
    %1601 = vmatpush.msra.mxu0 0.0
    %1602 = vmatpush.msra.mxu0 0.0
    %1603 = vmatpush.msra.mxu0 0.0
    %1604 = vmatpush.msra.mxu0 0.0
    %1605 = vmatpush.msra.mxu0 0.0
    %1606 = vmatpush.msra.mxu0 0.0
    %1607 = vmatpush.msra.mxu0 0.0
    %1608 = vmatpush.msra.mxu0 0.0
    %1609 = vmatpush.msra.mxu0 0.0
    %1610 = vmatpush.msra.mxu0 0.0
    %1611 = vmatpush.msra.mxu0 0.0
    %1612 = vmatpush.msra.mxu0 0.0
    %v1613 = vand.u32 %v1568, 4294901760
    %v1614 = vsub.f32 %v1568, %v1613
    %v1615 = vand.u32 %v1614, 4294901760
    %v1616 = vsub.f32 %v1614, %v1615
    %v1617 = vand.u32 %v1616, 4294901760
    %1618 = vmatpush.msra.mxu0 %v1617
    %v1619 = vand.u32 %v1567, 4294901760
    %v1620 = vsub.f32 %v1567, %v1619
    %v1621 = vand.u32 %v1620, 4294901760
    %v1622 = vsub.f32 %v1620, %v1621
    %v1623 = vand.u32 %v1622, 4294901760
    %1624 = vmatpush.msra.mxu0 %v1623
    %v1625 = vand.u32 %v1566, 4294901760
    %v1626 = vsub.f32 %v1566, %v1625
    %v1627 = vand.u32 %v1626, 4294901760
    %v1628 = vsub.f32 %v1626, %v1627
    %v1629 = vand.u32 %v1628, 4294901760
    %1630 = vmatpush.msra.mxu0 %v1629
    %v1631 = vand.u32 %v1565, 4294901760
    %v1632 = vsub.f32 %v1565, %v1631
    %v1633 = vand.u32 %v1632, 4294901760
    %v1634 = vsub.f32 %v1632, %v1633
    %v1635 = vand.u32 %v1634, 4294901760
    %1636 = vmatpush.msra.mxu0 %v1635
    %v1637 = vand.u32 %v1570, 4294901760
    %1638 = vmatmul.f32.gmra.mxu0 %v1637
    %v1639 = vpop.f32.mrf.mxu0
    %v1640 = vadd.f32 %v1599, %v1639
    %1641 = vdwg.mxu0
    %1642 = vmatpush.msra.mxu0 0.0
    %1643 = vmatpush.msra.mxu0 0.0
    %1644 = vmatpush.msra.mxu0 0.0
    %1645 = vmatpush.msra.mxu0 0.0
    %1646 = vmatpush.msra.mxu0 0.0
    %1647 = vmatpush.msra.mxu0 0.0
    %1648 = vmatpush.msra.mxu0 0.0
    %1649 = vmatpush.msra.mxu0 0.0
    %1650 = vmatpush.msra.mxu0 0.0
    %1651 = vmatpush.msra.mxu0 0.0
    %1652 = vmatpush.msra.mxu0 0.0
    %1653 = vmatpush.msra.mxu0 0.0
    %v1654 = vand.u32 %v1568, 4294901760
    %v1655 = vsub.f32 %v1568, %v1654
    %1656 = vmatpush.msra.mxu0 %v1655
    %v1657 = vand.u32 %v1567, 4294901760
    %v1658 = vsub.f32 %v1567, %v1657
    %1659 = vmatpush.msra.mxu0 %v1658
    %v1660 = vand.u32 %v1566, 4294901760
    %v1661 = vsub.f32 %v1566, %v1660
    %1662 = vmatpush.msra.mxu0 %v1661
    %v1663 = vand.u32 %v1565, 4294901760
    %v1664 = vsub.f32 %v1565, %v1663
    %1665 = vmatpush.msra.mxu0 %v1664
    %v1666 = vand.u32 %v1570, 4294901760
    %v1667 = vsub.f32 %v1570, %v1666
    %1668 = vmatmul.f32.gmra.mxu0 %v1667
    %v1669 = vpop.f32.mrf.mxu0
    %v1670 = vadd.f32 %v1640, %v1669
    %1671 = vdwg.mxu0
    %1672 = vmatpush.msra.mxu0 0.0
    %1673 = vmatpush.msra.mxu0 0.0
    %1674 = vmatpush.msra.mxu0 0.0
    %1675 = vmatpush.msra.mxu0 0.0
    %1676 = vmatpush.msra.mxu0 0.0
    %1677 = vmatpush.msra.mxu0 0.0
    %1678 = vmatpush.msra.mxu0 0.0
    %1679 = vmatpush.msra.mxu0 0.0
    %1680 = vmatpush.msra.mxu0 0.0
    %1681 = vmatpush.msra.mxu0 0.0
    %1682 = vmatpush.msra.mxu0 0.0
    %1683 = vmatpush.msra.mxu0 0.0
    %v1684 = vand.u32 %v1568, 4294901760
    %1685 = vmatpush.msra.mxu0 %v1684
    %v1686 = vand.u32 %v1567, 4294901760
    %1687 = vmatpush.msra.mxu0 %v1686
    %v1688 = vand.u32 %v1566, 4294901760
    %1689 = vmatpush.msra.mxu0 %v1688
    %v1690 = vand.u32 %v1565, 4294901760
    %1691 = vmatpush.msra.mxu0 %v1690
    %v1692 = vand.u32 %v1570, 4294901760
    %v1693 = vsub.f32 %v1570, %v1692
    %v1694 = vand.u32 %v1693, 4294901760
    %1695 = vmatmul.f32.gmra.mxu0 %v1694
    %v1696 = vpop.f32.mrf.mxu0
    %v1697 = vadd.f32 %v1670, %v1696
    %1698 = vdwg.mxu0
    %1699 = vmatpush.msra.mxu0 0.0
    %1700 = vmatpush.msra.mxu0 0.0
    %1701 = vmatpush.msra.mxu0 0.0
    %1702 = vmatpush.msra.mxu0 0.0
    %1703 = vmatpush.msra.mxu0 0.0
    %1704 = vmatpush.msra.mxu0 0.0
    %1705 = vmatpush.msra.mxu0 0.0
    %1706 = vmatpush.msra.mxu0 0.0
    %1707 = vmatpush.msra.mxu0 0.0
    %1708 = vmatpush.msra.mxu0 0.0
    %1709 = vmatpush.msra.mxu0 0.0
    %1710 = vmatpush.msra.mxu0 0.0
    %v1711 = vand.u32 %v1568, 4294901760
    %v1712 = vsub.f32 %v1568, %v1711
    %v1713 = vand.u32 %v1712, 4294901760
    %1714 = vmatpush.msra.mxu0 %v1713
    %v1715 = vand.u32 %v1567, 4294901760
    %v1716 = vsub.f32 %v1567, %v1715
    %v1717 = vand.u32 %v1716, 4294901760
    %1718 = vmatpush.msra.mxu0 %v1717
    %v1719 = vand.u32 %v1566, 4294901760
    %v1720 = vsub.f32 %v1566, %v1719
    %v1721 = vand.u32 %v1720, 4294901760
    %1722 = vmatpush.msra.mxu0 %v1721
    %v1723 = vand.u32 %v1565, 4294901760
    %v1724 = vsub.f32 %v1565, %v1723
    %v1725 = vand.u32 %v1724, 4294901760
    %1726 = vmatpush.msra.mxu0 %v1725
    %v1727 = vand.u32 %v1570, 4294901760
    %1728 = vmatmul.f32.gmra.mxu0 %v1727
    %v1729 = vpop.f32.mrf.mxu0
    %v1730 = vadd.f32 %v1697, %v1729
    %1731 = vdwg.mxu0
    %1732 = vmatpush.msra.mxu0 0.0
    %1733 = vmatpush.msra.mxu0 0.0
    %1734 = vmatpush.msra.mxu0 0.0
    %1735 = vmatpush.msra.mxu0 0.0
    %1736 = vmatpush.msra.mxu0 0.0
    %1737 = vmatpush.msra.mxu0 0.0
    %1738 = vmatpush.msra.mxu0 0.0
    %1739 = vmatpush.msra.mxu0 0.0
    %1740 = vmatpush.msra.mxu0 0.0
    %1741 = vmatpush.msra.mxu0 0.0
    %1742 = vmatpush.msra.mxu0 0.0
    %1743 = vmatpush.msra.mxu0 0.0
    %v1744 = vand.u32 %v1568, 4294901760
    %1745 = vmatpush.msra.mxu0 %v1744
    %v1746 = vand.u32 %v1567, 4294901760
    %1747 = vmatpush.msra.mxu0 %v1746
    %v1748 = vand.u32 %v1566, 4294901760
    %1749 = vmatpush.msra.mxu0 %v1748
    %v1750 = vand.u32 %v1565, 4294901760
    %1751 = vmatpush.msra.mxu0 %v1750
    %v1752 = vand.u32 %v1570, 4294901760
    %1753 = vmatmul.f32.gmra.mxu0 %v1752
    %v1754 = vpop.f32.mrf.mxu0
    %v1755 = vadd.f32 %v1730, %v1754
    %1756 = vdwg.mxu0
    %s1757 = scalar_lea.vmem [#allocation4], 6
    %v1758 = vld [vmem:[%s1757] sm:$0x3]
    %v1759 = vmul.f32 %v1758, %v1755
    %v1760 = vld [vmem:[#allocation9] sm:$0xff]
    %v1761 = vld [vmem:[#allocation9 + $0x8] sm:$0xff]
    %v1762 = vld [vmem:[#allocation9 + $0x10] sm:$0xff]
    %v1763 = vld [vmem:[#allocation9 + $0x18] sm:$0xff]
    %v1764 = vld [vmem:[#allocation9 + $0x20] sm:$0xff]
    %v1765 = vld [vmem:[#allocation9 + $0x28] sm:$0xff]
    %v1766 = vld [vmem:[#allocation9 + $0x30] sm:$0xff]
    %v1767 = vld [vmem:[#allocation9 + $0x38] sm:$0xff]
    %v1768 = vld [vmem:[#allocation9 + $0x40] sm:$0xff]
    %v1769 = vld [vmem:[#allocation9 + $0x48] sm:$0xff]
    %v1770 = vld [vmem:[#allocation9 + $0x50] sm:$0xff]
    %v1771 = vld [vmem:[#allocation9 + $0x58] sm:$0xff]
    %v1773 = vsel %vm85, %v1759, 0
    %1775 = vmatpush.msra.mxu0 0.0
    %1776 = vmatpush.msra.mxu0 0.0
    %1777 = vmatpush.msra.mxu0 0.0
    %1778 = vmatpush.msra.mxu0 0.0
    %v1779 = vand.u32 %v1771, 4294901760
    %1780 = vmatpush.msra.mxu0 %v1779
    %v1781 = vand.u32 %v1770, 4294901760
    %1782 = vmatpush.msra.mxu0 %v1781
    %v1783 = vand.u32 %v1769, 4294901760
    %1784 = vmatpush.msra.mxu0 %v1783
    %v1785 = vand.u32 %v1768, 4294901760
    %1786 = vmatpush.msra.mxu0 %v1785
    %v1787 = vand.u32 %v1767, 4294901760
    %1788 = vmatpush.msra.mxu0 %v1787
    %v1789 = vand.u32 %v1766, 4294901760
    %1790 = vmatpush.msra.mxu0 %v1789
    %v1791 = vand.u32 %v1765, 4294901760
    %1792 = vmatpush.msra.mxu0 %v1791
    %v1793 = vand.u32 %v1764, 4294901760
    %1794 = vmatpush.msra.mxu0 %v1793
    %v1795 = vand.u32 %v1763, 4294901760
    %1796 = vmatpush.msra.mxu0 %v1795
    %v1797 = vand.u32 %v1762, 4294901760
    %1798 = vmatpush.msra.mxu0 %v1797
    %v1799 = vand.u32 %v1761, 4294901760
    %1800 = vmatpush.msra.mxu0 %v1799
    %v1801 = vand.u32 %v1760, 4294901760
    %1802 = vmatpush.msra.mxu0 %v1801
    %v1803 = vand.u32 %v1773, 4294901760
    %v1804 = vsub.f32 %v1773, %v1803
    %v1805 = vand.u32 %v1804, 4294901760
    %v1806 = vsub.f32 %v1804, %v1805
    %v1807 = vand.u32 %v1806, 4294901760
    %1808 = vmatmul.f32.gmra.mxu0 %v1807
    %v1809 = vpop.f32.mrf.mxu0
    %v1810 = vadd.f32 0.0, %v1809
    %1811 = vdwg.mxu0
    %1812 = vmatpush.msra.mxu0 0.0
    %1813 = vmatpush.msra.mxu0 0.0
    %1814 = vmatpush.msra.mxu0 0.0
    %1815 = vmatpush.msra.mxu0 0.0
    %v1816 = vand.u32 %v1771, 4294901760
    %v1817 = vsub.f32 %v1771, %v1816
    %v1818 = vand.u32 %v1817, 4294901760
    %v1819 = vsub.f32 %v1817, %v1818
    %v1820 = vand.u32 %v1819, 4294901760
    %1821 = vmatpush.msra.mxu0 %v1820
    %v1822 = vand.u32 %v1770, 4294901760
    %v1823 = vsub.f32 %v1770, %v1822
    %v1824 = vand.u32 %v1823, 4294901760
    %v1825 = vsub.f32 %v1823, %v1824
    %v1826 = vand.u32 %v1825, 4294901760
    %1827 = vmatpush.msra.mxu0 %v1826
    %v1828 = vand.u32 %v1769, 4294901760
    %v1829 = vsub.f32 %v1769, %v1828
    %v1830 = vand.u32 %v1829, 4294901760
    %v1831 = vsub.f32 %v1829, %v1830
    %v1832 = vand.u32 %v1831, 4294901760
    %1833 = vmatpush.msra.mxu0 %v1832
    %v1834 = vand.u32 %v1768, 4294901760
    %v1835 = vsub.f32 %v1768, %v1834
    %v1836 = vand.u32 %v1835, 4294901760
    %v1837 = vsub.f32 %v1835, %v1836
    %v1838 = vand.u32 %v1837, 4294901760
    %1839 = vmatpush.msra.mxu0 %v1838
    %v1840 = vand.u32 %v1767, 4294901760
    %v1841 = vsub.f32 %v1767, %v1840
    %v1842 = vand.u32 %v1841, 4294901760
    %v1843 = vsub.f32 %v1841, %v1842
    %v1844 = vand.u32 %v1843, 4294901760
    %1845 = vmatpush.msra.mxu0 %v1844
    %v1846 = vand.u32 %v1766, 4294901760
    %v1847 = vsub.f32 %v1766, %v1846
    %v1848 = vand.u32 %v1847, 4294901760
    %v1849 = vsub.f32 %v1847, %v1848
    %v1850 = vand.u32 %v1849, 4294901760
    %1851 = vmatpush.msra.mxu0 %v1850
    %v1852 = vand.u32 %v1765, 4294901760
    %v1853 = vsub.f32 %v1765, %v1852
    %v1854 = vand.u32 %v1853, 4294901760
    %v1855 = vsub.f32 %v1853, %v1854
    %v1856 = vand.u32 %v1855, 4294901760
    %1857 = vmatpush.msra.mxu0 %v1856
    %v1858 = vand.u32 %v1764, 4294901760
    %v1859 = vsub.f32 %v1764, %v1858
    %v1860 = vand.u32 %v1859, 4294901760
    %v1861 = vsub.f32 %v1859, %v1860
    %v1862 = vand.u32 %v1861, 4294901760
    %1863 = vmatpush.msra.mxu0 %v1862
    %v1864 = vand.u32 %v1763, 4294901760
    %v1865 = vsub.f32 %v1763, %v1864
    %v1866 = vand.u32 %v1865, 4294901760
    %v1867 = vsub.f32 %v1865, %v1866
    %v1868 = vand.u32 %v1867, 4294901760
    %1869 = vmatpush.msra.mxu0 %v1868
    %v1870 = vand.u32 %v1762, 4294901760
    %v1871 = vsub.f32 %v1762, %v1870
    %v1872 = vand.u32 %v1871, 4294901760
    %v1873 = vsub.f32 %v1871, %v1872
    %v1874 = vand.u32 %v1873, 4294901760
    %1875 = vmatpush.msra.mxu0 %v1874
    %v1876 = vand.u32 %v1761, 4294901760
    %v1877 = vsub.f32 %v1761, %v1876
    %v1878 = vand.u32 %v1877, 4294901760
    %v1879 = vsub.f32 %v1877, %v1878
    %v1880 = vand.u32 %v1879, 4294901760
    %1881 = vmatpush.msra.mxu0 %v1880
    %v1882 = vand.u32 %v1760, 4294901760
    %v1883 = vsub.f32 %v1760, %v1882
    %v1884 = vand.u32 %v1883, 4294901760
    %v1885 = vsub.f32 %v1883, %v1884
    %v1886 = vand.u32 %v1885, 4294901760
    %1887 = vmatpush.msra.mxu0 %v1886
    %v1888 = vand.u32 %v1773, 4294901760
    %1889 = vmatmul.f32.gmra.mxu0 %v1888
    %v1890 = vpop.f32.mrf.mxu0
    %v1891 = vadd.f32 %v1810, %v1890
    %1892 = vdwg.mxu0
    %1893 = vmatpush.msra.mxu0 0.0
    %1894 = vmatpush.msra.mxu0 0.0
    %1895 = vmatpush.msra.mxu0 0.0
    %1896 = vmatpush.msra.mxu0 0.0
    %v1897 = vand.u32 %v1771, 4294901760
    %v1898 = vsub.f32 %v1771, %v1897
    %1899 = vmatpush.msra.mxu0 %v1898
    %v1900 = vand.u32 %v1770, 4294901760
    %v1901 = vsub.f32 %v1770, %v1900
    %1902 = vmatpush.msra.mxu0 %v1901
    %v1903 = vand.u32 %v1769, 4294901760
    %v1904 = vsub.f32 %v1769, %v1903
    %1905 = vmatpush.msra.mxu0 %v1904
    %v1906 = vand.u32 %v1768, 4294901760
    %v1907 = vsub.f32 %v1768, %v1906
    %1908 = vmatpush.msra.mxu0 %v1907
    %v1909 = vand.u32 %v1767, 4294901760
    %v1910 = vsub.f32 %v1767, %v1909
    %1911 = vmatpush.msra.mxu0 %v1910
    %v1912 = vand.u32 %v1766, 4294901760
    %v1913 = vsub.f32 %v1766, %v1912
    %1914 = vmatpush.msra.mxu0 %v1913
    %v1915 = vand.u32 %v1765, 4294901760
    %v1916 = vsub.f32 %v1765, %v1915
    %1917 = vmatpush.msra.mxu0 %v1916
    %v1918 = vand.u32 %v1764, 4294901760
    %v1919 = vsub.f32 %v1764, %v1918
    %1920 = vmatpush.msra.mxu0 %v1919
    %v1921 = vand.u32 %v1763, 4294901760
    %v1922 = vsub.f32 %v1763, %v1921
    %1923 = vmatpush.msra.mxu0 %v1922
    %v1924 = vand.u32 %v1762, 4294901760
    %v1925 = vsub.f32 %v1762, %v1924
    %1926 = vmatpush.msra.mxu0 %v1925
    %v1927 = vand.u32 %v1761, 4294901760
    %v1928 = vsub.f32 %v1761, %v1927
    %1929 = vmatpush.msra.mxu0 %v1928
    %v1930 = vand.u32 %v1760, 4294901760
    %v1931 = vsub.f32 %v1760, %v1930
    %1932 = vmatpush.msra.mxu0 %v1931
    %v1933 = vand.u32 %v1773, 4294901760
    %v1934 = vsub.f32 %v1773, %v1933
    %1935 = vmatmul.f32.gmra.mxu0 %v1934
    %v1936 = vpop.f32.mrf.mxu0
    %v1937 = vadd.f32 %v1891, %v1936
    %1938 = vdwg.mxu0
    %1939 = vmatpush.msra.mxu0 0.0
    %1940 = vmatpush.msra.mxu0 0.0
    %1941 = vmatpush.msra.mxu0 0.0
    %1942 = vmatpush.msra.mxu0 0.0
    %v1943 = vand.u32 %v1771, 4294901760
    %1944 = vmatpush.msra.mxu0 %v1943
    %v1945 = vand.u32 %v1770, 4294901760
    %1946 = vmatpush.msra.mxu0 %v1945
    %v1947 = vand.u32 %v1769, 4294901760
    %1948 = vmatpush.msra.mxu0 %v1947
    %v1949 = vand.u32 %v1768, 4294901760
    %1950 = vmatpush.msra.mxu0 %v1949
    %v1951 = vand.u32 %v1767, 4294901760
    %1952 = vmatpush.msra.mxu0 %v1951
    %v1953 = vand.u32 %v1766, 4294901760
    %1954 = vmatpush.msra.mxu0 %v1953
    %v1955 = vand.u32 %v1765, 4294901760
    %1956 = vmatpush.msra.mxu0 %v1955
    %v1957 = vand.u32 %v1764, 4294901760
    %1958 = vmatpush.msra.mxu0 %v1957
    %v1959 = vand.u32 %v1763, 4294901760
    %1960 = vmatpush.msra.mxu0 %v1959
    %v1961 = vand.u32 %v1762, 4294901760
    %1962 = vmatpush.msra.mxu0 %v1961
    %v1963 = vand.u32 %v1761, 4294901760
    %1964 = vmatpush.msra.mxu0 %v1963
    %v1965 = vand.u32 %v1760, 4294901760
    %1966 = vmatpush.msra.mxu0 %v1965
    %v1967 = vand.u32 %v1773, 4294901760
    %v1968 = vsub.f32 %v1773, %v1967
    %v1969 = vand.u32 %v1968, 4294901760
    %1970 = vmatmul.f32.gmra.mxu0 %v1969
    %v1971 = vpop.f32.mrf.mxu0
    %v1972 = vadd.f32 %v1937, %v1971
    %1973 = vdwg.mxu0
    %1974 = vmatpush.msra.mxu0 0.0
    %1975 = vmatpush.msra.mxu0 0.0
    %1976 = vmatpush.msra.mxu0 0.0
    %1977 = vmatpush.msra.mxu0 0.0
    %v1978 = vand.u32 %v1771, 4294901760
    %v1979 = vsub.f32 %v1771, %v1978
    %v1980 = vand.u32 %v1979, 4294901760
    %1981 = vmatpush.msra.mxu0 %v1980
    %v1982 = vand.u32 %v1770, 4294901760
    %v1983 = vsub.f32 %v1770, %v1982
    %v1984 = vand.u32 %v1983, 4294901760
    %1985 = vmatpush.msra.mxu0 %v1984
    %v1986 = vand.u32 %v1769, 4294901760
    %v1987 = vsub.f32 %v1769, %v1986
    %v1988 = vand.u32 %v1987, 4294901760
    %1989 = vmatpush.msra.mxu0 %v1988
    %v1990 = vand.u32 %v1768, 4294901760
    %v1991 = vsub.f32 %v1768, %v1990
    %v1992 = vand.u32 %v1991, 4294901760
    %1993 = vmatpush.msra.mxu0 %v1992
    %v1994 = vand.u32 %v1767, 4294901760
    %v1995 = vsub.f32 %v1767, %v1994
    %v1996 = vand.u32 %v1995, 4294901760
    %1997 = vmatpush.msra.mxu0 %v1996
    %v1998 = vand.u32 %v1766, 4294901760
    %v1999 = vsub.f32 %v1766, %v1998
    %v2000 = vand.u32 %v1999, 4294901760
    %2001 = vmatpush.msra.mxu0 %v2000
    %v2002 = vand.u32 %v1765, 4294901760
    %v2003 = vsub.f32 %v1765, %v2002
    %v2004 = vand.u32 %v2003, 4294901760
    %2005 = vmatpush.msra.mxu0 %v2004
    %v2006 = vand.u32 %v1764, 4294901760
    %v2007 = vsub.f32 %v1764, %v2006
    %v2008 = vand.u32 %v2007, 4294901760
    %2009 = vmatpush.msra.mxu0 %v2008
    %v2010 = vand.u32 %v1763, 4294901760
    %v2011 = vsub.f32 %v1763, %v2010
    %v2012 = vand.u32 %v2011, 4294901760
    %2013 = vmatpush.msra.mxu0 %v2012
    %v2014 = vand.u32 %v1762, 4294901760
    %v2015 = vsub.f32 %v1762, %v2014
    %v2016 = vand.u32 %v2015, 4294901760
    %2017 = vmatpush.msra.mxu0 %v2016
    %v2018 = vand.u32 %v1761, 4294901760
    %v2019 = vsub.f32 %v1761, %v2018
    %v2020 = vand.u32 %v2019, 4294901760
    %2021 = vmatpush.msra.mxu0 %v2020
    %v2022 = vand.u32 %v1760, 4294901760
    %v2023 = vsub.f32 %v1760, %v2022
    %v2024 = vand.u32 %v2023, 4294901760
    %2025 = vmatpush.msra.mxu0 %v2024
    %v2026 = vand.u32 %v1773, 4294901760
    %2027 = vmatmul.f32.gmra.mxu0 %v2026
    %v2028 = vpop.f32.mrf.mxu0
    %v2029 = vadd.f32 %v1972, %v2028
    %2030 = vdwg.mxu0
    %2031 = vmatpush.msra.mxu0 0.0
    %2032 = vmatpush.msra.mxu0 0.0
    %2033 = vmatpush.msra.mxu0 0.0
    %2034 = vmatpush.msra.mxu0 0.0
    %v2035 = vand.u32 %v1771, 4294901760
    %2036 = vmatpush.msra.mxu0 %v2035
    %v2037 = vand.u32 %v1770, 4294901760
    %2038 = vmatpush.msra.mxu0 %v2037
    %v2039 = vand.u32 %v1769, 4294901760
    %2040 = vmatpush.msra.mxu0 %v2039
    %v2041 = vand.u32 %v1768, 4294901760
    %2042 = vmatpush.msra.mxu0 %v2041
    %v2043 = vand.u32 %v1767, 4294901760
    %2044 = vmatpush.msra.mxu0 %v2043
    %v2045 = vand.u32 %v1766, 4294901760
    %2046 = vmatpush.msra.mxu0 %v2045
    %v2047 = vand.u32 %v1765, 4294901760
    %2048 = vmatpush.msra.mxu0 %v2047
    %v2049 = vand.u32 %v1764, 4294901760
    %2050 = vmatpush.msra.mxu0 %v2049
    %v2051 = vand.u32 %v1763, 4294901760
    %2052 = vmatpush.msra.mxu0 %v2051
    %v2053 = vand.u32 %v1762, 4294901760
    %2054 = vmatpush.msra.mxu0 %v2053
    %v2055 = vand.u32 %v1761, 4294901760
    %2056 = vmatpush.msra.mxu0 %v2055
    %v2057 = vand.u32 %v1760, 4294901760
    %2058 = vmatpush.msra.mxu0 %v2057
    %v2059 = vand.u32 %v1773, 4294901760
    %2060 = vmatmul.f32.gmra.mxu0 %v2059
    %v2061 = vpop.f32.mrf.mxu0
    %v2062 = vadd.f32 %v2029, %v2061
    %2063 = vdwg.mxu0
    %v2064 = vxor.u32 %v2062, 2147483648
    %v2065 = vmul.f32 %v2064, 1.442695
    %v2066 = vpow.pop %v2065
    %v2067 = vadd.f32 %v2066, 1.0
    %v2068 = vrcp.pop %v2067
    %v2069 = vmul.f32 %v2067, %v2068
    %v2070 = vsub.f32 1.0, %v2069
    %v2071 = vmul.f32 %v2068, %v2070
    %v2072 = vadd.f32 %v2068, %v2071
    %vm2073 = vweird.f32 %v2067
    %vm2074 = vweird.f32 %v2068
    %vm2075 = vmor %vm2073, %vm2074
    %v2076 = vsel %vm2075, %v2068, %v2072
    %v2077 = vand.u32 2147483647, %v2067
    %vm2078 = vcmp.eq.f32.partialorder %v2077, 8.507059e+37
    %v2079 = vand.u32 %v2067, 2147483648
    %v2080 = vor.u32 1.1754944e-38, %v2079
    %v2081 = vsel %vm2078, %v2080, %v2076
    %v2082 = vmul.f32 1.0, %v2081
    %v2083 = vtanh.pop %v2062
    %2085 = vrot.lane.b32.xlu0 %v2082, 32
    %v2086 = vpop.permute.xlu0 %2085
    %v2088 = vmul.f32 %v1564, %v2086
    %v2089 = vsub.f32 1.0, %v2082
    %2091 = vrot.lane.b32.xlu0 %v2083, 64
    %v2092 = vpop.permute.xlu0 %2091
    %v2094 = vmul.f32 %v2089, %v2092
    %2096 = vrot.lane.b32.xlu0 %v2094, 32
    %v2097 = vpop.permute.xlu0 %2096
    %v2099 = vadd.f32 %v2088, %v2097
    %v2100 = vtanh.pop %v2099
    %v2101 = vmul.f32 %v2082, %v2100
    %2103 = vrot.lane.b32.xlu0 %v2101, 96
    %v2104 = vpop.permute.xlu0 %2103
    %v2106 = vsel %vm418, %v2104, %v2099
    %s2107 = scalar_lea.vmem [#allocation10], 6
    %2108 = vst.msk [vmem:[%s2107] sm:$0x3] %vm420, %v2106
    %s2109 = sadd.s32 %s422, 4
    %s2110 = smul.u32 %s2109, 128
    %s2111 = sadd.s32 %s2110, %s427
    %s2112 = sld [smem:[#allocation3 + %s2111]]
    %s2113 = smul.u32 %s2112, 2
    %s2114 = scalar_lea.vmem [#allocation10], %s2113
    %v2115 = vld [vmem:[%s2114] sm:$0x3]
    %s2116 = sadd.s32 %s434, 4
    %s2117 = smul.u32 %s2116, 128
    %s2118 = sadd.s32 %s2117, %s439
    %s2119 = sld [smem:[#allocation3 + %s2118]]
    %s2120 = smul.u32 %s2119, 2
    %s2121 = scalar_lea.vmem [#allocation10], %s2120
    %v2122 = vld [vmem:[%s2121] sm:$0x3]
    %v2123 = vsel %vm445, %v2115, %v2122
    %v2124 = vld [vmem:[#allocation7] sm:$0xff]
    %v2125 = vld [vmem:[#allocation7 + $0x8] sm:$0xff]
    %v2126 = vld [vmem:[#allocation7 + $0x10] sm:$0xff]
    %v2127 = vld [vmem:[#allocation7 + $0x18] sm:$0xff]
    %v2129 = vsel %vm418, %v2123, 0
    %2131 = vmatpush.msra.mxu0 0.0
    %2132 = vmatpush.msra.mxu0 0.0
    %2133 = vmatpush.msra.mxu0 0.0
    %2134 = vmatpush.msra.mxu0 0.0
    %2135 = vmatpush.msra.mxu0 0.0
    %2136 = vmatpush.msra.mxu0 0.0
    %2137 = vmatpush.msra.mxu0 0.0
    %2138 = vmatpush.msra.mxu0 0.0
    %2139 = vmatpush.msra.mxu0 0.0
    %2140 = vmatpush.msra.mxu0 0.0
    %2141 = vmatpush.msra.mxu0 0.0
    %2142 = vmatpush.msra.mxu0 0.0
    %v2143 = vand.u32 %v2127, 4294901760
    %2144 = vmatpush.msra.mxu0 %v2143
    %v2145 = vand.u32 %v2126, 4294901760
    %2146 = vmatpush.msra.mxu0 %v2145
    %v2147 = vand.u32 %v2125, 4294901760
    %2148 = vmatpush.msra.mxu0 %v2147
    %v2149 = vand.u32 %v2124, 4294901760
    %2150 = vmatpush.msra.mxu0 %v2149
    %v2151 = vand.u32 %v2129, 4294901760
    %v2152 = vsub.f32 %v2129, %v2151
    %v2153 = vand.u32 %v2152, 4294901760
    %v2154 = vsub.f32 %v2152, %v2153
    %v2155 = vand.u32 %v2154, 4294901760
    %2156 = vmatmul.f32.gmra.mxu0 %v2155
    %v2157 = vpop.f32.mrf.mxu0
    %v2158 = vadd.f32 0.0, %v2157
    %2159 = vdwg.mxu0
    %2160 = vmatpush.msra.mxu0 0.0
    %2161 = vmatpush.msra.mxu0 0.0
    %2162 = vmatpush.msra.mxu0 0.0
    %2163 = vmatpush.msra.mxu0 0.0
    %2164 = vmatpush.msra.mxu0 0.0
    %2165 = vmatpush.msra.mxu0 0.0
    %2166 = vmatpush.msra.mxu0 0.0
    %2167 = vmatpush.msra.mxu0 0.0
    %2168 = vmatpush.msra.mxu0 0.0
    %2169 = vmatpush.msra.mxu0 0.0
    %2170 = vmatpush.msra.mxu0 0.0
    %2171 = vmatpush.msra.mxu0 0.0
    %v2172 = vand.u32 %v2127, 4294901760
    %v2173 = vsub.f32 %v2127, %v2172
    %v2174 = vand.u32 %v2173, 4294901760
    %v2175 = vsub.f32 %v2173, %v2174
    %v2176 = vand.u32 %v2175, 4294901760
    %2177 = vmatpush.msra.mxu0 %v2176
    %v2178 = vand.u32 %v2126, 4294901760
    %v2179 = vsub.f32 %v2126, %v2178
    %v2180 = vand.u32 %v2179, 4294901760
    %v2181 = vsub.f32 %v2179, %v2180
    %v2182 = vand.u32 %v2181, 4294901760
    %2183 = vmatpush.msra.mxu0 %v2182
    %v2184 = vand.u32 %v2125, 4294901760
    %v2185 = vsub.f32 %v2125, %v2184
    %v2186 = vand.u32 %v2185, 4294901760
    %v2187 = vsub.f32 %v2185, %v2186
    %v2188 = vand.u32 %v2187, 4294901760
    %2189 = vmatpush.msra.mxu0 %v2188
    %v2190 = vand.u32 %v2124, 4294901760
    %v2191 = vsub.f32 %v2124, %v2190
    %v2192 = vand.u32 %v2191, 4294901760
    %v2193 = vsub.f32 %v2191, %v2192
    %v2194 = vand.u32 %v2193, 4294901760
    %2195 = vmatpush.msra.mxu0 %v2194
    %v2196 = vand.u32 %v2129, 4294901760
    %2197 = vmatmul.f32.gmra.mxu0 %v2196
    %v2198 = vpop.f32.mrf.mxu0
    %v2199 = vadd.f32 %v2158, %v2198
    %2200 = vdwg.mxu0
    %2201 = vmatpush.msra.mxu0 0.0
    %2202 = vmatpush.msra.mxu0 0.0
    %2203 = vmatpush.msra.mxu0 0.0
    %2204 = vmatpush.msra.mxu0 0.0
    %2205 = vmatpush.msra.mxu0 0.0
    %2206 = vmatpush.msra.mxu0 0.0
    %2207 = vmatpush.msra.mxu0 0.0
    %2208 = vmatpush.msra.mxu0 0.0
    %2209 = vmatpush.msra.mxu0 0.0
    %2210 = vmatpush.msra.mxu0 0.0
    %2211 = vmatpush.msra.mxu0 0.0
    %2212 = vmatpush.msra.mxu0 0.0
    %v2213 = vand.u32 %v2127, 4294901760
    %v2214 = vsub.f32 %v2127, %v2213
    %2215 = vmatpush.msra.mxu0 %v2214
    %v2216 = vand.u32 %v2126, 4294901760
    %v2217 = vsub.f32 %v2126, %v2216
    %2218 = vmatpush.msra.mxu0 %v2217
    %v2219 = vand.u32 %v2125, 4294901760
    %v2220 = vsub.f32 %v2125, %v2219
    %2221 = vmatpush.msra.mxu0 %v2220
    %v2222 = vand.u32 %v2124, 4294901760
    %v2223 = vsub.f32 %v2124, %v2222
    %2224 = vmatpush.msra.mxu0 %v2223
    %v2225 = vand.u32 %v2129, 4294901760
    %v2226 = vsub.f32 %v2129, %v2225
    %2227 = vmatmul.f32.gmra.mxu0 %v2226
    %v2228 = vpop.f32.mrf.mxu0
    %v2229 = vadd.f32 %v2199, %v2228
    %2230 = vdwg.mxu0
    %2231 = vmatpush.msra.mxu0 0.0
    %2232 = vmatpush.msra.mxu0 0.0
    %2233 = vmatpush.msra.mxu0 0.0
    %2234 = vmatpush.msra.mxu0 0.0
    %2235 = vmatpush.msra.mxu0 0.0
    %2236 = vmatpush.msra.mxu0 0.0
    %2237 = vmatpush.msra.mxu0 0.0
    %2238 = vmatpush.msra.mxu0 0.0
    %2239 = vmatpush.msra.mxu0 0.0
    %2240 = vmatpush.msra.mxu0 0.0
    %2241 = vmatpush.msra.mxu0 0.0
    %2242 = vmatpush.msra.mxu0 0.0
    %v2243 = vand.u32 %v2127, 4294901760
    %2244 = vmatpush.msra.mxu0 %v2243
    %v2245 = vand.u32 %v2126, 4294901760
    %2246 = vmatpush.msra.mxu0 %v2245
    %v2247 = vand.u32 %v2125, 4294901760
    %2248 = vmatpush.msra.mxu0 %v2247
    %v2249 = vand.u32 %v2124, 4294901760
    %2250 = vmatpush.msra.mxu0 %v2249
    %v2251 = vand.u32 %v2129, 4294901760
    %v2252 = vsub.f32 %v2129, %v2251
    %v2253 = vand.u32 %v2252, 4294901760
    %2254 = vmatmul.f32.gmra.mxu0 %v2253
    %v2255 = vpop.f32.mrf.mxu0
    %v2256 = vadd.f32 %v2229, %v2255
    %2257 = vdwg.mxu0
    %2258 = vmatpush.msra.mxu0 0.0
    %2259 = vmatpush.msra.mxu0 0.0
    %2260 = vmatpush.msra.mxu0 0.0
    %2261 = vmatpush.msra.mxu0 0.0
    %2262 = vmatpush.msra.mxu0 0.0
    %2263 = vmatpush.msra.mxu0 0.0
    %2264 = vmatpush.msra.mxu0 0.0
    %2265 = vmatpush.msra.mxu0 0.0
    %2266 = vmatpush.msra.mxu0 0.0
    %2267 = vmatpush.msra.mxu0 0.0
    %2268 = vmatpush.msra.mxu0 0.0
    %2269 = vmatpush.msra.mxu0 0.0
    %v2270 = vand.u32 %v2127, 4294901760
    %v2271 = vsub.f32 %v2127, %v2270
    %v2272 = vand.u32 %v2271, 4294901760
    %2273 = vmatpush.msra.mxu0 %v2272
    %v2274 = vand.u32 %v2126, 4294901760
    %v2275 = vsub.f32 %v2126, %v2274
    %v2276 = vand.u32 %v2275, 4294901760
    %2277 = vmatpush.msra.mxu0 %v2276
    %v2278 = vand.u32 %v2125, 4294901760
    %v2279 = vsub.f32 %v2125, %v2278
    %v2280 = vand.u32 %v2279, 4294901760
    %2281 = vmatpush.msra.mxu0 %v2280
    %v2282 = vand.u32 %v2124, 4294901760
    %v2283 = vsub.f32 %v2124, %v2282
    %v2284 = vand.u32 %v2283, 4294901760
    %2285 = vmatpush.msra.mxu0 %v2284
    %v2286 = vand.u32 %v2129, 4294901760
    %2287 = vmatmul.f32.gmra.mxu0 %v2286
    %v2288 = vpop.f32.mrf.mxu0
    %v2289 = vadd.f32 %v2256, %v2288
    %2290 = vdwg.mxu0
    %2291 = vmatpush.msra.mxu0 0.0
    %2292 = vmatpush.msra.mxu0 0.0
    %2293 = vmatpush.msra.mxu0 0.0
    %2294 = vmatpush.msra.mxu0 0.0
    %2295 = vmatpush.msra.mxu0 0.0
    %2296 = vmatpush.msra.mxu0 0.0
    %2297 = vmatpush.msra.mxu0 0.0
    %2298 = vmatpush.msra.mxu0 0.0
    %2299 = vmatpush.msra.mxu0 0.0
    %2300 = vmatpush.msra.mxu0 0.0
    %2301 = vmatpush.msra.mxu0 0.0
    %2302 = vmatpush.msra.mxu0 0.0
    %v2303 = vand.u32 %v2127, 4294901760
    %2304 = vmatpush.msra.mxu0 %v2303
    %v2305 = vand.u32 %v2126, 4294901760
    %2306 = vmatpush.msra.mxu0 %v2305
    %v2307 = vand.u32 %v2125, 4294901760
    %2308 = vmatpush.msra.mxu0 %v2307
    %v2309 = vand.u32 %v2124, 4294901760
    %2310 = vmatpush.msra.mxu0 %v2309
    %v2311 = vand.u32 %v2129, 4294901760
    %2312 = vmatmul.f32.gmra.mxu0 %v2311
    %v2313 = vpop.f32.mrf.mxu0
    %v2314 = vadd.f32 %v2289, %v2313
    %2315 = vdwg.mxu0
    %s2316 = scalar_lea.vmem [#allocation4], 8
    %v2317 = vld [vmem:[%s2316] sm:$0x3]
    %v2318 = vmul.f32 %v2317, %v2314
    %v2319 = vld [vmem:[#allocation9] sm:$0xff]
    %v2320 = vld [vmem:[#allocation9 + $0x8] sm:$0xff]
    %v2321 = vld [vmem:[#allocation9 + $0x10] sm:$0xff]
    %v2322 = vld [vmem:[#allocation9 + $0x18] sm:$0xff]
    %v2323 = vld [vmem:[#allocation9 + $0x20] sm:$0xff]
    %v2324 = vld [vmem:[#allocation9 + $0x28] sm:$0xff]
    %v2325 = vld [vmem:[#allocation9 + $0x30] sm:$0xff]
    %v2326 = vld [vmem:[#allocation9 + $0x38] sm:$0xff]
    %v2327 = vld [vmem:[#allocation9 + $0x40] sm:$0xff]
    %v2328 = vld [vmem:[#allocation9 + $0x48] sm:$0xff]
    %v2329 = vld [vmem:[#allocation9 + $0x50] sm:$0xff]
    %v2330 = vld [vmem:[#allocation9 + $0x58] sm:$0xff]
    %v2332 = vsel %vm85, %v2318, 0
    %2334 = vmatpush.msra.mxu0 0.0
    %2335 = vmatpush.msra.mxu0 0.0
    %2336 = vmatpush.msra.mxu0 0.0
    %2337 = vmatpush.msra.mxu0 0.0
    %v2338 = vand.u32 %v2330, 4294901760
    %2339 = vmatpush.msra.mxu0 %v2338
    %v2340 = vand.u32 %v2329, 4294901760
    %2341 = vmatpush.msra.mxu0 %v2340
    %v2342 = vand.u32 %v2328, 4294901760
    %2343 = vmatpush.msra.mxu0 %v2342
    %v2344 = vand.u32 %v2327, 4294901760
    %2345 = vmatpush.msra.mxu0 %v2344
    %v2346 = vand.u32 %v2326, 4294901760
    %2347 = vmatpush.msra.mxu0 %v2346
    %v2348 = vand.u32 %v2325, 4294901760
    %2349 = vmatpush.msra.mxu0 %v2348
    %v2350 = vand.u32 %v2324, 4294901760
    %2351 = vmatpush.msra.mxu0 %v2350
    %v2352 = vand.u32 %v2323, 4294901760
    %2353 = vmatpush.msra.mxu0 %v2352
    %v2354 = vand.u32 %v2322, 4294901760
    %2355 = vmatpush.msra.mxu0 %v2354
    %v2356 = vand.u32 %v2321, 4294901760
    %2357 = vmatpush.msra.mxu0 %v2356
    %v2358 = vand.u32 %v2320, 4294901760
    %2359 = vmatpush.msra.mxu0 %v2358
    %v2360 = vand.u32 %v2319, 4294901760
    %2361 = vmatpush.msra.mxu0 %v2360
    %v2362 = vand.u32 %v2332, 4294901760
    %v2363 = vsub.f32 %v2332, %v2362
    %v2364 = vand.u32 %v2363, 4294901760
    %v2365 = vsub.f32 %v2363, %v2364
    %v2366 = vand.u32 %v2365, 4294901760
    %2367 = vmatmul.f32.gmra.mxu0 %v2366
    %v2368 = vpop.f32.mrf.mxu0
    %v2369 = vadd.f32 0.0, %v2368
    %2370 = vdwg.mxu0
    %2371 = vmatpush.msra.mxu0 0.0
    %2372 = vmatpush.msra.mxu0 0.0
    %2373 = vmatpush.msra.mxu0 0.0
    %2374 = vmatpush.msra.mxu0 0.0
    %v2375 = vand.u32 %v2330, 4294901760
    %v2376 = vsub.f32 %v2330, %v2375
    %v2377 = vand.u32 %v2376, 4294901760
    %v2378 = vsub.f32 %v2376, %v2377
    %v2379 = vand.u32 %v2378, 4294901760
    %2380 = vmatpush.msra.mxu0 %v2379
    %v2381 = vand.u32 %v2329, 4294901760
    %v2382 = vsub.f32 %v2329, %v2381
    %v2383 = vand.u32 %v2382, 4294901760
    %v2384 = vsub.f32 %v2382, %v2383
    %v2385 = vand.u32 %v2384, 4294901760
    %2386 = vmatpush.msra.mxu0 %v2385
    %v2387 = vand.u32 %v2328, 4294901760
    %v2388 = vsub.f32 %v2328, %v2387
    %v2389 = vand.u32 %v2388, 4294901760
    %v2390 = vsub.f32 %v2388, %v2389
    %v2391 = vand.u32 %v2390, 4294901760
    %2392 = vmatpush.msra.mxu0 %v2391
    %v2393 = vand.u32 %v2327, 4294901760
    %v2394 = vsub.f32 %v2327, %v2393
    %v2395 = vand.u32 %v2394, 4294901760
    %v2396 = vsub.f32 %v2394, %v2395
    %v2397 = vand.u32 %v2396, 4294901760
    %2398 = vmatpush.msra.mxu0 %v2397
    %v2399 = vand.u32 %v2326, 4294901760
    %v2400 = vsub.f32 %v2326, %v2399
    %v2401 = vand.u32 %v2400, 4294901760
    %v2402 = vsub.f32 %v2400, %v2401
    %v2403 = vand.u32 %v2402, 4294901760
    %2404 = vmatpush.msra.mxu0 %v2403
    %v2405 = vand.u32 %v2325, 4294901760
    %v2406 = vsub.f32 %v2325, %v2405
    %v2407 = vand.u32 %v2406, 4294901760
    %v2408 = vsub.f32 %v2406, %v2407
    %v2409 = vand.u32 %v2408, 4294901760
    %2410 = vmatpush.msra.mxu0 %v2409
    %v2411 = vand.u32 %v2324, 4294901760
    %v2412 = vsub.f32 %v2324, %v2411
    %v2413 = vand.u32 %v2412, 4294901760
    %v2414 = vsub.f32 %v2412, %v2413
    %v2415 = vand.u32 %v2414, 4294901760
    %2416 = vmatpush.msra.mxu0 %v2415
    %v2417 = vand.u32 %v2323, 4294901760
    %v2418 = vsub.f32 %v2323, %v2417
    %v2419 = vand.u32 %v2418, 4294901760
    %v2420 = vsub.f32 %v2418, %v2419
    %v2421 = vand.u32 %v2420, 4294901760
    %2422 = vmatpush.msra.mxu0 %v2421
    %v2423 = vand.u32 %v2322, 4294901760
    %v2424 = vsub.f32 %v2322, %v2423
    %v2425 = vand.u32 %v2424, 4294901760
    %v2426 = vsub.f32 %v2424, %v2425
    %v2427 = vand.u32 %v2426, 4294901760
    %2428 = vmatpush.msra.mxu0 %v2427
    %v2429 = vand.u32 %v2321, 4294901760
    %v2430 = vsub.f32 %v2321, %v2429
    %v2431 = vand.u32 %v2430, 4294901760
    %v2432 = vsub.f32 %v2430, %v2431
    %v2433 = vand.u32 %v2432, 4294901760
    %2434 = vmatpush.msra.mxu0 %v2433
    %v2435 = vand.u32 %v2320, 4294901760
    %v2436 = vsub.f32 %v2320, %v2435
    %v2437 = vand.u32 %v2436, 4294901760
    %v2438 = vsub.f32 %v2436, %v2437
    %v2439 = vand.u32 %v2438, 4294901760
    %2440 = vmatpush.msra.mxu0 %v2439
    %v2441 = vand.u32 %v2319, 4294901760
    %v2442 = vsub.f32 %v2319, %v2441
    %v2443 = vand.u32 %v2442, 4294901760
    %v2444 = vsub.f32 %v2442, %v2443
    %v2445 = vand.u32 %v2444, 4294901760
    %2446 = vmatpush.msra.mxu0 %v2445
    %v2447 = vand.u32 %v2332, 4294901760
    %2448 = vmatmul.f32.gmra.mxu0 %v2447
    %v2449 = vpop.f32.mrf.mxu0
    %v2450 = vadd.f32 %v2369, %v2449
    %2451 = vdwg.mxu0
    %2452 = vmatpush.msra.mxu0 0.0
    %2453 = vmatpush.msra.mxu0 0.0
    %2454 = vmatpush.msra.mxu0 0.0
    %2455 = vmatpush.msra.mxu0 0.0
    %v2456 = vand.u32 %v2330, 4294901760
    %v2457 = vsub.f32 %v2330, %v2456
    %2458 = vmatpush.msra.mxu0 %v2457
    %v2459 = vand.u32 %v2329, 4294901760
    %v2460 = vsub.f32 %v2329, %v2459
    %2461 = vmatpush.msra.mxu0 %v2460
    %v2462 = vand.u32 %v2328, 4294901760
    %v2463 = vsub.f32 %v2328, %v2462
    %2464 = vmatpush.msra.mxu0 %v2463
    %v2465 = vand.u32 %v2327, 4294901760
    %v2466 = vsub.f32 %v2327, %v2465
    %2467 = vmatpush.msra.mxu0 %v2466
    %v2468 = vand.u32 %v2326, 4294901760
    %v2469 = vsub.f32 %v2326, %v2468
    %2470 = vmatpush.msra.mxu0 %v2469
    %v2471 = vand.u32 %v2325, 4294901760
    %v2472 = vsub.f32 %v2325, %v2471
    %2473 = vmatpush.msra.mxu0 %v2472
    %v2474 = vand.u32 %v2324, 4294901760
    %v2475 = vsub.f32 %v2324, %v2474
    %2476 = vmatpush.msra.mxu0 %v2475
    %v2477 = vand.u32 %v2323, 4294901760
    %v2478 = vsub.f32 %v2323, %v2477
    %2479 = vmatpush.msra.mxu0 %v2478
    %v2480 = vand.u32 %v2322, 4294901760
    %v2481 = vsub.f32 %v2322, %v2480
    %2482 = vmatpush.msra.mxu0 %v2481
    %v2483 = vand.u32 %v2321, 4294901760
    %v2484 = vsub.f32 %v2321, %v2483
    %2485 = vmatpush.msra.mxu0 %v2484
    %v2486 = vand.u32 %v2320, 4294901760
    %v2487 = vsub.f32 %v2320, %v2486
    %2488 = vmatpush.msra.mxu0 %v2487
    %v2489 = vand.u32 %v2319, 4294901760
    %v2490 = vsub.f32 %v2319, %v2489
    %2491 = vmatpush.msra.mxu0 %v2490
    %v2492 = vand.u32 %v2332, 4294901760
    %v2493 = vsub.f32 %v2332, %v2492
    %2494 = vmatmul.f32.gmra.mxu0 %v2493
    %v2495 = vpop.f32.mrf.mxu0
    %v2496 = vadd.f32 %v2450, %v2495
    %2497 = vdwg.mxu0
    %2498 = vmatpush.msra.mxu0 0.0
    %2499 = vmatpush.msra.mxu0 0.0
    %2500 = vmatpush.msra.mxu0 0.0
    %2501 = vmatpush.msra.mxu0 0.0
    %v2502 = vand.u32 %v2330, 4294901760
    %2503 = vmatpush.msra.mxu0 %v2502
    %v2504 = vand.u32 %v2329, 4294901760
    %2505 = vmatpush.msra.mxu0 %v2504
    %v2506 = vand.u32 %v2328, 4294901760
    %2507 = vmatpush.msra.mxu0 %v2506
    %v2508 = vand.u32 %v2327, 4294901760
    %2509 = vmatpush.msra.mxu0 %v2508
    %v2510 = vand.u32 %v2326, 4294901760
    %2511 = vmatpush.msra.mxu0 %v2510
    %v2512 = vand.u32 %v2325, 4294901760
    %2513 = vmatpush.msra.mxu0 %v2512
    %v2514 = vand.u32 %v2324, 4294901760
    %2515 = vmatpush.msra.mxu0 %v2514
    %v2516 = vand.u32 %v2323, 4294901760
    %2517 = vmatpush.msra.mxu0 %v2516
    %v2518 = vand.u32 %v2322, 4294901760
    %2519 = vmatpush.msra.mxu0 %v2518
    %v2520 = vand.u32 %v2321, 4294901760
    %2521 = vmatpush.msra.mxu0 %v2520
    %v2522 = vand.u32 %v2320, 4294901760
    %2523 = vmatpush.msra.mxu0 %v2522
    %v2524 = vand.u32 %v2319, 4294901760
    %2525 = vmatpush.msra.mxu0 %v2524
    %v2526 = vand.u32 %v2332, 4294901760
    %v2527 = vsub.f32 %v2332, %v2526
    %v2528 = vand.u32 %v2527, 4294901760
    %2529 = vmatmul.f32.gmra.mxu0 %v2528
    %v2530 = vpop.f32.mrf.mxu0
    %v2531 = vadd.f32 %v2496, %v2530
    %2532 = vdwg.mxu0
    %2533 = vmatpush.msra.mxu0 0.0
    %2534 = vmatpush.msra.mxu0 0.0
    %2535 = vmatpush.msra.mxu0 0.0
    %2536 = vmatpush.msra.mxu0 0.0
    %v2537 = vand.u32 %v2330, 4294901760
    %v2538 = vsub.f32 %v2330, %v2537
    %v2539 = vand.u32 %v2538, 4294901760
    %2540 = vmatpush.msra.mxu0 %v2539
    %v2541 = vand.u32 %v2329, 4294901760
    %v2542 = vsub.f32 %v2329, %v2541
    %v2543 = vand.u32 %v2542, 4294901760
    %2544 = vmatpush.msra.mxu0 %v2543
    %v2545 = vand.u32 %v2328, 4294901760
    %v2546 = vsub.f32 %v2328, %v2545
    %v2547 = vand.u32 %v2546, 4294901760
    %2548 = vmatpush.msra.mxu0 %v2547
    %v2549 = vand.u32 %v2327, 4294901760
    %v2550 = vsub.f32 %v2327, %v2549
    %v2551 = vand.u32 %v2550, 4294901760
    %2552 = vmatpush.msra.mxu0 %v2551
    %v2553 = vand.u32 %v2326, 4294901760
    %v2554 = vsub.f32 %v2326, %v2553
    %v2555 = vand.u32 %v2554, 4294901760
    %2556 = vmatpush.msra.mxu0 %v2555
    %v2557 = vand.u32 %v2325, 4294901760
    %v2558 = vsub.f32 %v2325, %v2557
    %v2559 = vand.u32 %v2558, 4294901760
    %2560 = vmatpush.msra.mxu0 %v2559
    %v2561 = vand.u32 %v2324, 4294901760
    %v2562 = vsub.f32 %v2324, %v2561
    %v2563 = vand.u32 %v2562, 4294901760
    %2564 = vmatpush.msra.mxu0 %v2563
    %v2565 = vand.u32 %v2323, 4294901760
    %v2566 = vsub.f32 %v2323, %v2565
    %v2567 = vand.u32 %v2566, 4294901760
    %2568 = vmatpush.msra.mxu0 %v2567
    %v2569 = vand.u32 %v2322, 4294901760
    %v2570 = vsub.f32 %v2322, %v2569
    %v2571 = vand.u32 %v2570, 4294901760
    %2572 = vmatpush.msra.mxu0 %v2571
    %v2573 = vand.u32 %v2321, 4294901760
    %v2574 = vsub.f32 %v2321, %v2573
    %v2575 = vand.u32 %v2574, 4294901760
    %2576 = vmatpush.msra.mxu0 %v2575
    %v2577 = vand.u32 %v2320, 4294901760
    %v2578 = vsub.f32 %v2320, %v2577
    %v2579 = vand.u32 %v2578, 4294901760
    %2580 = vmatpush.msra.mxu0 %v2579
    %v2581 = vand.u32 %v2319, 4294901760
    %v2582 = vsub.f32 %v2319, %v2581
    %v2583 = vand.u32 %v2582, 4294901760
    %2584 = vmatpush.msra.mxu0 %v2583
    %v2585 = vand.u32 %v2332, 4294901760
    %2586 = vmatmul.f32.gmra.mxu0 %v2585
    %v2587 = vpop.f32.mrf.mxu0
    %v2588 = vadd.f32 %v2531, %v2587
    %2589 = vdwg.mxu0
    %2590 = vmatpush.msra.mxu0 0.0
    %2591 = vmatpush.msra.mxu0 0.0
    %2592 = vmatpush.msra.mxu0 0.0
    %2593 = vmatpush.msra.mxu0 0.0
    %v2594 = vand.u32 %v2330, 4294901760
    %2595 = vmatpush.msra.mxu0 %v2594
    %v2596 = vand.u32 %v2329, 4294901760
    %2597 = vmatpush.msra.mxu0 %v2596
    %v2598 = vand.u32 %v2328, 4294901760
    %2599 = vmatpush.msra.mxu0 %v2598
    %v2600 = vand.u32 %v2327, 4294901760
    %2601 = vmatpush.msra.mxu0 %v2600
    %v2602 = vand.u32 %v2326, 4294901760
    %2603 = vmatpush.msra.mxu0 %v2602
    %v2604 = vand.u32 %v2325, 4294901760
    %2605 = vmatpush.msra.mxu0 %v2604
    %v2606 = vand.u32 %v2324, 4294901760
    %2607 = vmatpush.msra.mxu0 %v2606
    %v2608 = vand.u32 %v2323, 4294901760
    %2609 = vmatpush.msra.mxu0 %v2608
    %v2610 = vand.u32 %v2322, 4294901760
    %2611 = vmatpush.msra.mxu0 %v2610
    %v2612 = vand.u32 %v2321, 4294901760
    %2613 = vmatpush.msra.mxu0 %v2612
    %v2614 = vand.u32 %v2320, 4294901760
    %2615 = vmatpush.msra.mxu0 %v2614
    %v2616 = vand.u32 %v2319, 4294901760
    %2617 = vmatpush.msra.mxu0 %v2616
    %v2618 = vand.u32 %v2332, 4294901760
    %2619 = vmatmul.f32.gmra.mxu0 %v2618
    %v2620 = vpop.f32.mrf.mxu0
    %v2621 = vadd.f32 %v2588, %v2620
    %2622 = vdwg.mxu0
    %v2623 = vxor.u32 %v2621, 2147483648
    %v2624 = vmul.f32 %v2623, 1.442695
    %v2625 = vpow.pop %v2624
    %v2626 = vadd.f32 %v2625, 1.0
    %v2627 = vrcp.pop %v2626
    %v2628 = vmul.f32 %v2626, %v2627
    %v2629 = vsub.f32 1.0, %v2628
    %v2630 = vmul.f32 %v2627, %v2629
    %v2631 = vadd.f32 %v2627, %v2630
    %vm2632 = vweird.f32 %v2626
    %vm2633 = vweird.f32 %v2627
    %vm2634 = vmor %vm2632, %vm2633
    %v2635 = vsel %vm2634, %v2627, %v2631
    %v2636 = vand.u32 2147483647, %v2626
    %vm2637 = vcmp.eq.f32.partialorder %v2636, 8.507059e+37
    %v2638 = vand.u32 %v2626, 2147483648
    %v2639 = vor.u32 1.1754944e-38, %v2638
    %v2640 = vsel %vm2637, %v2639, %v2635
    %v2641 = vmul.f32 1.0, %v2640
    %v2642 = vtanh.pop %v2621
    %2644 = vrot.lane.b32.xlu0 %v2641, 32
    %v2645 = vpop.permute.xlu0 %2644
    %v2647 = vmul.f32 %v2123, %v2645
    %v2648 = vsub.f32 1.0, %v2641
    %2650 = vrot.lane.b32.xlu0 %v2642, 64
    %v2651 = vpop.permute.xlu0 %2650
    %v2653 = vmul.f32 %v2648, %v2651
    %2655 = vrot.lane.b32.xlu0 %v2653, 32
    %v2656 = vpop.permute.xlu0 %2655
    %v2658 = vadd.f32 %v2647, %v2656
    %v2659 = vtanh.pop %v2658
    %v2660 = vmul.f32 %v2641, %v2659
    %2662 = vrot.lane.b32.xlu0 %v2660, 96
    %v2663 = vpop.permute.xlu0 %2662
    %v2665 = vsel %vm418, %v2663, %v2658
    %s2666 = scalar_lea.vmem [#allocation10], 8
    %2667 = vst.msk [vmem:[%s2666] sm:$0x3] %vm420, %v2665
    %s2668 = sadd.s32 %s422, 5
    %s2669 = smul.u32 %s2668, 128
    %s2670 = sadd.s32 %s2669, %s427
    %s2671 = sld [smem:[#allocation3 + %s2670]]
    %s2672 = smul.u32 %s2671, 2
    %s2673 = scalar_lea.vmem [#allocation10], %s2672
    %v2674 = vld [vmem:[%s2673] sm:$0x3]
    %s2675 = sadd.s32 %s434, 5
    %s2676 = smul.u32 %s2675, 128
    %s2677 = sadd.s32 %s2676, %s439
    %s2678 = sld [smem:[#allocation3 + %s2677]]
    %s2679 = smul.u32 %s2678, 2
    %s2680 = scalar_lea.vmem [#allocation10], %s2679
    %v2681 = vld [vmem:[%s2680] sm:$0x3]
    %v2682 = vsel %vm445, %v2674, %v2681
    %v2683 = vld [vmem:[#allocation7] sm:$0xff]
    %v2684 = vld [vmem:[#allocation7 + $0x8] sm:$0xff]
    %v2685 = vld [vmem:[#allocation7 + $0x10] sm:$0xff]
    %v2686 = vld [vmem:[#allocation7 + $0x18] sm:$0xff]
    %v2688 = vsel %vm418, %v2682, 0
    %2690 = vmatpush.msra.mxu0 0.0
    %2691 = vmatpush.msra.mxu0 0.0
    %2692 = vmatpush.msra.mxu0 0.0
    %2693 = vmatpush.msra.mxu0 0.0
    %2694 = vmatpush.msra.mxu0 0.0
    %2695 = vmatpush.msra.mxu0 0.0
    %2696 = vmatpush.msra.mxu0 0.0
    %2697 = vmatpush.msra.mxu0 0.0
    %2698 = vmatpush.msra.mxu0 0.0
    %2699 = vmatpush.msra.mxu0 0.0
    %2700 = vmatpush.msra.mxu0 0.0
    %2701 = vmatpush.msra.mxu0 0.0
    %v2702 = vand.u32 %v2686, 4294901760
    %2703 = vmatpush.msra.mxu0 %v2702
    %v2704 = vand.u32 %v2685, 4294901760
    %2705 = vmatpush.msra.mxu0 %v2704
    %v2706 = vand.u32 %v2684, 4294901760
    %2707 = vmatpush.msra.mxu0 %v2706
    %v2708 = vand.u32 %v2683, 4294901760
    %2709 = vmatpush.msra.mxu0 %v2708
    %v2710 = vand.u32 %v2688, 4294901760
    %v2711 = vsub.f32 %v2688, %v2710
    %v2712 = vand.u32 %v2711, 4294901760
    %v2713 = vsub.f32 %v2711, %v2712
    %v2714 = vand.u32 %v2713, 4294901760
    %2715 = vmatmul.f32.gmra.mxu0 %v2714
    %v2716 = vpop.f32.mrf.mxu0
    %v2717 = vadd.f32 0.0, %v2716
    %2718 = vdwg.mxu0
    %2719 = vmatpush.msra.mxu0 0.0
    %2720 = vmatpush.msra.mxu0 0.0
    %2721 = vmatpush.msra.mxu0 0.0
    %2722 = vmatpush.msra.mxu0 0.0
    %2723 = vmatpush.msra.mxu0 0.0
    %2724 = vmatpush.msra.mxu0 0.0
    %2725 = vmatpush.msra.mxu0 0.0
    %2726 = vmatpush.msra.mxu0 0.0
    %2727 = vmatpush.msra.mxu0 0.0
    %2728 = vmatpush.msra.mxu0 0.0
    %2729 = vmatpush.msra.mxu0 0.0
    %2730 = vmatpush.msra.mxu0 0.0
    %v2731 = vand.u32 %v2686, 4294901760
    %v2732 = vsub.f32 %v2686, %v2731
    %v2733 = vand.u32 %v2732, 4294901760
    %v2734 = vsub.f32 %v2732, %v2733
    %v2735 = vand.u32 %v2734, 4294901760
    %2736 = vmatpush.msra.mxu0 %v2735
    %v2737 = vand.u32 %v2685, 4294901760
    %v2738 = vsub.f32 %v2685, %v2737
    %v2739 = vand.u32 %v2738, 4294901760
    %v2740 = vsub.f32 %v2738, %v2739
    %v2741 = vand.u32 %v2740, 4294901760
    %2742 = vmatpush.msra.mxu0 %v2741
    %v2743 = vand.u32 %v2684, 4294901760
    %v2744 = vsub.f32 %v2684, %v2743
    %v2745 = vand.u32 %v2744, 4294901760
    %v2746 = vsub.f32 %v2744, %v2745
    %v2747 = vand.u32 %v2746, 4294901760
    %2748 = vmatpush.msra.mxu0 %v2747
    %v2749 = vand.u32 %v2683, 4294901760
    %v2750 = vsub.f32 %v2683, %v2749
    %v2751 = vand.u32 %v2750, 4294901760
    %v2752 = vsub.f32 %v2750, %v2751
    %v2753 = vand.u32 %v2752, 4294901760
    %2754 = vmatpush.msra.mxu0 %v2753
    %v2755 = vand.u32 %v2688, 4294901760
    %2756 = vmatmul.f32.gmra.mxu0 %v2755
    %v2757 = vpop.f32.mrf.mxu0
    %v2758 = vadd.f32 %v2717, %v2757
    %2759 = vdwg.mxu0
    %2760 = vmatpush.msra.mxu0 0.0
    %2761 = vmatpush.msra.mxu0 0.0
    %2762 = vmatpush.msra.mxu0 0.0
    %2763 = vmatpush.msra.mxu0 0.0
    %2764 = vmatpush.msra.mxu0 0.0
    %2765 = vmatpush.msra.mxu0 0.0
    %2766 = vmatpush.msra.mxu0 0.0
    %2767 = vmatpush.msra.mxu0 0.0
    %2768 = vmatpush.msra.mxu0 0.0
    %2769 = vmatpush.msra.mxu0 0.0
    %2770 = vmatpush.msra.mxu0 0.0
    %2771 = vmatpush.msra.mxu0 0.0
    %v2772 = vand.u32 %v2686, 4294901760
    %v2773 = vsub.f32 %v2686, %v2772
    %2774 = vmatpush.msra.mxu0 %v2773
    %v2775 = vand.u32 %v2685, 4294901760
    %v2776 = vsub.f32 %v2685, %v2775
    %2777 = vmatpush.msra.mxu0 %v2776
    %v2778 = vand.u32 %v2684, 4294901760
    %v2779 = vsub.f32 %v2684, %v2778
    %2780 = vmatpush.msra.mxu0 %v2779
    %v2781 = vand.u32 %v2683, 4294901760
    %v2782 = vsub.f32 %v2683, %v2781
    %2783 = vmatpush.msra.mxu0 %v2782
    %v2784 = vand.u32 %v2688, 4294901760
    %v2785 = vsub.f32 %v2688, %v2784
    %2786 = vmatmul.f32.gmra.mxu0 %v2785
    %v2787 = vpop.f32.mrf.mxu0
    %v2788 = vadd.f32 %v2758, %v2787
    %2789 = vdwg.mxu0
    %2790 = vmatpush.msra.mxu0 0.0
    %2791 = vmatpush.msra.mxu0 0.0
    %2792 = vmatpush.msra.mxu0 0.0
    %2793 = vmatpush.msra.mxu0 0.0
    %2794 = vmatpush.msra.mxu0 0.0
    %2795 = vmatpush.msra.mxu0 0.0
    %2796 = vmatpush.msra.mxu0 0.0
    %2797 = vmatpush.msra.mxu0 0.0
    %2798 = vmatpush.msra.mxu0 0.0
    %2799 = vmatpush.msra.mxu0 0.0
    %2800 = vmatpush.msra.mxu0 0.0
    %2801 = vmatpush.msra.mxu0 0.0
    %v2802 = vand.u32 %v2686, 4294901760
    %2803 = vmatpush.msra.mxu0 %v2802
    %v2804 = vand.u32 %v2685, 4294901760
    %2805 = vmatpush.msra.mxu0 %v2804
    %v2806 = vand.u32 %v2684, 4294901760
    %2807 = vmatpush.msra.mxu0 %v2806
    %v2808 = vand.u32 %v2683, 4294901760
    %2809 = vmatpush.msra.mxu0 %v2808
    %v2810 = vand.u32 %v2688, 4294901760
    %v2811 = vsub.f32 %v2688, %v2810
    %v2812 = vand.u32 %v2811, 4294901760
    %2813 = vmatmul.f32.gmra.mxu0 %v2812
    %v2814 = vpop.f32.mrf.mxu0
    %v2815 = vadd.f32 %v2788, %v2814
    %2816 = vdwg.mxu0
    %2817 = vmatpush.msra.mxu0 0.0
    %2818 = vmatpush.msra.mxu0 0.0
    %2819 = vmatpush.msra.mxu0 0.0
    %2820 = vmatpush.msra.mxu0 0.0
    %2821 = vmatpush.msra.mxu0 0.0
    %2822 = vmatpush.msra.mxu0 0.0
    %2823 = vmatpush.msra.mxu0 0.0
    %2824 = vmatpush.msra.mxu0 0.0
    %2825 = vmatpush.msra.mxu0 0.0
    %2826 = vmatpush.msra.mxu0 0.0
    %2827 = vmatpush.msra.mxu0 0.0
    %2828 = vmatpush.msra.mxu0 0.0
    %v2829 = vand.u32 %v2686, 4294901760
    %v2830 = vsub.f32 %v2686, %v2829
    %v2831 = vand.u32 %v2830, 4294901760
    %2832 = vmatpush.msra.mxu0 %v2831
    %v2833 = vand.u32 %v2685, 4294901760
    %v2834 = vsub.f32 %v2685, %v2833
    %v2835 = vand.u32 %v2834, 4294901760
    %2836 = vmatpush.msra.mxu0 %v2835
    %v2837 = vand.u32 %v2684, 4294901760
    %v2838 = vsub.f32 %v2684, %v2837
    %v2839 = vand.u32 %v2838, 4294901760
    %2840 = vmatpush.msra.mxu0 %v2839
    %v2841 = vand.u32 %v2683, 4294901760
    %v2842 = vsub.f32 %v2683, %v2841
    %v2843 = vand.u32 %v2842, 4294901760
    %2844 = vmatpush.msra.mxu0 %v2843
    %v2845 = vand.u32 %v2688, 4294901760
    %2846 = vmatmul.f32.gmra.mxu0 %v2845
    %v2847 = vpop.f32.mrf.mxu0
    %v2848 = vadd.f32 %v2815, %v2847
    %2849 = vdwg.mxu0
    %2850 = vmatpush.msra.mxu0 0.0
    %2851 = vmatpush.msra.mxu0 0.0
    %2852 = vmatpush.msra.mxu0 0.0
    %2853 = vmatpush.msra.mxu0 0.0
    %2854 = vmatpush.msra.mxu0 0.0
    %2855 = vmatpush.msra.mxu0 0.0
    %2856 = vmatpush.msra.mxu0 0.0
    %2857 = vmatpush.msra.mxu0 0.0
    %2858 = vmatpush.msra.mxu0 0.0
    %2859 = vmatpush.msra.mxu0 0.0
    %2860 = vmatpush.msra.mxu0 0.0
    %2861 = vmatpush.msra.mxu0 0.0
    %v2862 = vand.u32 %v2686, 4294901760
    %2863 = vmatpush.msra.mxu0 %v2862
    %v2864 = vand.u32 %v2685, 4294901760
    %2865 = vmatpush.msra.mxu0 %v2864
    %v2866 = vand.u32 %v2684, 4294901760
    %2867 = vmatpush.msra.mxu0 %v2866
    %v2868 = vand.u32 %v2683, 4294901760
    %2869 = vmatpush.msra.mxu0 %v2868
    %v2870 = vand.u32 %v2688, 4294901760
    %2871 = vmatmul.f32.gmra.mxu0 %v2870
    %v2872 = vpop.f32.mrf.mxu0
    %v2873 = vadd.f32 %v2848, %v2872
    %2874 = vdwg.mxu0
    %s2875 = scalar_lea.vmem [#allocation4], 10
    %v2876 = vld [vmem:[%s2875] sm:$0x3]
    %v2877 = vmul.f32 %v2876, %v2873
    %v2878 = vld [vmem:[#allocation9] sm:$0xff]
    %v2879 = vld [vmem:[#allocation9 + $0x8] sm:$0xff]
    %v2880 = vld [vmem:[#allocation9 + $0x10] sm:$0xff]
    %v2881 = vld [vmem:[#allocation9 + $0x18] sm:$0xff]
    %v2882 = vld [vmem:[#allocation9 + $0x20] sm:$0xff]
    %v2883 = vld [vmem:[#allocation9 + $0x28] sm:$0xff]
    %v2884 = vld [vmem:[#allocation9 + $0x30] sm:$0xff]
    %v2885 = vld [vmem:[#allocation9 + $0x38] sm:$0xff]
    %v2886 = vld [vmem:[#allocation9 + $0x40] sm:$0xff]
    %v2887 = vld [vmem:[#allocation9 + $0x48] sm:$0xff]
    %v2888 = vld [vmem:[#allocation9 + $0x50] sm:$0xff]
    %v2889 = vld [vmem:[#allocation9 + $0x58] sm:$0xff]
    %v2891 = vsel %vm85, %v2877, 0
    %2893 = vmatpush.msra.mxu0 0.0
    %2894 = vmatpush.msra.mxu0 0.0
    %2895 = vmatpush.msra.mxu0 0.0
    %2896 = vmatpush.msra.mxu0 0.0
    %v2897 = vand.u32 %v2889, 4294901760
    %2898 = vmatpush.msra.mxu0 %v2897
    %v2899 = vand.u32 %v2888, 4294901760
    %2900 = vmatpush.msra.mxu0 %v2899
    %v2901 = vand.u32 %v2887, 4294901760
    %2902 = vmatpush.msra.mxu0 %v2901
    %v2903 = vand.u32 %v2886, 4294901760
    %2904 = vmatpush.msra.mxu0 %v2903
    %v2905 = vand.u32 %v2885, 4294901760
    %2906 = vmatpush.msra.mxu0 %v2905
    %v2907 = vand.u32 %v2884, 4294901760
    %2908 = vmatpush.msra.mxu0 %v2907
    %v2909 = vand.u32 %v2883, 4294901760
    %2910 = vmatpush.msra.mxu0 %v2909
    %v2911 = vand.u32 %v2882, 4294901760
    %2912 = vmatpush.msra.mxu0 %v2911
    %v2913 = vand.u32 %v2881, 4294901760
    %2914 = vmatpush.msra.mxu0 %v2913
    %v2915 = vand.u32 %v2880, 4294901760
    %2916 = vmatpush.msra.mxu0 %v2915
    %v2917 = vand.u32 %v2879, 4294901760
    %2918 = vmatpush.msra.mxu0 %v2917
    %v2919 = vand.u32 %v2878, 4294901760
    %2920 = vmatpush.msra.mxu0 %v2919
    %v2921 = vand.u32 %v2891, 4294901760
    %v2922 = vsub.f32 %v2891, %v2921
    %v2923 = vand.u32 %v2922, 4294901760
    %v2924 = vsub.f32 %v2922, %v2923
    %v2925 = vand.u32 %v2924, 4294901760
    %2926 = vmatmul.f32.gmra.mxu0 %v2925
    %v2927 = vpop.f32.mrf.mxu0
    %v2928 = vadd.f32 0.0, %v2927
    %2929 = vdwg.mxu0
    %2930 = vmatpush.msra.mxu0 0.0
    %2931 = vmatpush.msra.mxu0 0.0
    %2932 = vmatpush.msra.mxu0 0.0
    %2933 = vmatpush.msra.mxu0 0.0
    %v2934 = vand.u32 %v2889, 4294901760
    %v2935 = vsub.f32 %v2889, %v2934
    %v2936 = vand.u32 %v2935, 4294901760
    %v2937 = vsub.f32 %v2935, %v2936
    %v2938 = vand.u32 %v2937, 4294901760
    %2939 = vmatpush.msra.mxu0 %v2938
    %v2940 = vand.u32 %v2888, 4294901760
    %v2941 = vsub.f32 %v2888, %v2940
    %v2942 = vand.u32 %v2941, 4294901760
    %v2943 = vsub.f32 %v2941, %v2942
    %v2944 = vand.u32 %v2943, 4294901760
    %2945 = vmatpush.msra.mxu0 %v2944
    %v2946 = vand.u32 %v2887, 4294901760
    %v2947 = vsub.f32 %v2887, %v2946
    %v2948 = vand.u32 %v2947, 4294901760
    %v2949 = vsub.f32 %v2947, %v2948
    %v2950 = vand.u32 %v2949, 4294901760
    %2951 = vmatpush.msra.mxu0 %v2950
    %v2952 = vand.u32 %v2886, 4294901760
    %v2953 = vsub.f32 %v2886, %v2952
    %v2954 = vand.u32 %v2953, 4294901760
    %v2955 = vsub.f32 %v2953, %v2954
    %v2956 = vand.u32 %v2955, 4294901760
    %2957 = vmatpush.msra.mxu0 %v2956
    %v2958 = vand.u32 %v2885, 4294901760
    %v2959 = vsub.f32 %v2885, %v2958
    %v2960 = vand.u32 %v2959, 4294901760
    %v2961 = vsub.f32 %v2959, %v2960
    %v2962 = vand.u32 %v2961, 4294901760
    %2963 = vmatpush.msra.mxu0 %v2962
    %v2964 = vand.u32 %v2884, 4294901760
    %v2965 = vsub.f32 %v2884, %v2964
    %v2966 = vand.u32 %v2965, 4294901760
    %v2967 = vsub.f32 %v2965, %v2966
    %v2968 = vand.u32 %v2967, 4294901760
    %2969 = vmatpush.msra.mxu0 %v2968
    %v2970 = vand.u32 %v2883, 4294901760
    %v2971 = vsub.f32 %v2883, %v2970
    %v2972 = vand.u32 %v2971, 4294901760
    %v2973 = vsub.f32 %v2971, %v2972
    %v2974 = vand.u32 %v2973, 4294901760
    %2975 = vmatpush.msra.mxu0 %v2974
    %v2976 = vand.u32 %v2882, 4294901760
    %v2977 = vsub.f32 %v2882, %v2976
    %v2978 = vand.u32 %v2977, 4294901760
    %v2979 = vsub.f32 %v2977, %v2978
    %v2980 = vand.u32 %v2979, 4294901760
    %2981 = vmatpush.msra.mxu0 %v2980
    %v2982 = vand.u32 %v2881, 4294901760
    %v2983 = vsub.f32 %v2881, %v2982
    %v2984 = vand.u32 %v2983, 4294901760
    %v2985 = vsub.f32 %v2983, %v2984
    %v2986 = vand.u32 %v2985, 4294901760
    %2987 = vmatpush.msra.mxu0 %v2986
    %v2988 = vand.u32 %v2880, 4294901760
    %v2989 = vsub.f32 %v2880, %v2988
    %v2990 = vand.u32 %v2989, 4294901760
    %v2991 = vsub.f32 %v2989, %v2990
    %v2992 = vand.u32 %v2991, 4294901760
    %2993 = vmatpush.msra.mxu0 %v2992
    %v2994 = vand.u32 %v2879, 4294901760
    %v2995 = vsub.f32 %v2879, %v2994
    %v2996 = vand.u32 %v2995, 4294901760
    %v2997 = vsub.f32 %v2995, %v2996
    %v2998 = vand.u32 %v2997, 4294901760
    %2999 = vmatpush.msra.mxu0 %v2998
    %v3000 = vand.u32 %v2878, 4294901760
    %v3001 = vsub.f32 %v2878, %v3000
    %v3002 = vand.u32 %v3001, 4294901760
    %v3003 = vsub.f32 %v3001, %v3002
    %v3004 = vand.u32 %v3003, 4294901760
    %3005 = vmatpush.msra.mxu0 %v3004
    %v3006 = vand.u32 %v2891, 4294901760
    %3007 = vmatmul.f32.gmra.mxu0 %v3006
    %v3008 = vpop.f32.mrf.mxu0
    %v3009 = vadd.f32 %v2928, %v3008
    %3010 = vdwg.mxu0
    %3011 = vmatpush.msra.mxu0 0.0
    %3012 = vmatpush.msra.mxu0 0.0
    %3013 = vmatpush.msra.mxu0 0.0
    %3014 = vmatpush.msra.mxu0 0.0
    %v3015 = vand.u32 %v2889, 4294901760
    %v3016 = vsub.f32 %v2889, %v3015
    %3017 = vmatpush.msra.mxu0 %v3016
    %v3018 = vand.u32 %v2888, 4294901760
    %v3019 = vsub.f32 %v2888, %v3018
    %3020 = vmatpush.msra.mxu0 %v3019
    %v3021 = vand.u32 %v2887, 4294901760
    %v3022 = vsub.f32 %v2887, %v3021
    %3023 = vmatpush.msra.mxu0 %v3022
    %v3024 = vand.u32 %v2886, 4294901760
    %v3025 = vsub.f32 %v2886, %v3024
    %3026 = vmatpush.msra.mxu0 %v3025
    %v3027 = vand.u32 %v2885, 4294901760
    %v3028 = vsub.f32 %v2885, %v3027
    %3029 = vmatpush.msra.mxu0 %v3028
    %v3030 = vand.u32 %v2884, 4294901760
    %v3031 = vsub.f32 %v2884, %v3030
    %3032 = vmatpush.msra.mxu0 %v3031
    %v3033 = vand.u32 %v2883, 4294901760
    %v3034 = vsub.f32 %v2883, %v3033
    %3035 = vmatpush.msra.mxu0 %v3034
    %v3036 = vand.u32 %v2882, 4294901760
    %v3037 = vsub.f32 %v2882, %v3036
    %3038 = vmatpush.msra.mxu0 %v3037
    %v3039 = vand.u32 %v2881, 4294901760
    %v3040 = vsub.f32 %v2881, %v3039
    %3041 = vmatpush.msra.mxu0 %v3040
    %v3042 = vand.u32 %v2880, 4294901760
    %v3043 = vsub.f32 %v2880, %v3042
    %3044 = vmatpush.msra.mxu0 %v3043
    %v3045 = vand.u32 %v2879, 4294901760
    %v3046 = vsub.f32 %v2879, %v3045
    %3047 = vmatpush.msra.mxu0 %v3046
    %v3048 = vand.u32 %v2878, 4294901760
    %v3049 = vsub.f32 %v2878, %v3048
    %3050 = vmatpush.msra.mxu0 %v3049
    %v3051 = vand.u32 %v2891, 4294901760
    %v3052 = vsub.f32 %v2891, %v3051
    %3053 = vmatmul.f32.gmra.mxu0 %v3052
    %v3054 = vpop.f32.mrf.mxu0
    %v3055 = vadd.f32 %v3009, %v3054
    %3056 = vdwg.mxu0
    %3057 = vmatpush.msra.mxu0 0.0
    %3058 = vmatpush.msra.mxu0 0.0
    %3059 = vmatpush.msra.mxu0 0.0
    %3060 = vmatpush.msra.mxu0 0.0
    %v3061 = vand.u32 %v2889, 4294901760
    %3062 = vmatpush.msra.mxu0 %v3061
    %v3063 = vand.u32 %v2888, 4294901760
    %3064 = vmatpush.msra.mxu0 %v3063
    %v3065 = vand.u32 %v2887, 4294901760
    %3066 = vmatpush.msra.mxu0 %v3065
    %v3067 = vand.u32 %v2886, 4294901760
    %3068 = vmatpush.msra.mxu0 %v3067
    %v3069 = vand.u32 %v2885, 4294901760
    %3070 = vmatpush.msra.mxu0 %v3069
    %v3071 = vand.u32 %v2884, 4294901760
    %3072 = vmatpush.msra.mxu0 %v3071
    %v3073 = vand.u32 %v2883, 4294901760
    %3074 = vmatpush.msra.mxu0 %v3073
    %v3075 = vand.u32 %v2882, 4294901760
    %3076 = vmatpush.msra.mxu0 %v3075
    %v3077 = vand.u32 %v2881, 4294901760
    %3078 = vmatpush.msra.mxu0 %v3077
    %v3079 = vand.u32 %v2880, 4294901760
    %3080 = vmatpush.msra.mxu0 %v3079
    %v3081 = vand.u32 %v2879, 4294901760
    %3082 = vmatpush.msra.mxu0 %v3081
    %v3083 = vand.u32 %v2878, 4294901760
    %3084 = vmatpush.msra.mxu0 %v3083
    %v3085 = vand.u32 %v2891, 4294901760
    %v3086 = vsub.f32 %v2891, %v3085
    %v3087 = vand.u32 %v3086, 4294901760
    %3088 = vmatmul.f32.gmra.mxu0 %v3087
    %v3089 = vpop.f32.mrf.mxu0
    %v3090 = vadd.f32 %v3055, %v3089
    %3091 = vdwg.mxu0
    %3092 = vmatpush.msra.mxu0 0.0
    %3093 = vmatpush.msra.mxu0 0.0
    %3094 = vmatpush.msra.mxu0 0.0
    %3095 = vmatpush.msra.mxu0 0.0
    %v3096 = vand.u32 %v2889, 4294901760
    %v3097 = vsub.f32 %v2889, %v3096
    %v3098 = vand.u32 %v3097, 4294901760
    %3099 = vmatpush.msra.mxu0 %v3098
    %v3100 = vand.u32 %v2888, 4294901760
    %v3101 = vsub.f32 %v2888, %v3100
    %v3102 = vand.u32 %v3101, 4294901760
    %3103 = vmatpush.msra.mxu0 %v3102
    %v3104 = vand.u32 %v2887, 4294901760
    %v3105 = vsub.f32 %v2887, %v3104
    %v3106 = vand.u32 %v3105, 4294901760
    %3107 = vmatpush.msra.mxu0 %v3106
    %v3108 = vand.u32 %v2886, 4294901760
    %v3109 = vsub.f32 %v2886, %v3108
    %v3110 = vand.u32 %v3109, 4294901760
    %3111 = vmatpush.msra.mxu0 %v3110
    %v3112 = vand.u32 %v2885, 4294901760
    %v3113 = vsub.f32 %v2885, %v3112
    %v3114 = vand.u32 %v3113, 4294901760
    %3115 = vmatpush.msra.mxu0 %v3114
    %v3116 = vand.u32 %v2884, 4294901760
    %v3117 = vsub.f32 %v2884, %v3116
    %v3118 = vand.u32 %v3117, 4294901760
    %3119 = vmatpush.msra.mxu0 %v3118
    %v3120 = vand.u32 %v2883, 4294901760
    %v3121 = vsub.f32 %v2883, %v3120
    %v3122 = vand.u32 %v3121, 4294901760
    %3123 = vmatpush.msra.mxu0 %v3122
    %v3124 = vand.u32 %v2882, 4294901760
    %v3125 = vsub.f32 %v2882, %v3124
    %v3126 = vand.u32 %v3125, 4294901760
    %3127 = vmatpush.msra.mxu0 %v3126
    %v3128 = vand.u32 %v2881, 4294901760
    %v3129 = vsub.f32 %v2881, %v3128
    %v3130 = vand.u32 %v3129, 4294901760
    %3131 = vmatpush.msra.mxu0 %v3130
    %v3132 = vand.u32 %v2880, 4294901760
    %v3133 = vsub.f32 %v2880, %v3132
    %v3134 = vand.u32 %v3133, 4294901760
    %3135 = vmatpush.msra.mxu0 %v3134
    %v3136 = vand.u32 %v2879, 4294901760
    %v3137 = vsub.f32 %v2879, %v3136
    %v3138 = vand.u32 %v3137, 4294901760
    %3139 = vmatpush.msra.mxu0 %v3138
    %v3140 = vand.u32 %v2878, 4294901760
    %v3141 = vsub.f32 %v2878, %v3140
    %v3142 = vand.u32 %v3141, 4294901760
    %3143 = vmatpush.msra.mxu0 %v3142
    %v3144 = vand.u32 %v2891, 4294901760
    %3145 = vmatmul.f32.gmra.mxu0 %v3144
    %v3146 = vpop.f32.mrf.mxu0
    %v3147 = vadd.f32 %v3090, %v3146
    %3148 = vdwg.mxu0
    %3149 = vmatpush.msra.mxu0 0.0
    %3150 = vmatpush.msra.mxu0 0.0
    %3151 = vmatpush.msra.mxu0 0.0
    %3152 = vmatpush.msra.mxu0 0.0
    %v3153 = vand.u32 %v2889, 4294901760
    %3154 = vmatpush.msra.mxu0 %v3153
    %v3155 = vand.u32 %v2888, 4294901760
    %3156 = vmatpush.msra.mxu0 %v3155
    %v3157 = vand.u32 %v2887, 4294901760
    %3158 = vmatpush.msra.mxu0 %v3157
    %v3159 = vand.u32 %v2886, 4294901760
    %3160 = vmatpush.msra.mxu0 %v3159
    %v3161 = vand.u32 %v2885, 4294901760
    %3162 = vmatpush.msra.mxu0 %v3161
    %v3163 = vand.u32 %v2884, 4294901760
    %3164 = vmatpush.msra.mxu0 %v3163
    %v3165 = vand.u32 %v2883, 4294901760
    %3166 = vmatpush.msra.mxu0 %v3165
    %v3167 = vand.u32 %v2882, 4294901760
    %3168 = vmatpush.msra.mxu0 %v3167
    %v3169 = vand.u32 %v2881, 4294901760
    %3170 = vmatpush.msra.mxu0 %v3169
    %v3171 = vand.u32 %v2880, 4294901760
    %3172 = vmatpush.msra.mxu0 %v3171
    %v3173 = vand.u32 %v2879, 4294901760
    %3174 = vmatpush.msra.mxu0 %v3173
    %v3175 = vand.u32 %v2878, 4294901760
    %3176 = vmatpush.msra.mxu0 %v3175
    %v3177 = vand.u32 %v2891, 4294901760
    %3178 = vmatmul.f32.gmra.mxu0 %v3177
    %v3179 = vpop.f32.mrf.mxu0
    %v3180 = vadd.f32 %v3147, %v3179
    %3181 = vdwg.mxu0
    %v3182 = vxor.u32 %v3180, 2147483648
    %v3183 = vmul.f32 %v3182, 1.442695
    %v3184 = vpow.pop %v3183
    %v3185 = vadd.f32 %v3184, 1.0
    %v3186 = vrcp.pop %v3185
    %v3187 = vmul.f32 %v3185, %v3186
    %v3188 = vsub.f32 1.0, %v3187
    %v3189 = vmul.f32 %v3186, %v3188
    %v3190 = vadd.f32 %v3186, %v3189
    %vm3191 = vweird.f32 %v3185
    %vm3192 = vweird.f32 %v3186
    %vm3193 = vmor %vm3191, %vm3192
    %v3194 = vsel %vm3193, %v3186, %v3190
    %v3195 = vand.u32 2147483647, %v3185
    %vm3196 = vcmp.eq.f32.partialorder %v3195, 8.507059e+37
    %v3197 = vand.u32 %v3185, 2147483648
    %v3198 = vor.u32 1.1754944e-38, %v3197
    %v3199 = vsel %vm3196, %v3198, %v3194
    %v3200 = vmul.f32 1.0, %v3199
    %v3201 = vtanh.pop %v3180
    %3203 = vrot.lane.b32.xlu0 %v3200, 32
    %v3204 = vpop.permute.xlu0 %3203
    %v3206 = vmul.f32 %v2682, %v3204
    %v3207 = vsub.f32 1.0, %v3200
    %3209 = vrot.lane.b32.xlu0 %v3201, 64
    %v3210 = vpop.permute.xlu0 %3209
    %v3212 = vmul.f32 %v3207, %v3210
    %3214 = vrot.lane.b32.xlu0 %v3212, 32
    %v3215 = vpop.permute.xlu0 %3214
    %v3217 = vadd.f32 %v3206, %v3215
    %v3218 = vtanh.pop %v3217
    %v3219 = vmul.f32 %v3200, %v3218
    %3221 = vrot.lane.b32.xlu0 %v3219, 96
    %v3222 = vpop.permute.xlu0 %3221
    %v3224 = vsel %vm418, %v3222, %v3217
    %s3225 = scalar_lea.vmem [#allocation10], 10
    %3226 = vst.msk [vmem:[%s3225] sm:$0x3] %vm420, %v3224
    %s3227 = sadd.s32 %s422, 6
    %s3228 = smul.u32 %s3227, 128
    %s3229 = sadd.s32 %s3228, %s427
    %s3230 = sld [smem:[#allocation3 + %s3229]]
    %s3231 = smul.u32 %s3230, 2
    %s3232 = scalar_lea.vmem [#allocation10], %s3231
    %v3233 = vld [vmem:[%s3232] sm:$0x3]
    %s3234 = sadd.s32 %s434, 6
    %s3235 = smul.u32 %s3234, 128
    %s3236 = sadd.s32 %s3235, %s439
    %s3237 = sld [smem:[#allocation3 + %s3236]]
    %s3238 = smul.u32 %s3237, 2
    %s3239 = scalar_lea.vmem [#allocation10], %s3238
    %v3240 = vld [vmem:[%s3239] sm:$0x3]
    %v3241 = vsel %vm445, %v3233, %v3240
    %v3242 = vld [vmem:[#allocation7] sm:$0xff]
    %v3243 = vld [vmem:[#allocation7 + $0x8] sm:$0xff]
    %v3244 = vld [vmem:[#allocation7 + $0x10] sm:$0xff]
    %v3245 = vld [vmem:[#allocation7 + $0x18] sm:$0xff]
    %v3247 = vsel %vm418, %v3241, 0
    %3249 = vmatpush.msra.mxu0 0.0
    %3250 = vmatpush.msra.mxu0 0.0
    %3251 = vmatpush.msra.mxu0 0.0
    %3252 = vmatpush.msra.mxu0 0.0
    %3253 = vmatpush.msra.mxu0 0.0
    %3254 = vmatpush.msra.mxu0 0.0
    %3255 = vmatpush.msra.mxu0 0.0
    %3256 = vmatpush.msra.mxu0 0.0
    %3257 = vmatpush.msra.mxu0 0.0
    %3258 = vmatpush.msra.mxu0 0.0
    %3259 = vmatpush.msra.mxu0 0.0
    %3260 = vmatpush.msra.mxu0 0.0
    %v3261 = vand.u32 %v3245, 4294901760
    %3262 = vmatpush.msra.mxu0 %v3261
    %v3263 = vand.u32 %v3244, 4294901760
    %3264 = vmatpush.msra.mxu0 %v3263
    %v3265 = vand.u32 %v3243, 4294901760
    %3266 = vmatpush.msra.mxu0 %v3265
    %v3267 = vand.u32 %v3242, 4294901760
    %3268 = vmatpush.msra.mxu0 %v3267
    %v3269 = vand.u32 %v3247, 4294901760
    %v3270 = vsub.f32 %v3247, %v3269
    %v3271 = vand.u32 %v3270, 4294901760
    %v3272 = vsub.f32 %v3270, %v3271
    %v3273 = vand.u32 %v3272, 4294901760
    %3274 = vmatmul.f32.gmra.mxu0 %v3273
    %v3275 = vpop.f32.mrf.mxu0
    %v3276 = vadd.f32 0.0, %v3275
    %3277 = vdwg.mxu0
    %3278 = vmatpush.msra.mxu0 0.0
    %3279 = vmatpush.msra.mxu0 0.0
    %3280 = vmatpush.msra.mxu0 0.0
    %3281 = vmatpush.msra.mxu0 0.0
    %3282 = vmatpush.msra.mxu0 0.0
    %3283 = vmatpush.msra.mxu0 0.0
    %3284 = vmatpush.msra.mxu0 0.0
    %3285 = vmatpush.msra.mxu0 0.0
    %3286 = vmatpush.msra.mxu0 0.0
    %3287 = vmatpush.msra.mxu0 0.0
    %3288 = vmatpush.msra.mxu0 0.0
    %3289 = vmatpush.msra.mxu0 0.0
    %v3290 = vand.u32 %v3245, 4294901760
    %v3291 = vsub.f32 %v3245, %v3290
    %v3292 = vand.u32 %v3291, 4294901760
    %v3293 = vsub.f32 %v3291, %v3292
    %v3294 = vand.u32 %v3293, 4294901760
    %3295 = vmatpush.msra.mxu0 %v3294
    %v3296 = vand.u32 %v3244, 4294901760
    %v3297 = vsub.f32 %v3244, %v3296
    %v3298 = vand.u32 %v3297, 4294901760
    %v3299 = vsub.f32 %v3297, %v3298
    %v3300 = vand.u32 %v3299, 4294901760
    %3301 = vmatpush.msra.mxu0 %v3300
    %v3302 = vand.u32 %v3243, 4294901760
    %v3303 = vsub.f32 %v3243, %v3302
    %v3304 = vand.u32 %v3303, 4294901760
    %v3305 = vsub.f32 %v3303, %v3304
    %v3306 = vand.u32 %v3305, 4294901760
    %3307 = vmatpush.msra.mxu0 %v3306
    %v3308 = vand.u32 %v3242, 4294901760
    %v3309 = vsub.f32 %v3242, %v3308
    %v3310 = vand.u32 %v3309, 4294901760
    %v3311 = vsub.f32 %v3309, %v3310
    %v3312 = vand.u32 %v3311, 4294901760
    %3313 = vmatpush.msra.mxu0 %v3312
    %v3314 = vand.u32 %v3247, 4294901760
    %3315 = vmatmul.f32.gmra.mxu0 %v3314
    %v3316 = vpop.f32.mrf.mxu0
    %v3317 = vadd.f32 %v3276, %v3316
    %3318 = vdwg.mxu0
    %3319 = vmatpush.msra.mxu0 0.0
    %3320 = vmatpush.msra.mxu0 0.0
    %3321 = vmatpush.msra.mxu0 0.0
    %3322 = vmatpush.msra.mxu0 0.0
    %3323 = vmatpush.msra.mxu0 0.0
    %3324 = vmatpush.msra.mxu0 0.0
    %3325 = vmatpush.msra.mxu0 0.0
    %3326 = vmatpush.msra.mxu0 0.0
    %3327 = vmatpush.msra.mxu0 0.0
    %3328 = vmatpush.msra.mxu0 0.0
    %3329 = vmatpush.msra.mxu0 0.0
    %3330 = vmatpush.msra.mxu0 0.0
    %v3331 = vand.u32 %v3245, 4294901760
    %v3332 = vsub.f32 %v3245, %v3331
    %3333 = vmatpush.msra.mxu0 %v3332
    %v3334 = vand.u32 %v3244, 4294901760
    %v3335 = vsub.f32 %v3244, %v3334
    %3336 = vmatpush.msra.mxu0 %v3335
    %v3337 = vand.u32 %v3243, 4294901760
    %v3338 = vsub.f32 %v3243, %v3337
    %3339 = vmatpush.msra.mxu0 %v3338
    %v3340 = vand.u32 %v3242, 4294901760
    %v3341 = vsub.f32 %v3242, %v3340
    %3342 = vmatpush.msra.mxu0 %v3341
    %v3343 = vand.u32 %v3247, 4294901760
    %v3344 = vsub.f32 %v3247, %v3343
    %3345 = vmatmul.f32.gmra.mxu0 %v3344
    %v3346 = vpop.f32.mrf.mxu0
    %v3347 = vadd.f32 %v3317, %v3346
    %3348 = vdwg.mxu0
    %3349 = vmatpush.msra.mxu0 0.0
    %3350 = vmatpush.msra.mxu0 0.0
    %3351 = vmatpush.msra.mxu0 0.0
    %3352 = vmatpush.msra.mxu0 0.0
    %3353 = vmatpush.msra.mxu0 0.0
    %3354 = vmatpush.msra.mxu0 0.0
    %3355 = vmatpush.msra.mxu0 0.0
    %3356 = vmatpush.msra.mxu0 0.0
    %3357 = vmatpush.msra.mxu0 0.0
    %3358 = vmatpush.msra.mxu0 0.0
    %3359 = vmatpush.msra.mxu0 0.0
    %3360 = vmatpush.msra.mxu0 0.0
    %v3361 = vand.u32 %v3245, 4294901760
    %3362 = vmatpush.msra.mxu0 %v3361
    %v3363 = vand.u32 %v3244, 4294901760
    %3364 = vmatpush.msra.mxu0 %v3363
    %v3365 = vand.u32 %v3243, 4294901760
    %3366 = vmatpush.msra.mxu0 %v3365
    %v3367 = vand.u32 %v3242, 4294901760
    %3368 = vmatpush.msra.mxu0 %v3367
    %v3369 = vand.u32 %v3247, 4294901760
    %v3370 = vsub.f32 %v3247, %v3369
    %v3371 = vand.u32 %v3370, 4294901760
    %3372 = vmatmul.f32.gmra.mxu0 %v3371
    %v3373 = vpop.f32.mrf.mxu0
    %v3374 = vadd.f32 %v3347, %v3373
    %3375 = vdwg.mxu0
    %3376 = vmatpush.msra.mxu0 0.0
    %3377 = vmatpush.msra.mxu0 0.0
    %3378 = vmatpush.msra.mxu0 0.0
    %3379 = vmatpush.msra.mxu0 0.0
    %3380 = vmatpush.msra.mxu0 0.0
    %3381 = vmatpush.msra.mxu0 0.0
    %3382 = vmatpush.msra.mxu0 0.0
    %3383 = vmatpush.msra.mxu0 0.0
    %3384 = vmatpush.msra.mxu0 0.0
    %3385 = vmatpush.msra.mxu0 0.0
    %3386 = vmatpush.msra.mxu0 0.0
    %3387 = vmatpush.msra.mxu0 0.0
    %v3388 = vand.u32 %v3245, 4294901760
    %v3389 = vsub.f32 %v3245, %v3388
    %v3390 = vand.u32 %v3389, 4294901760
    %3391 = vmatpush.msra.mxu0 %v3390
    %v3392 = vand.u32 %v3244, 4294901760
    %v3393 = vsub.f32 %v3244, %v3392
    %v3394 = vand.u32 %v3393, 4294901760
    %3395 = vmatpush.msra.mxu0 %v3394
    %v3396 = vand.u32 %v3243, 4294901760
    %v3397 = vsub.f32 %v3243, %v3396
    %v3398 = vand.u32 %v3397, 4294901760
    %3399 = vmatpush.msra.mxu0 %v3398
    %v3400 = vand.u32 %v3242, 4294901760
    %v3401 = vsub.f32 %v3242, %v3400
    %v3402 = vand.u32 %v3401, 4294901760
    %3403 = vmatpush.msra.mxu0 %v3402
    %v3404 = vand.u32 %v3247, 4294901760
    %3405 = vmatmul.f32.gmra.mxu0 %v3404
    %v3406 = vpop.f32.mrf.mxu0
    %v3407 = vadd.f32 %v3374, %v3406
    %3408 = vdwg.mxu0
    %3409 = vmatpush.msra.mxu0 0.0
    %3410 = vmatpush.msra.mxu0 0.0
    %3411 = vmatpush.msra.mxu0 0.0
    %3412 = vmatpush.msra.mxu0 0.0
    %3413 = vmatpush.msra.mxu0 0.0
    %3414 = vmatpush.msra.mxu0 0.0
    %3415 = vmatpush.msra.mxu0 0.0
    %3416 = vmatpush.msra.mxu0 0.0
    %3417 = vmatpush.msra.mxu0 0.0
    %3418 = vmatpush.msra.mxu0 0.0
    %3419 = vmatpush.msra.mxu0 0.0
    %3420 = vmatpush.msra.mxu0 0.0
    %v3421 = vand.u32 %v3245, 4294901760
    %3422 = vmatpush.msra.mxu0 %v3421
    %v3423 = vand.u32 %v3244, 4294901760
    %3424 = vmatpush.msra.mxu0 %v3423
    %v3425 = vand.u32 %v3243, 4294901760
    %3426 = vmatpush.msra.mxu0 %v3425
    %v3427 = vand.u32 %v3242, 4294901760
    %3428 = vmatpush.msra.mxu0 %v3427
    %v3429 = vand.u32 %v3247, 4294901760
    %3430 = vmatmul.f32.gmra.mxu0 %v3429
    %v3431 = vpop.f32.mrf.mxu0
    %v3432 = vadd.f32 %v3407, %v3431
    %3433 = vdwg.mxu0
    %s3434 = scalar_lea.vmem [#allocation4], 12
    %v3435 = vld [vmem:[%s3434] sm:$0x3]
    %v3436 = vmul.f32 %v3435, %v3432
    %v3437 = vld [vmem:[#allocation9] sm:$0xff]
    %v3438 = vld [vmem:[#allocation9 + $0x8] sm:$0xff]
    %v3439 = vld [vmem:[#allocation9 + $0x10] sm:$0xff]
    %v3440 = vld [vmem:[#allocation9 + $0x18] sm:$0xff]
    %v3441 = vld [vmem:[#allocation9 + $0x20] sm:$0xff]
    %v3442 = vld [vmem:[#allocation9 + $0x28] sm:$0xff]
    %v3443 = vld [vmem:[#allocation9 + $0x30] sm:$0xff]
    %v3444 = vld [vmem:[#allocation9 + $0x38] sm:$0xff]
    %v3445 = vld [vmem:[#allocation9 + $0x40] sm:$0xff]
    %v3446 = vld [vmem:[#allocation9 + $0x48] sm:$0xff]
    %v3447 = vld [vmem:[#allocation9 + $0x50] sm:$0xff]
    %v3448 = vld [vmem:[#allocation9 + $0x58] sm:$0xff]
    %v3450 = vsel %vm85, %v3436, 0
    %3452 = vmatpush.msra.mxu0 0.0
    %3453 = vmatpush.msra.mxu0 0.0
    %3454 = vmatpush.msra.mxu0 0.0
    %3455 = vmatpush.msra.mxu0 0.0
    %v3456 = vand.u32 %v3448, 4294901760
    %3457 = vmatpush.msra.mxu0 %v3456
    %v3458 = vand.u32 %v3447, 4294901760
    %3459 = vmatpush.msra.mxu0 %v3458
    %v3460 = vand.u32 %v3446, 4294901760
    %3461 = vmatpush.msra.mxu0 %v3460
    %v3462 = vand.u32 %v3445, 4294901760
    %3463 = vmatpush.msra.mxu0 %v3462
    %v3464 = vand.u32 %v3444, 4294901760
    %3465 = vmatpush.msra.mxu0 %v3464
    %v3466 = vand.u32 %v3443, 4294901760
    %3467 = vmatpush.msra.mxu0 %v3466
    %v3468 = vand.u32 %v3442, 4294901760
    %3469 = vmatpush.msra.mxu0 %v3468
    %v3470 = vand.u32 %v3441, 4294901760
    %3471 = vmatpush.msra.mxu0 %v3470
    %v3472 = vand.u32 %v3440, 4294901760
    %3473 = vmatpush.msra.mxu0 %v3472
    %v3474 = vand.u32 %v3439, 4294901760
    %3475 = vmatpush.msra.mxu0 %v3474
    %v3476 = vand.u32 %v3438, 4294901760
    %3477 = vmatpush.msra.mxu0 %v3476
    %v3478 = vand.u32 %v3437, 4294901760
    %3479 = vmatpush.msra.mxu0 %v3478
    %v3480 = vand.u32 %v3450, 4294901760
    %v3481 = vsub.f32 %v3450, %v3480
    %v3482 = vand.u32 %v3481, 4294901760
    %v3483 = vsub.f32 %v3481, %v3482
    %v3484 = vand.u32 %v3483, 4294901760
    %3485 = vmatmul.f32.gmra.mxu0 %v3484
    %v3486 = vpop.f32.mrf.mxu0
    %v3487 = vadd.f32 0.0, %v3486
    %3488 = vdwg.mxu0
    %3489 = vmatpush.msra.mxu0 0.0
    %3490 = vmatpush.msra.mxu0 0.0
    %3491 = vmatpush.msra.mxu0 0.0
    %3492 = vmatpush.msra.mxu0 0.0
    %v3493 = vand.u32 %v3448, 4294901760
    %v3494 = vsub.f32 %v3448, %v3493
    %v3495 = vand.u32 %v3494, 4294901760
    %v3496 = vsub.f32 %v3494, %v3495
    %v3497 = vand.u32 %v3496, 4294901760
    %3498 = vmatpush.msra.mxu0 %v3497
    %v3499 = vand.u32 %v3447, 4294901760
    %v3500 = vsub.f32 %v3447, %v3499
    %v3501 = vand.u32 %v3500, 4294901760
    %v3502 = vsub.f32 %v3500, %v3501
    %v3503 = vand.u32 %v3502, 4294901760
    %3504 = vmatpush.msra.mxu0 %v3503
    %v3505 = vand.u32 %v3446, 4294901760
    %v3506 = vsub.f32 %v3446, %v3505
    %v3507 = vand.u32 %v3506, 4294901760
    %v3508 = vsub.f32 %v3506, %v3507
    %v3509 = vand.u32 %v3508, 4294901760
    %3510 = vmatpush.msra.mxu0 %v3509
    %v3511 = vand.u32 %v3445, 4294901760
    %v3512 = vsub.f32 %v3445, %v3511
    %v3513 = vand.u32 %v3512, 4294901760
    %v3514 = vsub.f32 %v3512, %v3513
    %v3515 = vand.u32 %v3514, 4294901760
    %3516 = vmatpush.msra.mxu0 %v3515
    %v3517 = vand.u32 %v3444, 4294901760
    %v3518 = vsub.f32 %v3444, %v3517
    %v3519 = vand.u32 %v3518, 4294901760
    %v3520 = vsub.f32 %v3518, %v3519
    %v3521 = vand.u32 %v3520, 4294901760
    %3522 = vmatpush.msra.mxu0 %v3521
    %v3523 = vand.u32 %v3443, 4294901760
    %v3524 = vsub.f32 %v3443, %v3523
    %v3525 = vand.u32 %v3524, 4294901760
    %v3526 = vsub.f32 %v3524, %v3525
    %v3527 = vand.u32 %v3526, 4294901760
    %3528 = vmatpush.msra.mxu0 %v3527
    %v3529 = vand.u32 %v3442, 4294901760
    %v3530 = vsub.f32 %v3442, %v3529
    %v3531 = vand.u32 %v3530, 4294901760
    %v3532 = vsub.f32 %v3530, %v3531
    %v3533 = vand.u32 %v3532, 4294901760
    %3534 = vmatpush.msra.mxu0 %v3533
    %v3535 = vand.u32 %v3441, 4294901760
    %v3536 = vsub.f32 %v3441, %v3535
    %v3537 = vand.u32 %v3536, 4294901760
    %v3538 = vsub.f32 %v3536, %v3537
    %v3539 = vand.u32 %v3538, 4294901760
    %3540 = vmatpush.msra.mxu0 %v3539
    %v3541 = vand.u32 %v3440, 4294901760
    %v3542 = vsub.f32 %v3440, %v3541
    %v3543 = vand.u32 %v3542, 4294901760
    %v3544 = vsub.f32 %v3542, %v3543
    %v3545 = vand.u32 %v3544, 4294901760
    %3546 = vmatpush.msra.mxu0 %v3545
    %v3547 = vand.u32 %v3439, 4294901760
    %v3548 = vsub.f32 %v3439, %v3547
    %v3549 = vand.u32 %v3548, 4294901760
    %v3550 = vsub.f32 %v3548, %v3549
    %v3551 = vand.u32 %v3550, 4294901760
    %3552 = vmatpush.msra.mxu0 %v3551
    %v3553 = vand.u32 %v3438, 4294901760
    %v3554 = vsub.f32 %v3438, %v3553
    %v3555 = vand.u32 %v3554, 4294901760
    %v3556 = vsub.f32 %v3554, %v3555
    %v3557 = vand.u32 %v3556, 4294901760
    %3558 = vmatpush.msra.mxu0 %v3557
    %v3559 = vand.u32 %v3437, 4294901760
    %v3560 = vsub.f32 %v3437, %v3559
    %v3561 = vand.u32 %v3560, 4294901760
    %v3562 = vsub.f32 %v3560, %v3561
    %v3563 = vand.u32 %v3562, 4294901760
    %3564 = vmatpush.msra.mxu0 %v3563
    %v3565 = vand.u32 %v3450, 4294901760
    %3566 = vmatmul.f32.gmra.mxu0 %v3565
    %v3567 = vpop.f32.mrf.mxu0
    %v3568 = vadd.f32 %v3487, %v3567
    %3569 = vdwg.mxu0
    %3570 = vmatpush.msra.mxu0 0.0
    %3571 = vmatpush.msra.mxu0 0.0
    %3572 = vmatpush.msra.mxu0 0.0
    %3573 = vmatpush.msra.mxu0 0.0
    %v3574 = vand.u32 %v3448, 4294901760
    %v3575 = vsub.f32 %v3448, %v3574
    %3576 = vmatpush.msra.mxu0 %v3575
    %v3577 = vand.u32 %v3447, 4294901760
    %v3578 = vsub.f32 %v3447, %v3577
    %3579 = vmatpush.msra.mxu0 %v3578
    %v3580 = vand.u32 %v3446, 4294901760
    %v3581 = vsub.f32 %v3446, %v3580
    %3582 = vmatpush.msra.mxu0 %v3581
    %v3583 = vand.u32 %v3445, 4294901760
    %v3584 = vsub.f32 %v3445, %v3583
    %3585 = vmatpush.msra.mxu0 %v3584
    %v3586 = vand.u32 %v3444, 4294901760
    %v3587 = vsub.f32 %v3444, %v3586
    %3588 = vmatpush.msra.mxu0 %v3587
    %v3589 = vand.u32 %v3443, 4294901760
    %v3590 = vsub.f32 %v3443, %v3589
    %3591 = vmatpush.msra.mxu0 %v3590
    %v3592 = vand.u32 %v3442, 4294901760
    %v3593 = vsub.f32 %v3442, %v3592
    %3594 = vmatpush.msra.mxu0 %v3593
    %v3595 = vand.u32 %v3441, 4294901760
    %v3596 = vsub.f32 %v3441, %v3595
    %3597 = vmatpush.msra.mxu0 %v3596
    %v3598 = vand.u32 %v3440, 4294901760
    %v3599 = vsub.f32 %v3440, %v3598
    %3600 = vmatpush.msra.mxu0 %v3599
    %v3601 = vand.u32 %v3439, 4294901760
    %v3602 = vsub.f32 %v3439, %v3601
    %3603 = vmatpush.msra.mxu0 %v3602
    %v3604 = vand.u32 %v3438, 4294901760
    %v3605 = vsub.f32 %v3438, %v3604
    %3606 = vmatpush.msra.mxu0 %v3605
    %v3607 = vand.u32 %v3437, 4294901760
    %v3608 = vsub.f32 %v3437, %v3607
    %3609 = vmatpush.msra.mxu0 %v3608
    %v3610 = vand.u32 %v3450, 4294901760
    %v3611 = vsub.f32 %v3450, %v3610
    %3612 = vmatmul.f32.gmra.mxu0 %v3611
    %v3613 = vpop.f32.mrf.mxu0
    %v3614 = vadd.f32 %v3568, %v3613
    %3615 = vdwg.mxu0
    %3616 = vmatpush.msra.mxu0 0.0
    %3617 = vmatpush.msra.mxu0 0.0
    %3618 = vmatpush.msra.mxu0 0.0
    %3619 = vmatpush.msra.mxu0 0.0
    %v3620 = vand.u32 %v3448, 4294901760
    %3621 = vmatpush.msra.mxu0 %v3620
    %v3622 = vand.u32 %v3447, 4294901760
    %3623 = vmatpush.msra.mxu0 %v3622
    %v3624 = vand.u32 %v3446, 4294901760
    %3625 = vmatpush.msra.mxu0 %v3624
    %v3626 = vand.u32 %v3445, 4294901760
    %3627 = vmatpush.msra.mxu0 %v3626
    %v3628 = vand.u32 %v3444, 4294901760
    %3629 = vmatpush.msra.mxu0 %v3628
    %v3630 = vand.u32 %v3443, 4294901760
    %3631 = vmatpush.msra.mxu0 %v3630
    %v3632 = vand.u32 %v3442, 4294901760
    %3633 = vmatpush.msra.mxu0 %v3632
    %v3634 = vand.u32 %v3441, 4294901760
    %3635 = vmatpush.msra.mxu0 %v3634
    %v3636 = vand.u32 %v3440, 4294901760
    %3637 = vmatpush.msra.mxu0 %v3636
    %v3638 = vand.u32 %v3439, 4294901760
    %3639 = vmatpush.msra.mxu0 %v3638
    %v3640 = vand.u32 %v3438, 4294901760
    %3641 = vmatpush.msra.mxu0 %v3640
    %v3642 = vand.u32 %v3437, 4294901760
    %3643 = vmatpush.msra.mxu0 %v3642
    %v3644 = vand.u32 %v3450, 4294901760
    %v3645 = vsub.f32 %v3450, %v3644
    %v3646 = vand.u32 %v3645, 4294901760
    %3647 = vmatmul.f32.gmra.mxu0 %v3646
    %v3648 = vpop.f32.mrf.mxu0
    %v3649 = vadd.f32 %v3614, %v3648
    %3650 = vdwg.mxu0
    %3651 = vmatpush.msra.mxu0 0.0
    %3652 = vmatpush.msra.mxu0 0.0
    %3653 = vmatpush.msra.mxu0 0.0
    %3654 = vmatpush.msra.mxu0 0.0
    %v3655 = vand.u32 %v3448, 4294901760
    %v3656 = vsub.f32 %v3448, %v3655
    %v3657 = vand.u32 %v3656, 4294901760
    %3658 = vmatpush.msra.mxu0 %v3657
    %v3659 = vand.u32 %v3447, 4294901760
    %v3660 = vsub.f32 %v3447, %v3659
    %v3661 = vand.u32 %v3660, 4294901760
    %3662 = vmatpush.msra.mxu0 %v3661
    %v3663 = vand.u32 %v3446, 4294901760
    %v3664 = vsub.f32 %v3446, %v3663
    %v3665 = vand.u32 %v3664, 4294901760
    %3666 = vmatpush.msra.mxu0 %v3665
    %v3667 = vand.u32 %v3445, 4294901760
    %v3668 = vsub.f32 %v3445, %v3667
    %v3669 = vand.u32 %v3668, 4294901760
    %3670 = vmatpush.msra.mxu0 %v3669
    %v3671 = vand.u32 %v3444, 4294901760
    %v3672 = vsub.f32 %v3444, %v3671
    %v3673 = vand.u32 %v3672, 4294901760
    %3674 = vmatpush.msra.mxu0 %v3673
    %v3675 = vand.u32 %v3443, 4294901760
    %v3676 = vsub.f32 %v3443, %v3675
    %v3677 = vand.u32 %v3676, 4294901760
    %3678 = vmatpush.msra.mxu0 %v3677
    %v3679 = vand.u32 %v3442, 4294901760
    %v3680 = vsub.f32 %v3442, %v3679
    %v3681 = vand.u32 %v3680, 4294901760
    %3682 = vmatpush.msra.mxu0 %v3681
    %v3683 = vand.u32 %v3441, 4294901760
    %v3684 = vsub.f32 %v3441, %v3683
    %v3685 = vand.u32 %v3684, 4294901760
    %3686 = vmatpush.msra.mxu0 %v3685
    %v3687 = vand.u32 %v3440, 4294901760
    %v3688 = vsub.f32 %v3440, %v3687
    %v3689 = vand.u32 %v3688, 4294901760
    %3690 = vmatpush.msra.mxu0 %v3689
    %v3691 = vand.u32 %v3439, 4294901760
    %v3692 = vsub.f32 %v3439, %v3691
    %v3693 = vand.u32 %v3692, 4294901760
    %3694 = vmatpush.msra.mxu0 %v3693
    %v3695 = vand.u32 %v3438, 4294901760
    %v3696 = vsub.f32 %v3438, %v3695
    %v3697 = vand.u32 %v3696, 4294901760
    %3698 = vmatpush.msra.mxu0 %v3697
    %v3699 = vand.u32 %v3437, 4294901760
    %v3700 = vsub.f32 %v3437, %v3699
    %v3701 = vand.u32 %v3700, 4294901760
    %3702 = vmatpush.msra.mxu0 %v3701
    %v3703 = vand.u32 %v3450, 4294901760
    %3704 = vmatmul.f32.gmra.mxu0 %v3703
    %v3705 = vpop.f32.mrf.mxu0
    %v3706 = vadd.f32 %v3649, %v3705
    %3707 = vdwg.mxu0
    %3708 = vmatpush.msra.mxu0 0.0
    %3709 = vmatpush.msra.mxu0 0.0
    %3710 = vmatpush.msra.mxu0 0.0
    %3711 = vmatpush.msra.mxu0 0.0
    %v3712 = vand.u32 %v3448, 4294901760
    %3713 = vmatpush.msra.mxu0 %v3712
    %v3714 = vand.u32 %v3447, 4294901760
    %3715 = vmatpush.msra.mxu0 %v3714
    %v3716 = vand.u32 %v3446, 4294901760
    %3717 = vmatpush.msra.mxu0 %v3716
    %v3718 = vand.u32 %v3445, 4294901760
    %3719 = vmatpush.msra.mxu0 %v3718
    %v3720 = vand.u32 %v3444, 4294901760
    %3721 = vmatpush.msra.mxu0 %v3720
    %v3722 = vand.u32 %v3443, 4294901760
    %3723 = vmatpush.msra.mxu0 %v3722
    %v3724 = vand.u32 %v3442, 4294901760
    %3725 = vmatpush.msra.mxu0 %v3724
    %v3726 = vand.u32 %v3441, 4294901760
    %3727 = vmatpush.msra.mxu0 %v3726
    %v3728 = vand.u32 %v3440, 4294901760
    %3729 = vmatpush.msra.mxu0 %v3728
    %v3730 = vand.u32 %v3439, 4294901760
    %3731 = vmatpush.msra.mxu0 %v3730
    %v3732 = vand.u32 %v3438, 4294901760
    %3733 = vmatpush.msra.mxu0 %v3732
    %v3734 = vand.u32 %v3437, 4294901760
    %3735 = vmatpush.msra.mxu0 %v3734
    %v3736 = vand.u32 %v3450, 4294901760
    %3737 = vmatmul.f32.gmra.mxu0 %v3736
    %v3738 = vpop.f32.mrf.mxu0
    %v3739 = vadd.f32 %v3706, %v3738
    %3740 = vdwg.mxu0
    %v3741 = vxor.u32 %v3739, 2147483648
    %v3742 = vmul.f32 %v3741, 1.442695
    %v3743 = vpow.pop %v3742
    %v3744 = vadd.f32 %v3743, 1.0
    %v3745 = vrcp.pop %v3744
    %v3746 = vmul.f32 %v3744, %v3745
    %v3747 = vsub.f32 1.0, %v3746
    %v3748 = vmul.f32 %v3745, %v3747
    %v3749 = vadd.f32 %v3745, %v3748
    %vm3750 = vweird.f32 %v3744
    %vm3751 = vweird.f32 %v3745
    %vm3752 = vmor %vm3750, %vm3751
    %v3753 = vsel %vm3752, %v3745, %v3749
    %v3754 = vand.u32 2147483647, %v3744
    %vm3755 = vcmp.eq.f32.partialorder %v3754, 8.507059e+37
    %v3756 = vand.u32 %v3744, 2147483648
    %v3757 = vor.u32 1.1754944e-38, %v3756
    %v3758 = vsel %vm3755, %v3757, %v3753
    %v3759 = vmul.f32 1.0, %v3758
    %v3760 = vtanh.pop %v3739
    %3762 = vrot.lane.b32.xlu0 %v3759, 32
    %v3763 = vpop.permute.xlu0 %3762
    %v3765 = vmul.f32 %v3241, %v3763
    %v3766 = vsub.f32 1.0, %v3759
    %3768 = vrot.lane.b32.xlu0 %v3760, 64
    %v3769 = vpop.permute.xlu0 %3768
    %v3771 = vmul.f32 %v3766, %v3769
    %3773 = vrot.lane.b32.xlu0 %v3771, 32
    %v3774 = vpop.permute.xlu0 %3773
    %v3776 = vadd.f32 %v3765, %v3774
    %v3777 = vtanh.pop %v3776
    %v3778 = vmul.f32 %v3759, %v3777
    %3780 = vrot.lane.b32.xlu0 %v3778, 96
    %v3781 = vpop.permute.xlu0 %3780
    %v3783 = vsel %vm418, %v3781, %v3776
    %s3784 = scalar_lea.vmem [#allocation10], 12
    %3785 = vst.msk [vmem:[%s3784] sm:$0x3] %vm420, %v3783
    %s3786 = sadd.s32 %s422, 7
    %s3787 = smul.u32 %s3786, 128
    %s3788 = sadd.s32 %s3787, %s427
    %s3789 = sld [smem:[#allocation3 + %s3788]]
    %s3790 = smul.u32 %s3789, 2
    %s3791 = scalar_lea.vmem [#allocation10], %s3790
    %v3792 = vld [vmem:[%s3791] sm:$0x3]
    %s3793 = sadd.s32 %s434, 7
    %s3794 = smul.u32 %s3793, 128
    %s3795 = sadd.s32 %s3794, %s439
    %s3796 = sld [smem:[#allocation3 + %s3795]]
    %s3797 = smul.u32 %s3796, 2
    %s3798 = scalar_lea.vmem [#allocation10], %s3797
    %v3799 = vld [vmem:[%s3798] sm:$0x3]
    %v3800 = vsel %vm445, %v3792, %v3799
    %v3801 = vld [vmem:[#allocation7] sm:$0xff]
    %v3802 = vld [vmem:[#allocation7 + $0x8] sm:$0xff]
    %v3803 = vld [vmem:[#allocation7 + $0x10] sm:$0xff]
    %v3804 = vld [vmem:[#allocation7 + $0x18] sm:$0xff]
    %v3806 = vsel %vm418, %v3800, 0
    %3808 = vmatpush.msra.mxu0 0.0
    %3809 = vmatpush.msra.mxu0 0.0
    %3810 = vmatpush.msra.mxu0 0.0
    %3811 = vmatpush.msra.mxu0 0.0
    %3812 = vmatpush.msra.mxu0 0.0
    %3813 = vmatpush.msra.mxu0 0.0
    %3814 = vmatpush.msra.mxu0 0.0
    %3815 = vmatpush.msra.mxu0 0.0
    %3816 = vmatpush.msra.mxu0 0.0
    %3817 = vmatpush.msra.mxu0 0.0
    %3818 = vmatpush.msra.mxu0 0.0
    %3819 = vmatpush.msra.mxu0 0.0
    %v3820 = vand.u32 %v3804, 4294901760
    %3821 = vmatpush.msra.mxu0 %v3820
    %v3822 = vand.u32 %v3803, 4294901760
    %3823 = vmatpush.msra.mxu0 %v3822
    %v3824 = vand.u32 %v3802, 4294901760
    %3825 = vmatpush.msra.mxu0 %v3824
    %v3826 = vand.u32 %v3801, 4294901760
    %3827 = vmatpush.msra.mxu0 %v3826
    %v3828 = vand.u32 %v3806, 4294901760
    %v3829 = vsub.f32 %v3806, %v3828
    %v3830 = vand.u32 %v3829, 4294901760
    %v3831 = vsub.f32 %v3829, %v3830
    %v3832 = vand.u32 %v3831, 4294901760
    %3833 = vmatmul.f32.gmra.mxu0 %v3832
    %v3834 = vpop.f32.mrf.mxu0
    %v3835 = vadd.f32 0.0, %v3834
    %3836 = vdwg.mxu0
    %3837 = vmatpush.msra.mxu0 0.0
    %3838 = vmatpush.msra.mxu0 0.0
    %3839 = vmatpush.msra.mxu0 0.0
    %3840 = vmatpush.msra.mxu0 0.0
    %3841 = vmatpush.msra.mxu0 0.0
    %3842 = vmatpush.msra.mxu0 0.0
    %3843 = vmatpush.msra.mxu0 0.0
    %3844 = vmatpush.msra.mxu0 0.0
    %3845 = vmatpush.msra.mxu0 0.0
    %3846 = vmatpush.msra.mxu0 0.0
    %3847 = vmatpush.msra.mxu0 0.0
    %3848 = vmatpush.msra.mxu0 0.0
    %v3849 = vand.u32 %v3804, 4294901760
    %v3850 = vsub.f32 %v3804, %v3849
    %v3851 = vand.u32 %v3850, 4294901760
    %v3852 = vsub.f32 %v3850, %v3851
    %v3853 = vand.u32 %v3852, 4294901760
    %3854 = vmatpush.msra.mxu0 %v3853
    %v3855 = vand.u32 %v3803, 4294901760
    %v3856 = vsub.f32 %v3803, %v3855
    %v3857 = vand.u32 %v3856, 4294901760
    %v3858 = vsub.f32 %v3856, %v3857
    %v3859 = vand.u32 %v3858, 4294901760
    %3860 = vmatpush.msra.mxu0 %v3859
    %v3861 = vand.u32 %v3802, 4294901760
    %v3862 = vsub.f32 %v3802, %v3861
    %v3863 = vand.u32 %v3862, 4294901760
    %v3864 = vsub.f32 %v3862, %v3863
    %v3865 = vand.u32 %v3864, 4294901760
    %3866 = vmatpush.msra.mxu0 %v3865
    %v3867 = vand.u32 %v3801, 4294901760
    %v3868 = vsub.f32 %v3801, %v3867
    %v3869 = vand.u32 %v3868, 4294901760
    %v3870 = vsub.f32 %v3868, %v3869
    %v3871 = vand.u32 %v3870, 4294901760
    %3872 = vmatpush.msra.mxu0 %v3871
    %v3873 = vand.u32 %v3806, 4294901760
    %3874 = vmatmul.f32.gmra.mxu0 %v3873
    %v3875 = vpop.f32.mrf.mxu0
    %v3876 = vadd.f32 %v3835, %v3875
    %3877 = vdwg.mxu0
    %3878 = vmatpush.msra.mxu0 0.0
    %3879 = vmatpush.msra.mxu0 0.0
    %3880 = vmatpush.msra.mxu0 0.0
    %3881 = vmatpush.msra.mxu0 0.0
    %3882 = vmatpush.msra.mxu0 0.0
    %3883 = vmatpush.msra.mxu0 0.0
    %3884 = vmatpush.msra.mxu0 0.0
    %3885 = vmatpush.msra.mxu0 0.0
    %3886 = vmatpush.msra.mxu0 0.0
    %3887 = vmatpush.msra.mxu0 0.0
    %3888 = vmatpush.msra.mxu0 0.0
    %3889 = vmatpush.msra.mxu0 0.0
    %v3890 = vand.u32 %v3804, 4294901760
    %v3891 = vsub.f32 %v3804, %v3890
    %3892 = vmatpush.msra.mxu0 %v3891
    %v3893 = vand.u32 %v3803, 4294901760
    %v3894 = vsub.f32 %v3803, %v3893
    %3895 = vmatpush.msra.mxu0 %v3894
    %v3896 = vand.u32 %v3802, 4294901760
    %v3897 = vsub.f32 %v3802, %v3896
    %3898 = vmatpush.msra.mxu0 %v3897
    %v3899 = vand.u32 %v3801, 4294901760
    %v3900 = vsub.f32 %v3801, %v3899
    %3901 = vmatpush.msra.mxu0 %v3900
    %v3902 = vand.u32 %v3806, 4294901760
    %v3903 = vsub.f32 %v3806, %v3902
    %3904 = vmatmul.f32.gmra.mxu0 %v3903
    %v3905 = vpop.f32.mrf.mxu0
    %v3906 = vadd.f32 %v3876, %v3905
    %3907 = vdwg.mxu0
    %3908 = vmatpush.msra.mxu0 0.0
    %3909 = vmatpush.msra.mxu0 0.0
    %3910 = vmatpush.msra.mxu0 0.0
    %3911 = vmatpush.msra.mxu0 0.0
    %3912 = vmatpush.msra.mxu0 0.0
    %3913 = vmatpush.msra.mxu0 0.0
    %3914 = vmatpush.msra.mxu0 0.0
    %3915 = vmatpush.msra.mxu0 0.0
    %3916 = vmatpush.msra.mxu0 0.0
    %3917 = vmatpush.msra.mxu0 0.0
    %3918 = vmatpush.msra.mxu0 0.0
    %3919 = vmatpush.msra.mxu0 0.0
    %v3920 = vand.u32 %v3804, 4294901760
    %3921 = vmatpush.msra.mxu0 %v3920
    %v3922 = vand.u32 %v3803, 4294901760
    %3923 = vmatpush.msra.mxu0 %v3922
    %v3924 = vand.u32 %v3802, 4294901760
    %3925 = vmatpush.msra.mxu0 %v3924
    %v3926 = vand.u32 %v3801, 4294901760
    %3927 = vmatpush.msra.mxu0 %v3926
    %v3928 = vand.u32 %v3806, 4294901760
    %v3929 = vsub.f32 %v3806, %v3928
    %v3930 = vand.u32 %v3929, 4294901760
    %3931 = vmatmul.f32.gmra.mxu0 %v3930
    %v3932 = vpop.f32.mrf.mxu0
    %v3933 = vadd.f32 %v3906, %v3932
    %3934 = vdwg.mxu0
    %3935 = vmatpush.msra.mxu0 0.0
    %3936 = vmatpush.msra.mxu0 0.0
    %3937 = vmatpush.msra.mxu0 0.0
    %3938 = vmatpush.msra.mxu0 0.0
    %3939 = vmatpush.msra.mxu0 0.0
    %3940 = vmatpush.msra.mxu0 0.0
    %3941 = vmatpush.msra.mxu0 0.0
    %3942 = vmatpush.msra.mxu0 0.0
    %3943 = vmatpush.msra.mxu0 0.0
    %3944 = vmatpush.msra.mxu0 0.0
    %3945 = vmatpush.msra.mxu0 0.0
    %3946 = vmatpush.msra.mxu0 0.0
    %v3947 = vand.u32 %v3804, 4294901760
    %v3948 = vsub.f32 %v3804, %v3947
    %v3949 = vand.u32 %v3948, 4294901760
    %3950 = vmatpush.msra.mxu0 %v3949
    %v3951 = vand.u32 %v3803, 4294901760
    %v3952 = vsub.f32 %v3803, %v3951
    %v3953 = vand.u32 %v3952, 4294901760
    %3954 = vmatpush.msra.mxu0 %v3953
    %v3955 = vand.u32 %v3802, 4294901760
    %v3956 = vsub.f32 %v3802, %v3955
    %v3957 = vand.u32 %v3956, 4294901760
    %3958 = vmatpush.msra.mxu0 %v3957
    %v3959 = vand.u32 %v3801, 4294901760
    %v3960 = vsub.f32 %v3801, %v3959
    %v3961 = vand.u32 %v3960, 4294901760
    %3962 = vmatpush.msra.mxu0 %v3961
    %v3963 = vand.u32 %v3806, 4294901760
    %3964 = vmatmul.f32.gmra.mxu0 %v3963
    %v3965 = vpop.f32.mrf.mxu0
    %v3966 = vadd.f32 %v3933, %v3965
    %3967 = vdwg.mxu0
    %3968 = vmatpush.msra.mxu0 0.0
    %3969 = vmatpush.msra.mxu0 0.0
    %3970 = vmatpush.msra.mxu0 0.0
    %3971 = vmatpush.msra.mxu0 0.0
    %3972 = vmatpush.msra.mxu0 0.0
    %3973 = vmatpush.msra.mxu0 0.0
    %3974 = vmatpush.msra.mxu0 0.0
    %3975 = vmatpush.msra.mxu0 0.0
    %3976 = vmatpush.msra.mxu0 0.0
    %3977 = vmatpush.msra.mxu0 0.0
    %3978 = vmatpush.msra.mxu0 0.0
    %3979 = vmatpush.msra.mxu0 0.0
    %v3980 = vand.u32 %v3804, 4294901760
    %3981 = vmatpush.msra.mxu0 %v3980
    %v3982 = vand.u32 %v3803, 4294901760
    %3983 = vmatpush.msra.mxu0 %v3982
    %v3984 = vand.u32 %v3802, 4294901760
    %3985 = vmatpush.msra.mxu0 %v3984
    %v3986 = vand.u32 %v3801, 4294901760
    %3987 = vmatpush.msra.mxu0 %v3986
    %v3988 = vand.u32 %v3806, 4294901760
    %3989 = vmatmul.f32.gmra.mxu0 %v3988
    %v3990 = vpop.f32.mrf.mxu0
    %v3991 = vadd.f32 %v3966, %v3990
    %3992 = vdwg.mxu0
    %s3993 = scalar_lea.vmem [#allocation4], 14
    %v3994 = vld [vmem:[%s3993] sm:$0x3]
    %v3995 = vmul.f32 %v3994, %v3991
    %v3996 = vld [vmem:[#allocation9] sm:$0xff]
    %v3997 = vld [vmem:[#allocation9 + $0x8] sm:$0xff]
    %v3998 = vld [vmem:[#allocation9 + $0x10] sm:$0xff]
    %v3999 = vld [vmem:[#allocation9 + $0x18] sm:$0xff]
    %v4000 = vld [vmem:[#allocation9 + $0x20] sm:$0xff]
    %v4001 = vld [vmem:[#allocation9 + $0x28] sm:$0xff]
    %v4002 = vld [vmem:[#allocation9 + $0x30] sm:$0xff]
    %v4003 = vld [vmem:[#allocation9 + $0x38] sm:$0xff]
    %v4004 = vld [vmem:[#allocation9 + $0x40] sm:$0xff]
    %v4005 = vld [vmem:[#allocation9 + $0x48] sm:$0xff]
    %v4006 = vld [vmem:[#allocation9 + $0x50] sm:$0xff]
    %v4007 = vld [vmem:[#allocation9 + $0x58] sm:$0xff]
    %v4009 = vsel %vm85, %v3995, 0
    %4011 = vmatpush.msra.mxu0 0.0
    %4012 = vmatpush.msra.mxu0 0.0
    %4013 = vmatpush.msra.mxu0 0.0
    %4014 = vmatpush.msra.mxu0 0.0
    %v4015 = vand.u32 %v4007, 4294901760
    %4016 = vmatpush.msra.mxu0 %v4015
    %v4017 = vand.u32 %v4006, 4294901760
    %4018 = vmatpush.msra.mxu0 %v4017
    %v4019 = vand.u32 %v4005, 4294901760
    %4020 = vmatpush.msra.mxu0 %v4019
    %v4021 = vand.u32 %v4004, 4294901760
    %4022 = vmatpush.msra.mxu0 %v4021
    %v4023 = vand.u32 %v4003, 4294901760
    %4024 = vmatpush.msra.mxu0 %v4023
    %v4025 = vand.u32 %v4002, 4294901760
    %4026 = vmatpush.msra.mxu0 %v4025
    %v4027 = vand.u32 %v4001, 4294901760
    %4028 = vmatpush.msra.mxu0 %v4027
    %v4029 = vand.u32 %v4000, 4294901760
    %4030 = vmatpush.msra.mxu0 %v4029
    %v4031 = vand.u32 %v3999, 4294901760
    %4032 = vmatpush.msra.mxu0 %v4031
    %v4033 = vand.u32 %v3998, 4294901760
    %4034 = vmatpush.msra.mxu0 %v4033
    %v4035 = vand.u32 %v3997, 4294901760
    %4036 = vmatpush.msra.mxu0 %v4035
    %v4037 = vand.u32 %v3996, 4294901760
    %4038 = vmatpush.msra.mxu0 %v4037
    %v4039 = vand.u32 %v4009, 4294901760
    %v4040 = vsub.f32 %v4009, %v4039
    %v4041 = vand.u32 %v4040, 4294901760
    %v4042 = vsub.f32 %v4040, %v4041
    %v4043 = vand.u32 %v4042, 4294901760
    %4044 = vmatmul.f32.gmra.mxu0 %v4043
    %v4045 = vpop.f32.mrf.mxu0
    %v4046 = vadd.f32 0.0, %v4045
    %4047 = vdwg.mxu0
    %4048 = vmatpush.msra.mxu0 0.0
    %4049 = vmatpush.msra.mxu0 0.0
    %4050 = vmatpush.msra.mxu0 0.0
    %4051 = vmatpush.msra.mxu0 0.0
    %v4052 = vand.u32 %v4007, 4294901760
    %v4053 = vsub.f32 %v4007, %v4052
    %v4054 = vand.u32 %v4053, 4294901760
    %v4055 = vsub.f32 %v4053, %v4054
    %v4056 = vand.u32 %v4055, 4294901760
    %4057 = vmatpush.msra.mxu0 %v4056
    %v4058 = vand.u32 %v4006, 4294901760
    %v4059 = vsub.f32 %v4006, %v4058
    %v4060 = vand.u32 %v4059, 4294901760
    %v4061 = vsub.f32 %v4059, %v4060
    %v4062 = vand.u32 %v4061, 4294901760
    %4063 = vmatpush.msra.mxu0 %v4062
    %v4064 = vand.u32 %v4005, 4294901760
    %v4065 = vsub.f32 %v4005, %v4064
    %v4066 = vand.u32 %v4065, 4294901760
    %v4067 = vsub.f32 %v4065, %v4066
    %v4068 = vand.u32 %v4067, 4294901760
    %4069 = vmatpush.msra.mxu0 %v4068
    %v4070 = vand.u32 %v4004, 4294901760
    %v4071 = vsub.f32 %v4004, %v4070
    %v4072 = vand.u32 %v4071, 4294901760
    %v4073 = vsub.f32 %v4071, %v4072
    %v4074 = vand.u32 %v4073, 4294901760
    %4075 = vmatpush.msra.mxu0 %v4074
    %v4076 = vand.u32 %v4003, 4294901760
    %v4077 = vsub.f32 %v4003, %v4076
    %v4078 = vand.u32 %v4077, 4294901760
    %v4079 = vsub.f32 %v4077, %v4078
    %v4080 = vand.u32 %v4079, 4294901760
    %4081 = vmatpush.msra.mxu0 %v4080
    %v4082 = vand.u32 %v4002, 4294901760
    %v4083 = vsub.f32 %v4002, %v4082
    %v4084 = vand.u32 %v4083, 4294901760
    %v4085 = vsub.f32 %v4083, %v4084
    %v4086 = vand.u32 %v4085, 4294901760
    %4087 = vmatpush.msra.mxu0 %v4086
    %v4088 = vand.u32 %v4001, 4294901760
    %v4089 = vsub.f32 %v4001, %v4088
    %v4090 = vand.u32 %v4089, 4294901760
    %v4091 = vsub.f32 %v4089, %v4090
    %v4092 = vand.u32 %v4091, 4294901760
    %4093 = vmatpush.msra.mxu0 %v4092
    %v4094 = vand.u32 %v4000, 4294901760
    %v4095 = vsub.f32 %v4000, %v4094
    %v4096 = vand.u32 %v4095, 4294901760
    %v4097 = vsub.f32 %v4095, %v4096
    %v4098 = vand.u32 %v4097, 4294901760
    %4099 = vmatpush.msra.mxu0 %v4098
    %v4100 = vand.u32 %v3999, 4294901760
    %v4101 = vsub.f32 %v3999, %v4100
    %v4102 = vand.u32 %v4101, 4294901760
    %v4103 = vsub.f32 %v4101, %v4102
    %v4104 = vand.u32 %v4103, 4294901760
    %4105 = vmatpush.msra.mxu0 %v4104
    %v4106 = vand.u32 %v3998, 4294901760
    %v4107 = vsub.f32 %v3998, %v4106
    %v4108 = vand.u32 %v4107, 4294901760
    %v4109 = vsub.f32 %v4107, %v4108
    %v4110 = vand.u32 %v4109, 4294901760
    %4111 = vmatpush.msra.mxu0 %v4110
    %v4112 = vand.u32 %v3997, 4294901760
    %v4113 = vsub.f32 %v3997, %v4112
    %v4114 = vand.u32 %v4113, 4294901760
    %v4115 = vsub.f32 %v4113, %v4114
    %v4116 = vand.u32 %v4115, 4294901760
    %4117 = vmatpush.msra.mxu0 %v4116
    %v4118 = vand.u32 %v3996, 4294901760
    %v4119 = vsub.f32 %v3996, %v4118
    %v4120 = vand.u32 %v4119, 4294901760
    %v4121 = vsub.f32 %v4119, %v4120
    %v4122 = vand.u32 %v4121, 4294901760
    %4123 = vmatpush.msra.mxu0 %v4122
    %v4124 = vand.u32 %v4009, 4294901760
    %4125 = vmatmul.f32.gmra.mxu0 %v4124
    %v4126 = vpop.f32.mrf.mxu0
    %v4127 = vadd.f32 %v4046, %v4126
    %4128 = vdwg.mxu0
    %4129 = vmatpush.msra.mxu0 0.0
    %4130 = vmatpush.msra.mxu0 0.0
    %4131 = vmatpush.msra.mxu0 0.0
    %4132 = vmatpush.msra.mxu0 0.0
    %v4133 = vand.u32 %v4007, 4294901760
    %v4134 = vsub.f32 %v4007, %v4133
    %4135 = vmatpush.msra.mxu0 %v4134
    %v4136 = vand.u32 %v4006, 4294901760
    %v4137 = vsub.f32 %v4006, %v4136
    %4138 = vmatpush.msra.mxu0 %v4137
    %v4139 = vand.u32 %v4005, 4294901760
    %v4140 = vsub.f32 %v4005, %v4139
    %4141 = vmatpush.msra.mxu0 %v4140
    %v4142 = vand.u32 %v4004, 4294901760
    %v4143 = vsub.f32 %v4004, %v4142
    %4144 = vmatpush.msra.mxu0 %v4143
    %v4145 = vand.u32 %v4003, 4294901760
    %v4146 = vsub.f32 %v4003, %v4145
    %4147 = vmatpush.msra.mxu0 %v4146
    %v4148 = vand.u32 %v4002, 4294901760
    %v4149 = vsub.f32 %v4002, %v4148
    %4150 = vmatpush.msra.mxu0 %v4149
    %v4151 = vand.u32 %v4001, 4294901760
    %v4152 = vsub.f32 %v4001, %v4151
    %4153 = vmatpush.msra.mxu0 %v4152
    %v4154 = vand.u32 %v4000, 4294901760
    %v4155 = vsub.f32 %v4000, %v4154
    %4156 = vmatpush.msra.mxu0 %v4155
    %v4157 = vand.u32 %v3999, 4294901760
    %v4158 = vsub.f32 %v3999, %v4157
    %4159 = vmatpush.msra.mxu0 %v4158
    %v4160 = vand.u32 %v3998, 4294901760
    %v4161 = vsub.f32 %v3998, %v4160
    %4162 = vmatpush.msra.mxu0 %v4161
    %v4163 = vand.u32 %v3997, 4294901760
    %v4164 = vsub.f32 %v3997, %v4163
    %4165 = vmatpush.msra.mxu0 %v4164
    %v4166 = vand.u32 %v3996, 4294901760
    %v4167 = vsub.f32 %v3996, %v4166
    %4168 = vmatpush.msra.mxu0 %v4167
    %v4169 = vand.u32 %v4009, 4294901760
    %v4170 = vsub.f32 %v4009, %v4169
    %4171 = vmatmul.f32.gmra.mxu0 %v4170
    %v4172 = vpop.f32.mrf.mxu0
    %v4173 = vadd.f32 %v4127, %v4172
    %4174 = vdwg.mxu0
    %4175 = vmatpush.msra.mxu0 0.0
    %4176 = vmatpush.msra.mxu0 0.0
    %4177 = vmatpush.msra.mxu0 0.0
    %4178 = vmatpush.msra.mxu0 0.0
    %v4179 = vand.u32 %v4007, 4294901760
    %4180 = vmatpush.msra.mxu0 %v4179
    %v4181 = vand.u32 %v4006, 4294901760
    %4182 = vmatpush.msra.mxu0 %v4181
    %v4183 = vand.u32 %v4005, 4294901760
    %4184 = vmatpush.msra.mxu0 %v4183
    %v4185 = vand.u32 %v4004, 4294901760
    %4186 = vmatpush.msra.mxu0 %v4185
    %v4187 = vand.u32 %v4003, 4294901760
    %4188 = vmatpush.msra.mxu0 %v4187
    %v4189 = vand.u32 %v4002, 4294901760
    %4190 = vmatpush.msra.mxu0 %v4189
    %v4191 = vand.u32 %v4001, 4294901760
    %4192 = vmatpush.msra.mxu0 %v4191
    %v4193 = vand.u32 %v4000, 4294901760
    %4194 = vmatpush.msra.mxu0 %v4193
    %v4195 = vand.u32 %v3999, 4294901760
    %4196 = vmatpush.msra.mxu0 %v4195
    %v4197 = vand.u32 %v3998, 4294901760
    %4198 = vmatpush.msra.mxu0 %v4197
    %v4199 = vand.u32 %v3997, 4294901760
    %4200 = vmatpush.msra.mxu0 %v4199
    %v4201 = vand.u32 %v3996, 4294901760
    %4202 = vmatpush.msra.mxu0 %v4201
    %v4203 = vand.u32 %v4009, 4294901760
    %v4204 = vsub.f32 %v4009, %v4203
    %v4205 = vand.u32 %v4204, 4294901760
    %4206 = vmatmul.f32.gmra.mxu0 %v4205
    %v4207 = vpop.f32.mrf.mxu0
    %v4208 = vadd.f32 %v4173, %v4207
    %4209 = vdwg.mxu0
    %4210 = vmatpush.msra.mxu0 0.0
    %4211 = vmatpush.msra.mxu0 0.0
    %4212 = vmatpush.msra.mxu0 0.0
    %4213 = vmatpush.msra.mxu0 0.0
    %v4214 = vand.u32 %v4007, 4294901760
    %v4215 = vsub.f32 %v4007, %v4214
    %v4216 = vand.u32 %v4215, 4294901760
    %4217 = vmatpush.msra.mxu0 %v4216
    %v4218 = vand.u32 %v4006, 4294901760
    %v4219 = vsub.f32 %v4006, %v4218
    %v4220 = vand.u32 %v4219, 4294901760
    %4221 = vmatpush.msra.mxu0 %v4220
    %v4222 = vand.u32 %v4005, 4294901760
    %v4223 = vsub.f32 %v4005, %v4222
    %v4224 = vand.u32 %v4223, 4294901760
    %4225 = vmatpush.msra.mxu0 %v4224
    %v4226 = vand.u32 %v4004, 4294901760
    %v4227 = vsub.f32 %v4004, %v4226
    %v4228 = vand.u32 %v4227, 4294901760
    %4229 = vmatpush.msra.mxu0 %v4228
    %v4230 = vand.u32 %v4003, 4294901760
    %v4231 = vsub.f32 %v4003, %v4230
    %v4232 = vand.u32 %v4231, 4294901760
    %4233 = vmatpush.msra.mxu0 %v4232
    %v4234 = vand.u32 %v4002, 4294901760
    %v4235 = vsub.f32 %v4002, %v4234
    %v4236 = vand.u32 %v4235, 4294901760
    %4237 = vmatpush.msra.mxu0 %v4236
    %v4238 = vand.u32 %v4001, 4294901760
    %v4239 = vsub.f32 %v4001, %v4238
    %v4240 = vand.u32 %v4239, 4294901760
    %4241 = vmatpush.msra.mxu0 %v4240
    %v4242 = vand.u32 %v4000, 4294901760
    %v4243 = vsub.f32 %v4000, %v4242
    %v4244 = vand.u32 %v4243, 4294901760
    %4245 = vmatpush.msra.mxu0 %v4244
    %v4246 = vand.u32 %v3999, 4294901760
    %v4247 = vsub.f32 %v3999, %v4246
    %v4248 = vand.u32 %v4247, 4294901760
    %4249 = vmatpush.msra.mxu0 %v4248
    %v4250 = vand.u32 %v3998, 4294901760
    %v4251 = vsub.f32 %v3998, %v4250
    %v4252 = vand.u32 %v4251, 4294901760
    %4253 = vmatpush.msra.mxu0 %v4252
    %v4254 = vand.u32 %v3997, 4294901760
    %v4255 = vsub.f32 %v3997, %v4254
    %v4256 = vand.u32 %v4255, 4294901760
    %4257 = vmatpush.msra.mxu0 %v4256
    %v4258 = vand.u32 %v3996, 4294901760
    %v4259 = vsub.f32 %v3996, %v4258
    %v4260 = vand.u32 %v4259, 4294901760
    %4261 = vmatpush.msra.mxu0 %v4260
    %v4262 = vand.u32 %v4009, 4294901760
    %4263 = vmatmul.f32.gmra.mxu0 %v4262
    %v4264 = vpop.f32.mrf.mxu0
    %v4265 = vadd.f32 %v4208, %v4264
    %4266 = vdwg.mxu0
    %4267 = vmatpush.msra.mxu0 0.0
    %4268 = vmatpush.msra.mxu0 0.0
    %4269 = vmatpush.msra.mxu0 0.0
    %4270 = vmatpush.msra.mxu0 0.0
    %v4271 = vand.u32 %v4007, 4294901760
    %4272 = vmatpush.msra.mxu0 %v4271
    %v4273 = vand.u32 %v4006, 4294901760
    %4274 = vmatpush.msra.mxu0 %v4273
    %v4275 = vand.u32 %v4005, 4294901760
    %4276 = vmatpush.msra.mxu0 %v4275
    %v4277 = vand.u32 %v4004, 4294901760
    %4278 = vmatpush.msra.mxu0 %v4277
    %v4279 = vand.u32 %v4003, 4294901760
    %4280 = vmatpush.msra.mxu0 %v4279
    %v4281 = vand.u32 %v4002, 4294901760
    %4282 = vmatpush.msra.mxu0 %v4281
    %v4283 = vand.u32 %v4001, 4294901760
    %4284 = vmatpush.msra.mxu0 %v4283
    %v4285 = vand.u32 %v4000, 4294901760
    %4286 = vmatpush.msra.mxu0 %v4285
    %v4287 = vand.u32 %v3999, 4294901760
    %4288 = vmatpush.msra.mxu0 %v4287
    %v4289 = vand.u32 %v3998, 4294901760
    %4290 = vmatpush.msra.mxu0 %v4289
    %v4291 = vand.u32 %v3997, 4294901760
    %4292 = vmatpush.msra.mxu0 %v4291
    %v4293 = vand.u32 %v3996, 4294901760
    %4294 = vmatpush.msra.mxu0 %v4293
    %v4295 = vand.u32 %v4009, 4294901760
    %4296 = vmatmul.f32.gmra.mxu0 %v4295
    %v4297 = vpop.f32.mrf.mxu0
    %v4298 = vadd.f32 %v4265, %v4297
    %4299 = vdwg.mxu0
    %v4300 = vxor.u32 %v4298, 2147483648
    %v4301 = vmul.f32 %v4300, 1.442695
    %v4302 = vpow.pop %v4301
    %v4303 = vadd.f32 %v4302, 1.0
    %v4304 = vrcp.pop %v4303
    %v4305 = vmul.f32 %v4303, %v4304
    %v4306 = vsub.f32 1.0, %v4305
    %v4307 = vmul.f32 %v4304, %v4306
    %v4308 = vadd.f32 %v4304, %v4307
    %vm4309 = vweird.f32 %v4303
    %vm4310 = vweird.f32 %v4304
    %vm4311 = vmor %vm4309, %vm4310
    %v4312 = vsel %vm4311, %v4304, %v4308
    %v4313 = vand.u32 2147483647, %v4303
    %vm4314 = vcmp.eq.f32.partialorder %v4313, 8.507059e+37
    %v4315 = vand.u32 %v4303, 2147483648
    %v4316 = vor.u32 1.1754944e-38, %v4315
    %v4317 = vsel %vm4314, %v4316, %v4312
    %v4318 = vmul.f32 1.0, %v4317
    %v4319 = vtanh.pop %v4298
    %4321 = vrot.lane.b32.xlu0 %v4318, 32
    %v4322 = vpop.permute.xlu0 %4321
    %v4324 = vmul.f32 %v3800, %v4322
    %v4325 = vsub.f32 1.0, %v4318
    %4327 = vrot.lane.b32.xlu0 %v4319, 64
    %v4328 = vpop.permute.xlu0 %4327
    %v4330 = vmul.f32 %v4325, %v4328
    %4332 = vrot.lane.b32.xlu0 %v4330, 32
    %v4333 = vpop.permute.xlu0 %4332
    %v4335 = vadd.f32 %v4324, %v4333
    %v4336 = vtanh.pop %v4335
    %v4337 = vmul.f32 %v4318, %v4336
    %4339 = vrot.lane.b32.xlu0 %v4337, 96
    %v4340 = vpop.permute.xlu0 %4339
    %v4342 = vsel %vm418, %v4340, %v4335
    %s4343 = scalar_lea.vmem [#allocation10], 14
    %4344 = vst.msk [vmem:[%s4343] sm:$0x3] %vm420, %v4342
    // Predicated region
    $region26: #{tpu_custom_call.1} parent=1 // pred_check
      _
    $region27: #{tpu_custom_call.1} parent=1 // pred_check_branch
      %4346 = sbr.rel (0) target = $region29
    $region28: #{tpu_custom_call.1} parent=1 // pred_region
      %4348 = vsyncadd [#allocation6], 0
      %s4349 = sshll.u32 [#allocation10], 4
      %s4350 = int_to_ptr.vmem [resolvable:$true] %s4349
      %s4351 = sshll.u32 %s4, 4
      %s4352 = int_to_ptr.hbm [resolvable:$true] %s4351
      %4357 = dma.vmem_to_hbm [thread:$0]  %s4350, 256, %s4352, [#allocation6], 32, 32, 2
    $region29: #{tpu_custom_call.1} parent=1 // pred_fallthru
      _
    // Predicated region
    $region30: #{tpu_custom_call.1} parent=1 // pred_check
      _
    $region31: #{tpu_custom_call.1} parent=1 // pred_check_branch
      %4359 = sbr.rel (0) target = $region33
    $region32: #{tpu_custom_call.1} parent=1 // pred_region
      %4361 = dma.done [#allocation6], 256
    $region33: #{tpu_custom_call.1} parent=1 // pred_fallthru
      _
    %4362 = vsyncpa [#allocation5], 1
    %4363 = vsyncpa [#allocation8], 1
    %4364 = vsyncpa [#allocation6], 1

</llo_original>
